<compile_context>
chip_gen: v7x
topology: tpu7x:2x2x1
jax: 0.10.0
libtpu: 0.0.40
codegen_flags: <defaults>
</compile_context>

<pallas_src>
import functools

import numpy as np
import jax
import jax.numpy as jnp
from jax.experimental import pallas as pl
from jax.experimental.pallas import tpu as pltpu

EPS = 1e-5


# ----------------------------------------------------------------------------- VMEM plan
def _vmem_capacity_bytes():
    try:
        return int(pltpu.get_tpu_info().vmem_capacity_bytes)
    except Exception:
        # Conservative fallback (v7x per-core VMEM); v5e/v6e have 128 MiB.
        return 64 * 1024 * 1024


def _vmem_plan():
    cap = _vmem_capacity_bytes()
    limit = max(32 * 1024 * 1024, min(cap - 8 * 1024 * 1024, 100 * 1024 * 1024))
    budget = int(limit * 0.65)          # working-set budget for tile sizing
    return limit, budget


_VMEM_LIMIT, _VMEM_BUDGET = _vmem_plan()


# ----------------------------------------------------------------------------- helpers
def _mm(a, b):
    """bf16 MXU matmul with f32 accumulation."""
    return jnp.dot(a.astype(jnp.bfloat16), b.astype(jnp.bfloat16),
                   preferred_element_type=jnp.float32)


def _ln_normalize(x):
    """LayerNorm statistics (no affine), f32."""
    mu = jnp.mean(x, axis=-1, keepdims=True)
    var = jnp.mean(jnp.square(x - mu), axis=-1, keepdims=True)
    return (x - mu) * jax.lax.rsqrt(var + EPS)


def _mult8_divisors(n):
    return [d for d in range(8, n + 1, 8) if n % d == 0]


def _pick_tile(n, limit):
    """Largest multiple-of-8 divisor of n that is <= limit.

    If the budget allows fewer than 8 rows we clamp to the SMALLEST legal tile
    (never the full dimension), fixing the whole-tensor-block fallback that blew
    up VMEM at production sizes. Only if n has no multiple-of-8 divisor at all do
    we return n (the layout rule then requires the full dim anyway)."""
    divs = _mult8_divisors(n)
    if not divs:
        return n
    ok = [d for d in divs if d <= max(int(limit), 8)]
    return max(ok) if ok else min(divs)


def _seq_row_tile(L, cp, ci2, cs):
    """Rows of the pair tile per grid step for the fused seq-update kernel."""
    # per-row live set: double-buffered pair tile, LN output (f32 + bf16),
    # hidden activations (f32 + bf16), both branch outputs + masked temps.
    per_row = L * (cp * 14 + ci2 * 6 + cs * 12 + 16)
    fixed = (4 * L * cs + 2 * (cp * ci2 + ci2 * cs)) * 4      # seq in/out + weights
    rows = (_VMEM_BUDGET - fixed) // max(per_row, 1)
    return _pick_tile(L, rows)


def _pair_tile(L, cp, ci, co):
    """Square (i, j) tile for the fused OPM + pair-transition kernel."""
    # per-(i,j)-element live set: pair in/out double buffers, z/y/LN temps,
    # hidden activations (f32 + bf16), broadcast right tile.
    per_elem = cp * 30 + ci * 6 + co * 2 + 8
    fixed = 6 * 1024 * 1024                                   # weights, tmp scratch, slack
    t2 = (_VMEM_BUDGET - fixed) // max(per_elem, 1)
    t = int(max(t2, 1) ** 0.5)
    return _pick_tile(L, t)


# ----------------------------------------------------------------------------- kernels
def _seq_update_kernel(pair_ref, mask_ref, seq_ref,
                       w1_ref, b1_ref, w2l_ref, b2l_ref, w2r_ref, b2r_ref,
                       out_ref):
    """Fused seq_left + seq_right transitions with residual add.

    pair_ref: (TL, L, Cp) row tile; mask_ref: (TL, L); seq_ref/out_ref: (L, Cs).
    LayerNorm affines are folded into w1 (host side) and the two branches share
    ONE first-layer matmul. The output block stays VMEM-resident across the
    (arbitrary) row-tile axis and accumulates both contributions.
    """
    r = pl.program_id(1)
    tl, L, cp = pair_ref.shape
    cs = out_ref.shape[-1]
    ci = w2l_ref.shape[0]

    x = pair_ref[...].reshape(tl * L, cp)
    xhat = _ln_normalize(x)                       # shared LN statistics
    m = mask_ref[...]                             # (TL, L)

    @pl.when(r == 0)
    def _init():
        out_ref[...] = seq_ref[...]               # residual base

    # one matmul for both branches: (tl*L, cp) @ (cp, 2*ci)
    h = jnp.maximum(_mm(xhat, w1_ref[...]) + b1_ref[...], 0.0)
    hl = h[:, :ci]
    hr = h[:, ci:]

    # left transition: summed over pair axis i (rows of this tile)
    yl = (_mm(hl, w2l_ref[...]) + b2l_ref[...]).reshape(tl, L, cs)
    out_ref[...] = out_ref[...] + jnp.sum(yl * m[:, :, None], axis=0)

    # right transition: summed over pair axis j (within the tile)
    yr = (_mm(hr, w2r_ref[...]) + b2r_ref[...]).reshape(tl, L, cs)
    right_partial = jnp.sum(yr * m[:, :, None], axis=1)        # (TL, Cs)
    i0 = pl.multiple_of(r * tl, tl)
    out_ref[pl.ds(i0, tl), :] = out_ref[pl.ds(i0, tl), :] + right_partial


def _opm_proj_kernel(seq_ref, mask_ref, wlr_ref, blr_ref, left_ref, right_ref):
    """OuterProductMean LN + masked left/right projections (LN affine folded in)."""
    co = left_ref.shape[-1]
    an = _ln_normalize(seq_ref[...])
    lr = _mm(an, wlr_ref[...]) + blr_ref[...]     # (TP, 2*Co), one matmul
    m = mask_ref[...]                             # (TP, 1)
    left_ref[...] = m * lr[:, :co]
    right_ref[...] = m * lr[:, co:]


def _pair_update_kernel(pair_ref, left_ref, right_ref,
                        wo_ref, bo_ref, w1_ref, b1_ref, w2_ref, b2_ref,
                        out_ref, tmp_ref):
    """Fused OuterProductMean residual + pair Transition on one (TI, TJ, Cp) tile.

    Two-step OPM contraction: tmp[i, d, p] = sum_c left[i, c] * Wo[c, d, p] computed
    once per i row tile (j == 0, j innermost), then y[i, j, p] = sum_d right[j, d] *
    tmp[i, d, p] as a batched matmul over the i tile with cp lane-dense.
    """
    j = pl.program_id(2)
    ti, tj, cp = out_ref.shape
    co = left_ref.shape[-1]

    @pl.when(j == 0)
    def _():
        tmp_ref[...] = _mm(left_ref[...], wo_ref[...])          # (TI, Co*Cp)

    tmp3 = tmp_ref[...].reshape(ti, co, cp).astype(jnp.bfloat16)
    right_b = jnp.broadcast_to(right_ref[...][None, :, :],
                               (ti, tj, co)).astype(jnp.bfloat16)
    y = jax.lax.dot_general(                                    # (TI, TJ, Cp)
        right_b, tmp3,
        dimension_numbers=(((2,), (1,)), ((0,), (0,))),
        preferred_element_type=jnp.float32)
    z = pair_ref[...] + y + bo_ref[...]                         # pair += OPM

    # pair transition fused on the same tile (LN affine folded into w1)
    zf = z.reshape(ti * tj, cp)
    zn = _ln_normalize(zf)
    h = jnp.maximum(_mm(zn, w1_ref[...]) + b1_ref[...], 0.0)
    t = _mm(h, w2_ref[...]) + b2_ref[...]
    out_ref[...] = z + t.reshape(ti, tj, cp)


# ----------------------------------------------------------------------------- wrappers
def _fold_ln_into_linear(ln_w, ln_b, w, b):
    """(xhat * ln_w + ln_b) @ w + b == xhat @ w' + b'."""
    return ln_w[0][:, None] * w, b + ln_b @ w


def fused_seq_update(pair_act, pair_mask, seq_act, p_left, p_right):
    B, L, _, cp = pair_act.shape
    ci = p_left["w1"].shape[1]
    cs = p_left["w2"].shape[1]

    w1l, b1l = _fold_ln_into_linear(p_left["ln_w"], p_left["ln_b"], p_left["w1"], p_left["b1"])
    w1r, b1r = _fold_ln_into_linear(p_right["ln_w"], p_right["ln_b"], p_right["w1"], p_right["b1"])
    w1 = jnp.concatenate([w1l, w1r], axis=1)      # (cp, 2*ci)
    b1 = jnp.concatenate([b1l, b1r], axis=1)      # (1, 2*ci)

    tl = _seq_row_tile(L, cp, 2 * ci, cs)
    assert L % tl == 0
    zero2 = lambda b, r: (0, 0)
    return pl.pallas_call(
        _seq_update_kernel,
        out_shape=jax.ShapeDtypeStruct((B, L, cs), jnp.float32),
        grid=(B, L // tl),
        in_specs=[
            pl.BlockSpec((None, tl, L, cp), lambda b, r: (b, r, 0, 0)),
            pl.BlockSpec((None, tl, L), lambda b, r: (b, r, 0)),
            pl.BlockSpec((None, L, cs), lambda b, r: (b, 0, 0)),
            pl.BlockSpec((cp, 2 * ci), zero2),
            pl.BlockSpec((1, 2 * ci), zero2),
            pl.BlockSpec((ci, cs), zero2),
            pl.BlockSpec((1, cs), zero2),
            pl.BlockSpec((ci, cs), zero2),
            pl.BlockSpec((1, cs), zero2),
        ],
        out_specs=pl.BlockSpec((None, L, cs), lambda b, r: (b, 0, 0)),
        input_output_aliases={2: 0},              # seq_act updated in place
        compiler_params=pltpu.CompilerParams(
            dimension_semantics=("parallel", "arbitrary"),
            vmem_limit_bytes=_VMEM_LIMIT),
    )(pair_act, pair_mask, seq_act,
      w1, b1, p_left["w2"], p_left["b2"], p_right["w2"], p_right["b2"])


def opm_projections(seq_act, seq_mask, p):
    B, L, cs = seq_act.shape
    co = p["wl"].shape[1]
    wl, bl = _fold_ln_into_linear(p["ln_w"], p["ln_b"], p["wl"], p["bl"])
    wr, br = _fold_ln_into_linear(p["ln_w"], p["ln_b"], p["wr"], p["br"])
    wlr = jnp.concatenate([wl, wr], axis=1)       # (cs, 2*co)
    blr = jnp.concatenate([bl, br], axis=1)       # (1, 2*co)
    mask3 = seq_mask[..., None]

    tp = _pick_tile(L, 1024)
    assert L % tp == 0
    zero2 = lambda b, r: (0, 0)
    return pl.pallas_call(
        _opm_proj_kernel,
        out_shape=(jax.ShapeDtypeStruct((B, L, co), jnp.float32),
                   jax.ShapeDtypeStruct((B, L, co), jnp.float32)),
        grid=(B, L // tp),
        in_specs=[
            pl.BlockSpec((None, tp, cs), lambda b, r: (b, r, 0)),
            pl.BlockSpec((None, tp, 1), lambda b, r: (b, r, 0)),
            pl.BlockSpec((cs, 2 * co), zero2),
            pl.BlockSpec((1, 2 * co), zero2),
        ],
        out_specs=(pl.BlockSpec((None, tp, co), lambda b, r: (b, r, 0)),
                   pl.BlockSpec((None, tp, co), lambda b, r: (b, r, 0))),
        compiler_params=pltpu.CompilerParams(
            dimension_semantics=("parallel", "parallel"),
            vmem_limit_bytes=_VMEM_LIMIT),
    )(seq_act, mask3, wlr, blr)


def fused_pair_update(pair_act, left, right, p_opm, p_trans):
    B, L, _, cp = pair_act.shape
    co = left.shape[-1]
    ci = p_trans["w1"].shape[1]

    # Wo[(c d), p] -> Wo[c, (d p)] for the two-step contraction.
    wo = p_opm["wo"].reshape(co, co, cp).reshape(co, co * cp)
    bo = p_opm["bo"]
    w1, b1 = _fold_ln_into_linear(p_trans["ln_w"], p_trans["ln_b"],
                                  p_trans["w1"], p_trans["b1"])

    t = _pair_tile(L, cp, ci, co)
    assert L % t == 0
    zero3 = lambda b, i, j: (0, 0)
    return pl.pallas_call(
        _pair_update_kernel,
        out_shape=jax.ShapeDtypeStruct((B, L, L, cp), jnp.float32),
        grid=(B, L // t, L // t),
        in_specs=[
            pl.BlockSpec((None, t, t, cp), lambda b, i, j: (b, i, j, 0)),
            pl.BlockSpec((None, t, co), lambda b, i, j: (b, i, 0)),
            pl.BlockSpec((None, t, co), lambda b, i, j: (b, j, 0)),
            pl.BlockSpec((co, co * cp), zero3),
            pl.BlockSpec((1, cp), zero3),
            pl.BlockSpec((cp, ci), zero3),
            pl.BlockSpec((1, ci), zero3),
            pl.BlockSpec((ci, cp), zero3),
            pl.BlockSpec((1, cp), zero3),
        ],
        out_specs=pl.BlockSpec((None, t, t, cp), lambda b, i, j: (b, i, j, 0)),
        scratch_shapes=[pltpu.VMEM((t, co * cp), jnp.float32)],
        input_output_aliases={0: 0},              # pair_act updated in place
        compiler_params=pltpu.CompilerParams(
            dimension_semantics=("parallel", "parallel", "arbitrary"),
            vmem_limit_bytes=_VMEM_LIMIT),
    )(pair_act, left, right, wo, bo, w1, b1, p_trans["w2"], p_trans["b2"])


# ----------------------------------------------------------------------------- model
def seqformer_iteration(p, seq_act, pair_act, seq_mask, pair_mask):
    # seq_act += sum_i mask * T_left(pair) ; seq_act += sum_j mask * T_right(pair)
    seq_act = fused_seq_update(pair_act, pair_mask, seq_act, p["seq_left"], p["seq_right"])
    # pair_act += OuterProductMean(seq_act, seq_mask);  pair_act += Transition(pair_act)
    left, right = opm_projections(seq_act, seq_mask, p["opm"])
    # TODO(synk): triangle_multiplication_{outgoing,incoming} and
    # triangle_attention_{starting,ending}_node definitions were not provided; skipped.
    pair_act = fused_pair_update(pair_act, left, right, p["opm"], p["pair_trans"])
    return seq_act, pair_act


def seqformer_forward(params_list, seq_act, pair_act, seq_mask, pair_mask):
    for p in params_list:
        seq_act, pair_act = seqformer_iteration(p, seq_act, pair_act, seq_mask, pair_mask)
    return seq_act, pair_act


# ----------------------------------------------------------------------------- params
def _init_linear(key, cin, cout, scale=0.05):
    w = scale * jax.random.normal(key, (cin, cout), jnp.float32)
    b = jnp.zeros((1, cout), jnp.float32)
    return w, b


def init_transition_params(key, cin, cinter, cout):
    k1, k2 = jax.random.split(key)
    w1, b1 = _init_linear(k1, cin, cinter)
    w2, b2 = _init_linear(k2, cinter, cout)
    return dict(ln_w=jnp.ones((1, cin), jnp.float32), ln_b=jnp.zeros((1, cin), jnp.float32),
                w1=w1, b1=b1, w2=w2, b2=b2)


def init_opm_params(key, cs, co, cp):
    k1, k2, k3 = jax.random.split(key, 3)
    wl, bl = _init_linear(k1, cs, co)
    wr, br = _init_linear(k2, cs, co)
    wo, bo = _init_linear(k3, co * co, cp)
    return dict(ln_w=jnp.ones((1, cs), jnp.float32), ln_b=jnp.zeros((1, cs), jnp.float32),
                wl=wl, bl=bl, wr=wr, br=br, wo=wo, bo=bo)


def init_block_params(key, cs, cp, co, factor):
    k = jax.random.split(key, 4)
    return dict(
        seq_left=init_transition_params(k[0], cp, cp * factor, cs),
        seq_right=init_transition_params(k[1], cp, cp * factor, cs),
        opm=init_opm_params(k[2], cs, co, cp),
        pair_trans=init_transition_params(k[3], cp, cp * factor, cp),
    )


# ----------------------------------------------------------------------------- pure-JAX reference
def _layer_norm_ref(x, w, b):
    mu = jnp.mean(x, axis=-1, keepdims=True)
    var = jnp.mean(jnp.square(x - mu), axis=-1, keepdims=True)
    return (x - mu) * jax.lax.rsqrt(var + EPS) * w + b


def _transition_ref(x, p):
    xn = _layer_norm_ref(x, p["ln_w"][0], p["ln_b"][0])
    h = jax.nn.relu(xn @ p["w1"] + p["b1"][0])
    return h @ p["w2"] + p["b2"][0]


def _opm_ref(act, mask, p):
    an = _layer_norm_ref(act, p["ln_w"][0], p["ln_b"][0])
    left = mask[..., None] * (an @ p["wl"] + p["bl"][0])
    right = mask[..., None] * (an @ p["wr"] + p["br"][0])
    co = left.shape[-1]
    outer = jnp.einsum("bic,bjd->bijcd", left, right)
    outer = outer.reshape(outer.shape[0], outer.shape[1], outer.shape[2], co * co)
    return outer @ p["wo"] + p["bo"][0]


def _iteration_ref(p, seq_act, pair_act, seq_mask, pair_mask):
    seq_act = seq_act + jnp.sum(_transition_ref(pair_act, p["seq_left"]) * pair_mask[..., None], axis=1)
    seq_act = seq_act + jnp.sum(_transition_ref(pair_act, p["seq_right"]) * pair_mask[..., None], axis=2)
    pair_act = pair_act + _opm_ref(seq_act, seq_mask, p["opm"])
    pair_act = pair_act + _transition_ref(pair_act, p["pair_trans"])
    return seq_act, pair_act


# ----------------------------------------------------------------------------- main
if __name__ == "__main__":
    B, L = 2, 8
    CS, CP, CO, FACTOR, NUM_BLOCKS = 32, 16, 8, 2, 2

    key = jax.random.PRNGKey(0)
    k_seq, k_pair, k_mask, k_params = jax.random.split(key, 4)
    seq_act = jax.random.normal(k_seq, (B, L, CS), jnp.float32)
    pair_act = jax.random.normal(k_pair, (B, L, L, CP), jnp.float32)
    seq_mask = (jax.random.uniform(k_mask, (B, L)) > 0.2).astype(jnp.float32)
    pair_mask = seq_mask[:, :, None] * seq_mask[:, None, :]

    params = [init_block_params(k, CS, CP, CO, FACTOR)
              for k in jax.random.split(k_params, NUM_BLOCKS)]

    fwd = jax.jit(functools.partial(seqformer_forward, params))
    seq_out, pair_out = fwd(seq_act, pair_act, seq_mask, pair_mask)
    jax.block_until_ready((seq_out, pair_out))

    # correctness check against the pure-JAX (f32) reference of the same forward pass
    s_ref, p_ref = seq_act, pair_act
    for p in params:
        s_ref, p_ref = _iteration_ref(p, s_ref, p_ref, seq_mask, pair_mask)
    np.testing.assert_allclose(np.asarray(seq_out), np.asarray(s_ref), rtol=3e-2, atol=3e-2)
    np.testing.assert_allclose(np.asarray(pair_out), np.asarray(p_ref), rtol=3e-2, atol=3e-2)

    print("KERNEL_OK")
</pallas_src>

<mosaic_0001>
module attributes {stable_mosaic.version = 11 : i64} {
  func.func @_opm_proj_kernel(%arg0: i32, %arg1: i32, %arg2: memref<1x8x32xf32, #tpu.memory_space<vmem>>, %arg3: memref<1x8x1xf32, #tpu.memory_space<vmem>>, %arg4: memref<32x16xf32, #tpu.memory_space<vmem>>, %arg5: memref<1x16xf32, #tpu.memory_space<vmem>>, %arg6: memref<1x8x8xf32, #tpu.memory_space<vmem>>, %arg7: memref<1x8x8xf32, #tpu.memory_space<vmem>>) attributes {dimension_semantics = [#tpu.dimension_semantics<parallel>, #tpu.dimension_semantics<parallel>], iteration_bounds = array<i64: 2, 1>, scalar_prefetch = 0 : i64, scratch_operands = 0 : i64, tpu.core_type = #tpu.core_type<tc>, window_params = [{transform_indices = @transform_0, window_bounds = array<i64: 1, 8, 32>}, {transform_indices = @transform_1, window_bounds = array<i64: 1, 8, 1>}, {pipeline_mode = #tpu.pipeline_mode<synchronous>, transform_indices = @transform_2, window_bounds = array<i64: 32, 16>}, {pipeline_mode = #tpu.pipeline_mode<synchronous>, transform_indices = @transform_3, window_bounds = array<i64: 1, 16>}, {transform_indices = @transform_4, window_bounds = array<i64: 1, 8, 8>}, {transform_indices = @transform_5, window_bounds = array<i64: 1, 8, 8>}]} {
    %c0 = arith.constant 0 : index
    %c0_0 = arith.constant 0 : index
    %c0_1 = arith.constant 0 : index
    %0 = vector.load %arg2[%c0, %c0_0, %c0_1] : memref<1x8x32xf32, #tpu.memory_space<vmem>>, vector<1x8x32xf32>
    %1 = vector.shape_cast %0 : vector<1x8x32xf32> to vector<8x32xf32>
    %cst = arith.constant dense<0.000000e+00> : vector<8xf32>
    %2 = vector.multi_reduction <add>, %1, %cst [1] : vector<8x32xf32> to vector<8xf32>
    %3 = vector.shape_cast %2 : vector<8xf32> to vector<8x1xf32>
    %cst_2 = arith.constant 3.200000e+01 : f32
    %4 = vector.broadcast %cst_2 : f32 to vector<8x1xf32>
    %5 = arith.divf %3, %4 : vector<8x1xf32>
    %6 = vector.broadcast %5 : vector<8x1xf32> to vector<8x32xf32>
    %7 = arith.subf %1, %6 : vector<8x32xf32>
    %8 = arith.mulf %7, %7 : vector<8x32xf32>
    %cst_3 = arith.constant dense<0.000000e+00> : vector<8xf32>
    %9 = vector.multi_reduction <add>, %8, %cst_3 [1] : vector<8x32xf32> to vector<8xf32>
    %10 = vector.shape_cast %9 : vector<8xf32> to vector<8x1xf32>
    %cst_4 = arith.constant 3.200000e+01 : f32
    %11 = vector.broadcast %cst_4 : f32 to vector<8x1xf32>
    %12 = arith.divf %10, %11 : vector<8x1xf32>
    %13 = vector.broadcast %5 : vector<8x1xf32> to vector<8x32xf32>
    %14 = arith.subf %1, %13 : vector<8x32xf32>
    %cst_5 = arith.constant 9.99999974E-6 : f32
    %15 = vector.broadcast %cst_5 : f32 to vector<8x1xf32>
    %16 = arith.addf %12, %15 : vector<8x1xf32>
    %17 = math.rsqrt %16 : vector<8x1xf32>
    %18 = vector.broadcast %17 : vector<8x1xf32> to vector<8x32xf32>
    %19 = arith.mulf %14, %18 : vector<8x32xf32>
    %c0_6 = arith.constant 0 : index
    %c0_7 = arith.constant 0 : index
    %20 = vector.load %arg4[%c0_6, %c0_7] : memref<32x16xf32, #tpu.memory_space<vmem>>, vector<32x16xf32>
    %21 = arith.truncf %19 : vector<8x32xf32> to vector<8x32xbf16>
    %22 = arith.truncf %20 : vector<32x16xf32> to vector<32x16xbf16>
    %cst_8 = arith.constant dense<0.000000e+00> : vector<8x16xf32>
    %23 = tpu.matmul %21, %22, %cst_8 {dimension_numbers = #tpu.dot_dimension_numbers<[1], [0], [0], [1], [0, 0, 1, 1], [], []>} : vector<8x32xbf16>, vector<32x16xbf16>, vector<8x16xf32> -> vector<8x16xf32>
    %c0_9 = arith.constant 0 : index
    %c0_10 = arith.constant 0 : index
    %24 = vector.load %arg5[%c0_9, %c0_10] : memref<1x16xf32, #tpu.memory_space<vmem>>, vector<1x16xf32>
    %25 = vector.broadcast %24 : vector<1x16xf32> to vector<8x16xf32>
    %26 = arith.addf %23, %25 : vector<8x16xf32>
    %c0_11 = arith.constant 0 : index
    %c0_12 = arith.constant 0 : index
    %c0_13 = arith.constant 0 : index
    %27 = vector.load %arg3[%c0_11, %c0_12, %c0_13] : memref<1x8x1xf32, #tpu.memory_space<vmem>>, vector<1x8x1xf32>
    %28 = vector.shape_cast %27 : vector<1x8x1xf32> to vector<8x1xf32>
    %29 = vector.extract_strided_slice %26 {offsets = [0, 0], sizes = [8, 8], strides = [1, 1]} : vector<8x16xf32> to vector<8x8xf32>
    %30 = vector.broadcast %28 : vector<8x1xf32> to vector<8x8xf32>
    %31 = arith.mulf %30, %29 : vector<8x8xf32>
    %c0_14 = arith.constant 0 : index
    %c0_15 = arith.constant 0 : index
    %c0_16 = arith.constant 0 : index
    %32 = vector.load %arg6[%c0_14, %c0_15, %c0_16] : memref<1x8x8xf32, #tpu.memory_space<vmem>>, vector<1x8x8xf32>
    %33 = vector.shape_cast %32 : vector<1x8x8xf32> to vector<8x8xf32>
    %34 = vector.shape_cast %31 : vector<8x8xf32> to vector<1x8x8xf32>
    tpu.vector_store %arg6[%c0_14, %c0_15, %c0_16], %34 {strides = array<i32>} : memref<1x8x8xf32, #tpu.memory_space<vmem>>, vector<1x8x8xf32>,
    %35 = vector.extract_strided_slice %26 {offsets = [0, 8], sizes = [8, 8], strides = [1, 1]} : vector<8x16xf32> to vector<8x8xf32>
    %36 = vector.broadcast %28 : vector<8x1xf32> to vector<8x8xf32>
    %37 = arith.mulf %36, %35 : vector<8x8xf32>
    %c0_17 = arith.constant 0 : index
    %c0_18 = arith.constant 0 : index
    %c0_19 = arith.constant 0 : index
    %38 = vector.load %arg7[%c0_17, %c0_18, %c0_19] : memref<1x8x8xf32, #tpu.memory_space<vmem>>, vector<1x8x8xf32>
    %39 = vector.shape_cast %38 : vector<1x8x8xf32> to vector<8x8xf32>
    %40 = vector.shape_cast %37 : vector<8x8xf32> to vector<1x8x8xf32>
    tpu.vector_store %arg7[%c0_17, %c0_18, %c0_19], %40 {strides = array<i32>} : memref<1x8x8xf32, #tpu.memory_space<vmem>>, vector<1x8x8xf32>,
    return
  }
  func.func @transform_0(%arg0: i32, %arg1: i32) -> (i32, i32, i32) {
    %c0_i32 = arith.constant 0 : i32
    %c0_i32_0 = arith.constant 0 : i32
    return %arg0, %arg1, %c0_i32 : i32, i32, i32
  }
  func.func @transform_1(%arg0: i32, %arg1: i32) -> (i32, i32, i32) {
    %c0_i32 = arith.constant 0 : i32
    %c0_i32_0 = arith.constant 0 : i32
    return %arg0, %arg1, %c0_i32 : i32, i32, i32
  }
  func.func @transform_2(%arg0: i32, %arg1: i32) -> (i32, i32) {
    %c0_i32 = arith.constant 0 : i32
    %c0_i32_0 = arith.constant 0 : i32
    %c0_i32_1 = arith.constant 0 : i32
    return %c0_i32, %c0_i32_0 : i32, i32
  }
  func.func @transform_3(%arg0: i32, %arg1: i32) -> (i32, i32) {
    %c0_i32 = arith.constant 0 : i32
    %c0_i32_0 = arith.constant 0 : i32
    %c0_i32_1 = arith.constant 0 : i32
    return %c0_i32, %c0_i32_0 : i32, i32
  }
  func.func @transform_4(%arg0: i32, %arg1: i32) -> (i32, i32, i32) {
    %c0_i32 = arith.constant 0 : i32
    %c0_i32_0 = arith.constant 0 : i32
    return %arg0, %arg1, %c0_i32 : i32, i32, i32
  }
  func.func @transform_5(%arg0: i32, %arg1: i32) -> (i32, i32, i32) {
    %c0_i32 = arith.constant 0 : i32
    %c0_i32_0 = arith.constant 0 : i32
    return %arg0, %arg1, %c0_i32 : i32, i32, i32
  }
}

module attributes {stable_mosaic.version = 11 : i64} {
  func.func @_seq_update_kernel(%arg0: i32, %arg1: i32, %arg2: memref<1x8x8x16xf32, #tpu.memory_space<vmem>>, %arg3: memref<1x8x8xf32, #tpu.memory_space<vmem>>, %arg4: memref<1x8x32xf32, #tpu.memory_space<vmem>>, %arg5: memref<16x64xf32, #tpu.memory_space<vmem>>, %arg6: memref<1x64xf32, #tpu.memory_space<vmem>>, %arg7: memref<32x32xf32, #tpu.memory_space<vmem>>, %arg8: memref<1x32xf32, #tpu.memory_space<vmem>>, %arg9: memref<32x32xf32, #tpu.memory_space<vmem>>, %arg10: memref<1x32xf32, #tpu.memory_space<vmem>>, %arg11: memref<1x8x32xf32, #tpu.memory_space<vmem>>) attributes {dimension_semantics = [#tpu.dimension_semantics<parallel>, #tpu.dimension_semantics<arbitrary>], iteration_bounds = array<i64: 2, 1>, scalar_prefetch = 0 : i64, scratch_operands = 0 : i64, tpu.core_type = #tpu.core_type<tc>, window_params = [{transform_indices = @transform_0, window_bounds = array<i64: 1, 8, 8, 16>}, {transform_indices = @transform_1, window_bounds = array<i64: 1, 8, 8>}, {transform_indices = @transform_2, window_bounds = array<i64: 1, 8, 32>}, {pipeline_mode = #tpu.pipeline_mode<synchronous>, transform_indices = @transform_3, window_bounds = array<i64: 16, 64>}, {pipeline_mode = #tpu.pipeline_mode<synchronous>, transform_indices = @transform_4, window_bounds = array<i64: 1, 64>}, {pipeline_mode = #tpu.pipeline_mode<synchronous>, transform_indices = @transform_5, window_bounds = array<i64: 32, 32>}, {pipeline_mode = #tpu.pipeline_mode<synchronous>, transform_indices = @transform_6, window_bounds = array<i64: 1, 32>}, {pipeline_mode = #tpu.pipeline_mode<synchronous>, transform_indices = @transform_7, window_bounds = array<i64: 32, 32>}, {pipeline_mode = #tpu.pipeline_mode<synchronous>, transform_indices = @transform_8, window_bounds = array<i64: 1, 32>}, {transform_indices = @transform_9, window_bounds = array<i64: 1, 8, 32>}]} {
    %c0 = arith.constant 0 : index
    %c0_0 = arith.constant 0 : index
    %c0_1 = arith.constant 0 : index
    %c0_2 = arith.constant 0 : index
    %0 = vector.load %arg2[%c0, %c0_0, %c0_1, %c0_2] : memref<1x8x8x16xf32, #tpu.memory_space<vmem>>, vector<1x8x8x16xf32>
    %1 = vector.shape_cast %0 : vector<1x8x8x16xf32> to vector<8x8x16xf32>
    %2 = vector.shape_cast %1 : vector<8x8x16xf32> to vector<64x16xf32>
    %cst = arith.constant dense<0.000000e+00> : vector<64xf32>
    %3 = vector.multi_reduction <add>, %2, %cst [1] : vector<64x16xf32> to vector<64xf32>
    %4 = vector.shape_cast %3 : vector<64xf32> to vector<64x1xf32>
    %cst_3 = arith.constant 1.600000e+01 : f32
    %5 = vector.broadcast %cst_3 : f32 to vector<64x1xf32>
    %6 = arith.divf %4, %5 : vector<64x1xf32>
    %7 = vector.broadcast %6 : vector<64x1xf32> to vector<64x16xf32>
    %8 = arith.subf %2, %7 : vector<64x16xf32>
    %9 = arith.mulf %8, %8 : vector<64x16xf32>
    %cst_4 = arith.constant dense<0.000000e+00> : vector<64xf32>
    %10 = vector.multi_reduction <add>, %9, %cst_4 [1] : vector<64x16xf32> to vector<64xf32>
    %11 = vector.shape_cast %10 : vector<64xf32> to vector<64x1xf32>
    %cst_5 = arith.constant 1.600000e+01 : f32
    %12 = vector.broadcast %cst_5 : f32 to vector<64x1xf32>
    %13 = arith.divf %11, %12 : vector<64x1xf32>
    %14 = vector.broadcast %6 : vector<64x1xf32> to vector<64x16xf32>
    %15 = arith.subf %2, %14 : vector<64x16xf32>
    %cst_6 = arith.constant 9.99999974E-6 : f32
    %16 = vector.broadcast %cst_6 : f32 to vector<64x1xf32>
    %17 = arith.addf %13, %16 : vector<64x1xf32>
    %18 = math.rsqrt %17 : vector<64x1xf32>
    %19 = vector.broadcast %18 : vector<64x1xf32> to vector<64x16xf32>
    %20 = arith.mulf %15, %19 : vector<64x16xf32>
    %c0_7 = arith.constant 0 : index
    %c0_8 = arith.constant 0 : index
    %c0_9 = arith.constant 0 : index
    %21 = vector.load %arg3[%c0_7, %c0_8, %c0_9] : memref<1x8x8xf32, #tpu.memory_space<vmem>>, vector<1x8x8xf32>
    %22 = vector.shape_cast %21 : vector<1x8x8xf32> to vector<8x8xf32>
    %c0_i32 = arith.constant 0 : i32
    %23 = arith.cmpi eq, %arg1, %c0_i32 : i32
    %24 = arith.extui %23 : i1 to i32
    %c0_i32_10 = arith.constant 0 : i32
    %25 = arith.cmpi ne, %24, %c0_i32_10 : i32
    scf.if %25 {
      %c0_39 = arith.constant 0 : index
      %c0_40 = arith.constant 0 : index
      %c0_41 = arith.constant 0 : index
      %77 = vector.load %arg4[%c0_39, %c0_40, %c0_41] : memref<1x8x32xf32, #tpu.memory_space<vmem>>, vector<1x8x32xf32>
      %78 = vector.shape_cast %77 : vector<1x8x32xf32> to vector<8x32xf32>
      %c0_42 = arith.constant 0 : index
      %c0_43 = arith.constant 0 : index
      %c0_44 = arith.constant 0 : index
      %79 = vector.load %arg11[%c0_42, %c0_43, %c0_44] : memref<1x8x32xf32, #tpu.memory_space<vmem>>, vector<1x8x32xf32>
      %80 = vector.shape_cast %79 : vector<1x8x32xf32> to vector<8x32xf32>
      %81 = vector.shape_cast %78 : vector<8x32xf32> to vector<1x8x32xf32>
      tpu.vector_store %arg11[%c0_42, %c0_43, %c0_44], %81 {strides = array<i32>} : memref<1x8x32xf32, #tpu.memory_space<vmem>>, vector<1x8x32xf32>,
    } else {
    }
    %c0_11 = arith.constant 0 : index
    %c0_12 = arith.constant 0 : index
    %26 = vector.load %arg5[%c0_11, %c0_12] : memref<16x64xf32, #tpu.memory_space<vmem>>, vector<16x64xf32>
    %27 = arith.truncf %20 : vector<64x16xf32> to vector<64x16xbf16>
    %28 = arith.truncf %26 : vector<16x64xf32> to vector<16x64xbf16>
    %cst_13 = arith.constant dense<0.000000e+00> : vector<64x64xf32>
    %29 = tpu.matmul %27, %28, %cst_13 {dimension_numbers = #tpu.dot_dimension_numbers<[1], [0], [0], [1], [0, 0, 1, 1], [], []>} : vector<64x16xbf16>, vector<16x64xbf16>, vector<64x64xf32> -> vector<64x64xf32>
    %c0_14 = arith.constant 0 : index
    %c0_15 = arith.constant 0 : index
    %30 = vector.load %arg6[%c0_14, %c0_15] : memref<1x64xf32, #tpu.memory_space<vmem>>, vector<1x64xf32>
    %31 = vector.broadcast %30 : vector<1x64xf32> to vector<64x64xf32>
    %32 = arith.addf %29, %31 : vector<64x64xf32>
    %cst_16 = arith.constant 0.000000e+00 : f32
    %33 = vector.broadcast %cst_16 : f32 to vector<64x64xf32>
    %34 = arith.maximumf %32, %33 : vector<64x64xf32>
    %35 = vector.extract_strided_slice %34 {offsets = [0, 0], sizes = [64, 32], strides = [1, 1]} : vector<64x64xf32> to vector<64x32xf32>
    %36 = vector.extract_strided_slice %34 {offsets = [0, 32], sizes = [64, 32], strides = [1, 1]} : vector<64x64xf32> to vector<64x32xf32>
    %c0_17 = arith.constant 0 : index
    %c0_18 = arith.constant 0 : index
    %37 = vector.load %arg7[%c0_17, %c0_18] : memref<32x32xf32, #tpu.memory_space<vmem>>, vector<32x32xf32>
    %38 = arith.truncf %35 : vector<64x32xf32> to vector<64x32xbf16>
    %39 = arith.truncf %37 : vector<32x32xf32> to vector<32x32xbf16>
    %cst_19 = arith.constant dense<0.000000e+00> : vector<64x32xf32>
    %40 = tpu.matmul %38, %39, %cst_19 {dimension_numbers = #tpu.dot_dimension_numbers<[1], [0], [0], [1], [0, 0, 1, 1], [], []>} : vector<64x32xbf16>, vector<32x32xbf16>, vector<64x32xf32> -> vector<64x32xf32>
    %c0_20 = arith.constant 0 : index
    %c0_21 = arith.constant 0 : index
    %41 = vector.load %arg8[%c0_20, %c0_21] : memref<1x32xf32, #tpu.memory_space<vmem>>, vector<1x32xf32>
    %42 = vector.broadcast %41 : vector<1x32xf32> to vector<64x32xf32>
    %43 = arith.addf %40, %42 : vector<64x32xf32>
    %44 = vector.shape_cast %43 : vector<64x32xf32> to vector<8x8x32xf32>
    %c0_22 = arith.constant 0 : index
    %c0_23 = arith.constant 0 : index
    %c0_24 = arith.constant 0 : index
    %45 = vector.load %arg11[%c0_22, %c0_23, %c0_24] : memref<1x8x32xf32, #tpu.memory_space<vmem>>, vector<1x8x32xf32>
    %46 = vector.shape_cast %45 : vector<1x8x32xf32> to vector<8x32xf32>
    %47 = vector.shape_cast %22 : vector<8x8xf32> to vector<8x8x1xf32>
    %48 = vector.broadcast %47 : vector<8x8x1xf32> to vector<8x8x32xf32>
    %49 = arith.mulf %44, %48 : vector<8x8x32xf32>
    %cst_25 = arith.constant dense<0.000000e+00> : vector<8x32xf32>
    %50 = vector.multi_reduction <add>, %49, %cst_25 [0] : vector<8x8x32xf32> to vector<8x32xf32>
    %51 = arith.addf %46, %50 : vector<8x32xf32>
    %c0_26 = arith.constant 0 : index
    %c0_27 = arith.constant 0 : index
    %c0_28 = arith.constant 0 : index
    %52 = vector.load %arg11[%c0_26, %c0_27, %c0_28] : memref<1x8x32xf32, #tpu.memory_space<vmem>>, vector<1x8x32xf32>
    %53 = vector.shape_cast %52 : vector<1x8x32xf32> to vector<8x32xf32>
    %54 = vector.shape_cast %51 : vector<8x32xf32> to vector<1x8x32xf32>
    tpu.vector_store %arg11[%c0_26, %c0_27, %c0_28], %54 {strides = array<i32>} : memref<1x8x32xf32, #tpu.memory_space<vmem>>, vector<1x8x32xf32>,
    %c0_29 = arith.constant 0 : index
    %c0_30 = arith.constant 0 : index
    %55 = vector.load %arg9[%c0_29, %c0_30] : memref<32x32xf32, #tpu.memory_space<vmem>>, vector<32x32xf32>
    %56 = arith.truncf %36 : vector<64x32xf32> to vector<64x32xbf16>
    %57 = arith.truncf %55 : vector<32x32xf32> to vector<32x32xbf16>
    %cst_31 = arith.constant dense<0.000000e+00> : vector<64x32xf32>
    %58 = tpu.matmul %56, %57, %cst_31 {dimension_numbers = #tpu.dot_dimension_numbers<[1], [0], [0], [1], [0, 0, 1, 1], [], []>} : vector<64x32xbf16>, vector<32x32xbf16>, vector<64x32xf32> -> vector<64x32xf32>
    %c0_32 = arith.constant 0 : index
    %c0_33 = arith.constant 0 : index
    %59 = vector.load %arg10[%c0_32, %c0_33] : memref<1x32xf32, #tpu.memory_space<vmem>>, vector<1x32xf32>
    %60 = vector.broadcast %59 : vector<1x32xf32> to vector<64x32xf32>
    %61 = arith.addf %58, %60 : vector<64x32xf32>
    %62 = vector.shape_cast %61 : vector<64x32xf32> to vector<8x8x32xf32>
    %63 = vector.shape_cast %22 : vector<8x8xf32> to vector<8x8x1xf32>
    %64 = vector.broadcast %63 : vector<8x8x1xf32> to vector<8x8x32xf32>
    %65 = arith.mulf %62, %64 : vector<8x8x32xf32>
    %cst_34 = arith.constant dense<0.000000e+00> : vector<8x32xf32>
    %66 = vector.multi_reduction <add>, %65, %cst_34 [1] : vector<8x8x32xf32> to vector<8x32xf32>
    %c8_i32 = arith.constant 8 : i32
    %67 = arith.muli %arg1, %c8_i32 : i32
    %68 = tpu.assume_multiple %67, 8 : i32
    %c0_35 = arith.constant 0 : index
    %69 = arith.index_cast %68 : i32 to index
    %c0_36 = arith.constant 0 : index
    %70 = vector.load %arg11[%c0_35, %69, %c0_36] : memref<1x8x32xf32, #tpu.memory_space<vmem>>, vector<1x8x32xf32>
    %71 = vector.shape_cast %70 : vector<1x8x32xf32> to vector<8x32xf32>
    %72 = arith.addf %71, %66 : vector<8x32xf32>
    %c0_37 = arith.constant 0 : index
    %73 = arith.index_cast %68 : i32 to index
    %c0_38 = arith.constant 0 : index
    %74 = vector.load %arg11[%c0_37, %73, %c0_38] : memref<1x8x32xf32, #tpu.memory_space<vmem>>, vector<1x8x32xf32>
    %75 = vector.shape_cast %74 : vector<1x8x32xf32> to vector<8x32xf32>
    %76 = vector.shape_cast %72 : vector<8x32xf32> to vector<1x8x32xf32>
    tpu.vector_store %arg11[%c0_37, %73, %c0_38], %76 {strides = array<i32>} : memref<1x8x32xf32, #tpu.memory_space<vmem>>, vector<1x8x32xf32>,
    return
  }
  func.func @transform_0(%arg0: i32, %arg1: i32) -> (i32, i32, i32, i32) {
    %c0_i32 = arith.constant 0 : i32
    %c0_i32_0 = arith.constant 0 : i32
    %c0_i32_1 = arith.constant 0 : i32
    return %arg0, %arg1, %c0_i32, %c0_i32_0 : i32, i32, i32, i32
  }
  func.func @transform_1(%arg0: i32, %arg1: i32) -> (i32, i32, i32) {
    %c0_i32 = arith.constant 0 : i32
    %c0_i32_0 = arith.constant 0 : i32
    return %arg0, %arg1, %c0_i32 : i32, i32, i32
  }
  func.func @transform_2(%arg0: i32, %arg1: i32) -> (i32, i32, i32) {
    %c0_i32 = arith.constant 0 : i32
    %c0_i32_0 = arith.constant 0 : i32
    %c0_i32_1 = arith.constant 0 : i32
    return %arg0, %c0_i32, %c0_i32_0 : i32, i32, i32
  }
  func.func @transform_3(%arg0: i32, %arg1: i32) -> (i32, i32) {
    %c0_i32 = arith.constant 0 : i32
    %c0_i32_0 = arith.constant 0 : i32
    %c0_i32_1 = arith.constant 0 : i32
    return %c0_i32, %c0_i32_0 : i32, i32
  }
  func.func @transform_4(%arg0: i32, %arg1: i32) -> (i32, i32) {
    %c0_i32 = arith.constant 0 : i32
    %c0_i32_0 = arith.constant 0 : i32
    %c0_i32_1 = arith.constant 0 : i32
    return %c0_i32, %c0_i32_0 : i32, i32
  }
  func.func @transform_5(%arg0: i32, %arg1: i32) -> (i32, i32) {
    %c0_i32 = arith.constant 0 : i32
    %c0_i32_0 = arith.constant 0 : i32
    %c0_i32_1 = arith.constant 0 : i32
    return %c0_i32, %c0_i32_0 : i32, i32
  }
  func.func @transform_6(%arg0: i32, %arg1: i32) -> (i32, i32) {
    %c0_i32 = arith.constant 0 : i32
    %c0_i32_0 = arith.constant 0 : i32
    %c0_i32_1 = arith.constant 0 : i32
    return %c0_i32, %c0_i32_0 : i32, i32
  }
  func.func @transform_7(%arg0: i32, %arg1: i32) -> (i32, i32) {
    %c0_i32 = arith.constant 0 : i32
    %c0_i32_0 = arith.constant 0 : i32
    %c0_i32_1 = arith.constant 0 : i32
    return %c0_i32, %c0_i32_0 : i32, i32
  }
  func.func @transform_8(%arg0: i32, %arg1: i32) -> (i32, i32) {
    %c0_i32 = arith.constant 0 : i32
    %c0_i32_0 = arith.constant 0 : i32
    %c0_i32_1 = arith.constant 0 : i32
    return %c0_i32, %c0_i32_0 : i32, i32
  }
  func.func @transform_9(%arg0: i32, %arg1: i32) -> (i32, i32, i32) {
    %c0_i32 = arith.constant 0 : i32
    %c0_i32_0 = arith.constant 0 : i32
    %c0_i32_1 = arith.constant 0 : i32
    return %arg0, %c0_i32, %c0_i32_0 : i32, i32, i32
  }
}

module attributes {stable_mosaic.version = 11 : i64} {
  func.func @_pair_update_kernel(%arg0: i32, %arg1: i32, %arg2: i32, %arg3: memref<1x8x8x16xf32, #tpu.memory_space<vmem>>, %arg4: memref<1x8x8xf32, #tpu.memory_space<vmem>>, %arg5: memref<1x8x8xf32, #tpu.memory_space<vmem>>, %arg6: memref<8x128xf32, #tpu.memory_space<vmem>>, %arg7: memref<1x16xf32, #tpu.memory_space<vmem>>, %arg8: memref<16x32xf32, #tpu.memory_space<vmem>>, %arg9: memref<1x32xf32, #tpu.memory_space<vmem>>, %arg10: memref<32x16xf32, #tpu.memory_space<vmem>>, %arg11: memref<1x16xf32, #tpu.memory_space<vmem>>, %arg12: memref<1x8x8x16xf32, #tpu.memory_space<vmem>>, %arg13: memref<8x128xf32, #tpu.memory_space<vmem>>) attributes {dimension_semantics = [#tpu.dimension_semantics<parallel>, #tpu.dimension_semantics<parallel>, #tpu.dimension_semantics<arbitrary>], iteration_bounds = array<i64: 2, 1, 1>, scalar_prefetch = 0 : i64, scratch_operands = 1 : i64, tpu.core_type = #tpu.core_type<tc>, window_params = [{transform_indices = @transform_0, window_bounds = array<i64: 1, 8, 8, 16>}, {transform_indices = @transform_1, window_bounds = array<i64: 1, 8, 8>}, {transform_indices = @transform_2, window_bounds = array<i64: 1, 8, 8>}, {pipeline_mode = #tpu.pipeline_mode<synchronous>, transform_indices = @transform_3, window_bounds = array<i64: 8, 128>}, {pipeline_mode = #tpu.pipeline_mode<synchronous>, transform_indices = @transform_4, window_bounds = array<i64: 1, 16>}, {pipeline_mode = #tpu.pipeline_mode<synchronous>, transform_indices = @transform_5, window_bounds = array<i64: 16, 32>}, {pipeline_mode = #tpu.pipeline_mode<synchronous>, transform_indices = @transform_6, window_bounds = array<i64: 1, 32>}, {pipeline_mode = #tpu.pipeline_mode<synchronous>, transform_indices = @transform_7, window_bounds = array<i64: 32, 16>}, {pipeline_mode = #tpu.pipeline_mode<synchronous>, transform_indices = @transform_8, window_bounds = array<i64: 1, 16>}, {transform_indices = @transform_9, window_bounds = array<i64: 1, 8, 8, 16>}]} {
    %c0_i32 = arith.constant 0 : i32
    %0 = arith.cmpi eq, %arg2, %c0_i32 : i32
    %1 = arith.extui %0 : i1 to i32
    %c0_i32_0 = arith.constant 0 : i32
    %2 = arith.cmpi ne, %1, %c0_i32_0 : i32
    scf.if %2 {
      %c0_31 = arith.constant 0 : index
      %c0_32 = arith.constant 0 : index
      %c0_33 = arith.constant 0 : index
      %60 = vector.load %arg4[%c0_31, %c0_32, %c0_33] : memref<1x8x8xf32, #tpu.memory_space<vmem>>, vector<1x8x8xf32>
      %61 = vector.shape_cast %60 : vector<1x8x8xf32> to vector<8x8xf32>
      %c0_34 = arith.constant 0 : index
      %c0_35 = arith.constant 0 : index
      %62 = vector.load %arg6[%c0_34, %c0_35] : memref<8x128xf32, #tpu.memory_space<vmem>>, vector<8x128xf32>
      %63 = arith.truncf %61 : vector<8x8xf32> to vector<8x8xbf16>
      %64 = arith.truncf %62 : vector<8x128xf32> to vector<8x128xbf16>
      %cst_36 = arith.constant dense<0.000000e+00> : vector<8x128xf32>
      %65 = tpu.matmul %63, %64, %cst_36 {dimension_numbers = #tpu.dot_dimension_numbers<[1], [0], [0], [1], [0, 0, 1, 1], [], []>} : vector<8x8xbf16>, vector<8x128xbf16>, vector<8x128xf32> -> vector<8x128xf32>
      %c0_37 = arith.constant 0 : index
      %c0_38 = arith.constant 0 : index
      %66 = vector.load %arg13[%c0_37, %c0_38] : memref<8x128xf32, #tpu.memory_space<vmem>>, vector<8x128xf32>
      tpu.vector_store %arg13[%c0_37, %c0_38], %65 {strides = array<i32>} : memref<8x128xf32, #tpu.memory_space<vmem>>, vector<8x128xf32>,
    } else {
    }
    %c0 = arith.constant 0 : index
    %c0_1 = arith.constant 0 : index
    %3 = vector.load %arg13[%c0, %c0_1] : memref<8x128xf32, #tpu.memory_space<vmem>>, vector<8x128xf32>
    %4 = vector.shape_cast %3 : vector<8x128xf32> to vector<8x8x16xf32>
    %5 = arith.truncf %4 : vector<8x8x16xf32> to vector<8x8x16xbf16>
    %c0_2 = arith.constant 0 : index
    %c0_3 = arith.constant 0 : index
    %c0_4 = arith.constant 0 : index
    %6 = vector.load %arg5[%c0_2, %c0_3, %c0_4] : memref<1x8x8xf32, #tpu.memory_space<vmem>>, vector<1x8x8xf32>
    %7 = vector.shape_cast %6 : vector<1x8x8xf32> to vector<8x8xf32>
    %8 = vector.shape_cast %7 : vector<8x8xf32> to vector<1x8x8xf32>
    %9 = vector.shape_cast %8 : vector<1x8x8xf32> to vector<1x8x8xf32>
    %10 = vector.broadcast %9 : vector<1x8x8xf32> to vector<8x8x8xf32>
    %11 = arith.truncf %10 : vector<8x8x8xf32> to vector<8x8x8xbf16>
    %cst = arith.constant dense<0.000000e+00> : vector<8x8x16xf32>
    %12 = tpu.matmul %11, %5, %cst {dimension_numbers = #tpu.dot_dimension_numbers<[2], [1], [1], [2], [0, 0, 0, 1, 1, 2], [0], [0]>} : vector<8x8x8xbf16>, vector<8x8x16xbf16>, vector<8x8x16xf32> -> vector<8x8x16xf32>
    %c0_5 = arith.constant 0 : index
    %c0_6 = arith.constant 0 : index
    %c0_7 = arith.constant 0 : index
    %c0_8 = arith.constant 0 : index
    %13 = vector.load %arg3[%c0_5, %c0_6, %c0_7, %c0_8] : memref<1x8x8x16xf32, #tpu.memory_space<vmem>>, vector<1x8x8x16xf32>
    %14 = vector.shape_cast %13 : vector<1x8x8x16xf32> to vector<8x8x16xf32>
    %15 = arith.addf %14, %12 : vector<8x8x16xf32>
    %c0_9 = arith.constant 0 : index
    %c0_10 = arith.constant 0 : index
    %16 = vector.load %arg7[%c0_9, %c0_10] : memref<1x16xf32, #tpu.memory_space<vmem>>, vector<1x16xf32>
    %17 = vector.shape_cast %16 : vector<1x16xf32> to vector<1x1x16xf32>
    %18 = vector.broadcast %17 : vector<1x1x16xf32> to vector<8x8x16xf32>
    %19 = arith.addf %15, %18 : vector<8x8x16xf32>
    %20 = vector.shape_cast %19 : vector<8x8x16xf32> to vector<64x16xf32>
    %cst_11 = arith.constant dense<0.000000e+00> : vector<64xf32>
    %21 = vector.multi_reduction <add>, %20, %cst_11 [1] : vector<64x16xf32> to vector<64xf32>
    %22 = vector.shape_cast %21 : vector<64xf32> to vector<64x1xf32>
    %cst_12 = arith.constant 1.600000e+01 : f32
    %23 = vector.broadcast %cst_12 : f32 to vector<64x1xf32>
    %24 = arith.divf %22, %23 : vector<64x1xf32>
    %25 = vector.broadcast %24 : vector<64x1xf32> to vector<64x16xf32>
    %26 = arith.subf %20, %25 : vector<64x16xf32>
    %27 = arith.mulf %26, %26 : vector<64x16xf32>
    %cst_13 = arith.constant dense<0.000000e+00> : vector<64xf32>
    %28 = vector.multi_reduction <add>, %27, %cst_13 [1] : vector<64x16xf32> to vector<64xf32>
    %29 = vector.shape_cast %28 : vector<64xf32> to vector<64x1xf32>
    %cst_14 = arith.constant 1.600000e+01 : f32
    %30 = vector.broadcast %cst_14 : f32 to vector<64x1xf32>
    %31 = arith.divf %29, %30 : vector<64x1xf32>
    %32 = vector.broadcast %24 : vector<64x1xf32> to vector<64x16xf32>
    %33 = arith.subf %20, %32 : vector<64x16xf32>
    %cst_15 = arith.constant 9.99999974E-6 : f32
    %34 = vector.broadcast %cst_15 : f32 to vector<64x1xf32>
    %35 = arith.addf %31, %34 : vector<64x1xf32>
    %36 = math.rsqrt %35 : vector<64x1xf32>
    %37 = vector.broadcast %36 : vector<64x1xf32> to vector<64x16xf32>
    %38 = arith.mulf %33, %37 : vector<64x16xf32>
    %c0_16 = arith.constant 0 : index
    %c0_17 = arith.constant 0 : index
    %39 = vector.load %arg8[%c0_16, %c0_17] : memref<16x32xf32, #tpu.memory_space<vmem>>, vector<16x32xf32>
    %40 = arith.truncf %38 : vector<64x16xf32> to vector<64x16xbf16>
    %41 = arith.truncf %39 : vector<16x32xf32> to vector<16x32xbf16>
    %cst_18 = arith.constant dense<0.000000e+00> : vector<64x32xf32>
    %42 = tpu.matmul %40, %41, %cst_18 {dimension_numbers = #tpu.dot_dimension_numbers<[1], [0], [0], [1], [0, 0, 1, 1], [], []>} : vector<64x16xbf16>, vector<16x32xbf16>, vector<64x32xf32> -> vector<64x32xf32>
    %c0_19 = arith.constant 0 : index
    %c0_20 = arith.constant 0 : index
    %43 = vector.load %arg9[%c0_19, %c0_20] : memref<1x32xf32, #tpu.memory_space<vmem>>, vector<1x32xf32>
    %44 = vector.broadcast %43 : vector<1x32xf32> to vector<64x32xf32>
    %45 = arith.addf %42, %44 : vector<64x32xf32>
    %cst_21 = arith.constant 0.000000e+00 : f32
    %46 = vector.broadcast %cst_21 : f32 to vector<64x32xf32>
    %47 = arith.maximumf %45, %46 : vector<64x32xf32>
    %c0_22 = arith.constant 0 : index
    %c0_23 = arith.constant 0 : index
    %48 = vector.load %arg10[%c0_22, %c0_23] : memref<32x16xf32, #tpu.memory_space<vmem>>, vector<32x16xf32>
    %49 = arith.truncf %47 : vector<64x32xf32> to vector<64x32xbf16>
    %50 = arith.truncf %48 : vector<32x16xf32> to vector<32x16xbf16>
    %cst_24 = arith.constant dense<0.000000e+00> : vector<64x16xf32>
    %51 = tpu.matmul %49, %50, %cst_24 {dimension_numbers = #tpu.dot_dimension_numbers<[1], [0], [0], [1], [0, 0, 1, 1], [], []>} : vector<64x32xbf16>, vector<32x16xbf16>, vector<64x16xf32> -> vector<64x16xf32>
    %c0_25 = arith.constant 0 : index
    %c0_26 = arith.constant 0 : index
    %52 = vector.load %arg11[%c0_25, %c0_26] : memref<1x16xf32, #tpu.memory_space<vmem>>, vector<1x16xf32>
    %53 = vector.broadcast %52 : vector<1x16xf32> to vector<64x16xf32>
    %54 = arith.addf %51, %53 : vector<64x16xf32>
    %55 = vector.shape_cast %54 : vector<64x16xf32> to vector<8x8x16xf32>
    %56 = arith.addf %19, %55 : vector<8x8x16xf32>
    %c0_27 = arith.constant 0 : index
    %c0_28 = arith.constant 0 : index
    %c0_29 = arith.constant 0 : index
    %c0_30 = arith.constant 0 : index
    %57 = vector.load %arg12[%c0_27, %c0_28, %c0_29, %c0_30] : memref<1x8x8x16xf32, #tpu.memory_space<vmem>>, vector<1x8x8x16xf32>
    %58 = vector.shape_cast %57 : vector<1x8x8x16xf32> to vector<8x8x16xf32>
    %59 = vector.shape_cast %56 : vector<8x8x16xf32> to vector<1x8x8x16xf32>
    tpu.vector_store %arg12[%c0_27, %c0_28, %c0_29, %c0_30], %59 {strides = array<i32>} : memref<1x8x8x16xf32, #tpu.memory_space<vmem>>, vector<1x8x8x16xf32>,
    return
  }
  func.func @transform_0(%arg0: i32, %arg1: i32, %arg2: i32) -> (i32, i32, i32, i32) {
    %c0_i32 = arith.constant 0 : i32
    %c0_i32_0 = arith.constant 0 : i32
    return %arg0, %arg1, %arg2, %c0_i32 : i32, i32, i32, i32
  }
  func.func @transform_1(%arg0: i32, %arg1: i32, %arg2: i32) -> (i32, i32, i32) {
    %c0_i32 = arith.constant 0 : i32
    %c0_i32_0 = arith.constant 0 : i32
    return %arg0, %arg1, %c0_i32 : i32, i32, i32
  }
  func.func @transform_2(%arg0: i32, %arg1: i32, %arg2: i32) -> (i32, i32, i32) {
    %c0_i32 = arith.constant 0 : i32
    %c0_i32_0 = arith.constant 0 : i32
    return %arg0, %arg2, %c0_i32 : i32, i32, i32
  }
  func.func @transform_3(%arg0: i32, %arg1: i32, %arg2: i32) -> (i32, i32) {
    %c0_i32 = arith.constant 0 : i32
    %c0_i32_0 = arith.constant 0 : i32
    %c0_i32_1 = arith.constant 0 : i32
    return %c0_i32, %c0_i32_0 : i32, i32
  }
  func.func @transform_4(%arg0: i32, %arg1: i32, %arg2: i32) -> (i32, i32) {
    %c0_i32 = arith.constant 0 : i32
    %c0_i32_0 = arith.constant 0 : i32
    %c0_i32_1 = arith.constant 0 : i32
    return %c0_i32, %c0_i32_0 : i32, i32
  }
  func.func @transform_5(%arg0: i32, %arg1: i32, %arg2: i32) -> (i32, i32) {
    %c0_i32 = arith.constant 0 : i32
    %c0_i32_0 = arith.constant 0 : i32
    %c0_i32_1 = arith.constant 0 : i32
    return %c0_i32, %c0_i32_0 : i32, i32
  }
  func.func @transform_6(%arg0: i32, %arg1: i32, %arg2: i32) -> (i32, i32) {
    %c0_i32 = arith.constant 0 : i32
    %c0_i32_0 = arith.constant 0 : i32
    %c0_i32_1 = arith.constant 0 : i32
    return %c0_i32, %c0_i32_0 : i32, i32
  }
  func.func @transform_7(%arg0: i32, %arg1: i32, %arg2: i32) -> (i32, i32) {
    %c0_i32 = arith.constant 0 : i32
    %c0_i32_0 = arith.constant 0 : i32
    %c0_i32_1 = arith.constant 0 : i32
    return %c0_i32, %c0_i32_0 : i32, i32
  }
  func.func @transform_8(%arg0: i32, %arg1: i32, %arg2: i32) -> (i32, i32) {
    %c0_i32 = arith.constant 0 : i32
    %c0_i32_0 = arith.constant 0 : i32
    %c0_i32_1 = arith.constant 0 : i32
    return %c0_i32, %c0_i32_0 : i32, i32
  }
  func.func @transform_9(%arg0: i32, %arg1: i32, %arg2: i32) -> (i32, i32, i32, i32) {
    %c0_i32 = arith.constant 0 : i32
    %c0_i32_0 = arith.constant 0 : i32
    return %arg0, %arg1, %arg2, %c0_i32 : i32, i32, i32, i32
  }
}

</mosaic_0001>

<llo_original>
// kernel: seqformer_forward.7
$region0: #{seqformer_forward.7}
  #allocation0 [shape = 'u32[]', space=smem, size = 0x4, offset = 0x4, fixed_abs, tag = 'smem constant byte address 0x4 - core index']
  #allocation1 [shape = 'u32[144,128]{1,0:T(1,128)}', space=vmem, size = 0x12000, scoped, tag = 'internal scratch']
  %s0 = inlined_call_operand.vmem [shape: f32[2,8,32], index: 0, kind: input, shape index: {}]
  %s1 = inlined_call_operand.vmem [shape: f32[2,8,1], index: 1, kind: input, shape index: {}]
  %s2 = inlined_call_operand.vmem [shape: f32[32,16], index: 2, kind: input, shape index: {}]
  %s3 = inlined_call_operand.vmem [shape: f32[1,16], index: 3, kind: input, shape index: {}]
  %s4 = inlined_call_operand.vmem [shape: f32[2,8,8], index: 4, kind: output, shape index: {0}]
  %s5 = inlined_call_operand.vmem [shape: f32[2,8,8], index: 5, kind: output, shape index: {1}]
  %6 = xla_tuple %s4, %s5
  %s7 = sld [smem:[#allocation0]]
  $region57: #{seqformer_forward.7} parent=0
    _
  %s9 = ssub.s32 1, %s7
  %s10 = scalar_select 0, %s9, %s7
  loop: start=0, step=1, limit=4
  $region2: #{seqformer_forward.7} parent=0 // loop_pre_header
    _
  $region3: #{seqformer_forward.7} parent=0 // loop_header
    %s12 = sphi 0, %s16
    %p13 = scmp.ge.s32.totalorder %s12, 4
    %s19 = sphi 0, %s31
    %s20 = sphi 0, %s27
    %s21 = sphi 0, %s19
    %s22 = sphi 0, %s20
    %s23 = sphi 0, %s21
    %s24 = sphi 0, %s22
    %s36 = sphi 0, %s38
    %s39 = sphi 0, %s36
    %s40 = sphi 0, %s39
    %s56 = sphi 0, %s40
    %s64 = sphi 0, %s66
    %s67 = sphi 0, %s64
    %s68 = sphi 0, %s67
    %s84 = sphi 0, %s68
    %s88 = sphi 0, %s88
    %s90 = sphi 0, %s88
    %s91 = sphi 0, %s90
    %s105 = sphi 0, %s91
    %s109 = sphi 0, %s109
    %s111 = sphi 0, %s109
    %s112 = sphi 0, %s111
    %s126 = sphi 0, %s112
    %s134 = sphi 0, %s136
    %s137 = sphi 0, %s134
    %s138 = sphi 0, %s137
    %s154 = sphi 0, %s138
    %s162 = sphi 0, %s164
    %s165 = sphi 0, %s162
    %s166 = sphi 0, %s165
    %s182 = sphi 0, %s166
  $region4: #{seqformer_forward.7} parent=0 // loop_header_branch
    %15 = sbr.rel (%p13) target = $region8
  $region5: #{seqformer_forward.7} parent=0 // loop_body
    %s17 = ssub.s32 %s12, 1
    %s18 = ssub.s32 %s12, 2
    %s25 = sadd.s32 1, %s20
    %p26 = scmp.ge.s32.totalorder %s25, 1
    %s27 = scalar_select %p26, 0, %s25
    %s28 = sadd.s32 1, %s19
    %s29 = scalar_select %p26, %s28, %s19
    %p30 = scmp.ge.s32.totalorder %s29, 2
    %s31 = scalar_select %p30, 0, %s29
    %s32 = ssub.s32 %s19, %s31
    %s33 = ssub.s32 %s20, %s27
    %s34 = sor.u32 %s32, %s33
    %p35 = scmp.eq.s32.totalorder %s34, 0
    %s37 = sadd.s32 %s36, 1
    %s38 = scalar_select %p35, %s36, %s37
    %p41 = pneg %p35
    %p42 = scmp.eq.s32.totalorder %s12, 1
    %p43 = por %p41, %p42
    %p44 = scmp.ne.s32.totalorder %s36, %s39
    %p45 = scmp.eq.s32.totalorder %s12, 0
    %p46 = por %p44, %p45
    %p47 = scmp.ne.s32.totalorder %s36, %s39
    %p48 = scmp.eq.s32.totalorder %s17, 1
    %p49 = por %p47, %p48
    %p50 = scmp.ne.s32.totalorder %s39, %s40
    %p51 = scmp.eq.s32.totalorder %s17, 0
    %p52 = por %p50, %p51
    %p53 = scmp.ne.s32.totalorder %s39, %s40
    %p54 = scmp.eq.s32.totalorder %s18, 1
    %p55 = por %p53, %p54
    %p57 = scmp.ne.s32.totalorder %s40, %s56
    %p58 = scmp.eq.s32.totalorder %s18, 0
    %p59 = por %p57, %p58
    %s60 = ssub.s32 %s19, %s31
    %s61 = ssub.s32 %s20, %s27
    %s62 = sor.u32 %s60, %s61
    %p63 = scmp.eq.s32.totalorder %s62, 0
    %s65 = sadd.s32 %s64, 1
    %s66 = scalar_select %p63, %s64, %s65
    %p69 = pneg %p63
    %p70 = scmp.eq.s32.totalorder %s12, 1
    %p71 = por %p69, %p70
    %p72 = scmp.ne.s32.totalorder %s64, %s67
    %p73 = scmp.eq.s32.totalorder %s12, 0
    %p74 = por %p72, %p73
    %p75 = scmp.ne.s32.totalorder %s64, %s67
    %p76 = scmp.eq.s32.totalorder %s17, 1
    %p77 = por %p75, %p76
    %p78 = scmp.ne.s32.totalorder %s67, %s68
    %p79 = scmp.eq.s32.totalorder %s17, 0
    %p80 = por %p78, %p79
    %p81 = scmp.ne.s32.totalorder %s67, %s68
    %p82 = scmp.eq.s32.totalorder %s18, 1
    %p83 = por %p81, %p82
    %p85 = scmp.ne.s32.totalorder %s68, %s84
    %p86 = scmp.eq.s32.totalorder %s18, 0
    %p87 = por %p85, %p86
    %s89 = sadd.s32 %s88, 1
    %p92 = scmp.eq.s32.totalorder %s12, 1
    %p93 = scmp.ne.s32.totalorder %s88, %s90
    %p94 = scmp.eq.s32.totalorder %s12, 0
    %p95 = por %p93, %p94
    %p96 = scmp.ne.s32.totalorder %s88, %s90
    %p97 = scmp.eq.s32.totalorder %s17, 1
    %p98 = por %p96, %p97
    %p99 = scmp.ne.s32.totalorder %s90, %s91
    %p100 = scmp.eq.s32.totalorder %s17, 0
    %p101 = por %p99, %p100
    %p102 = scmp.ne.s32.totalorder %s90, %s91
    %p103 = scmp.eq.s32.totalorder %s18, 1
    %p104 = por %p102, %p103
    %p106 = scmp.ne.s32.totalorder %s91, %s105
    %p107 = scmp.eq.s32.totalorder %s18, 0
    %p108 = por %p106, %p107
    %s110 = sadd.s32 %s109, 1
    %p113 = scmp.eq.s32.totalorder %s12, 1
    %p114 = scmp.ne.s32.totalorder %s109, %s111
    %p115 = scmp.eq.s32.totalorder %s12, 0
    %p116 = por %p114, %p115
    %p117 = scmp.ne.s32.totalorder %s109, %s111
    %p118 = scmp.eq.s32.totalorder %s17, 1
    %p119 = por %p117, %p118
    %p120 = scmp.ne.s32.totalorder %s111, %s112
    %p121 = scmp.eq.s32.totalorder %s17, 0
    %p122 = por %p120, %p121
    %p123 = scmp.ne.s32.totalorder %s111, %s112
    %p124 = scmp.eq.s32.totalorder %s18, 1
    %p125 = por %p123, %p124
    %p127 = scmp.ne.s32.totalorder %s112, %s126
    %p128 = scmp.eq.s32.totalorder %s18, 0
    %p129 = por %p127, %p128
    %s130 = ssub.s32 %s19, %s31
    %s131 = ssub.s32 %s20, %s27
    %s132 = sor.u32 %s130, %s131
    %p133 = scmp.eq.s32.totalorder %s132, 0
    %s135 = sadd.s32 %s134, 1
    %s136 = scalar_select %p133, %s134, %s135
    %p139 = pneg %p133
    %p140 = scmp.eq.s32.totalorder %s12, 1
    %p141 = por %p139, %p140
    %p142 = scmp.ne.s32.totalorder %s134, %s137
    %p143 = scmp.eq.s32.totalorder %s12, 0
    %p144 = por %p142, %p143
    %p145 = scmp.ne.s32.totalorder %s134, %s137
    %p146 = scmp.eq.s32.totalorder %s17, 1
    %p147 = por %p145, %p146
    %p148 = scmp.ne.s32.totalorder %s137, %s138
    %p149 = scmp.eq.s32.totalorder %s17, 0
    %p150 = por %p148, %p149
    %p151 = scmp.ne.s32.totalorder %s137, %s138
    %p152 = scmp.eq.s32.totalorder %s18, 1
    %p153 = por %p151, %p152
    %p155 = scmp.ne.s32.totalorder %s138, %s154
    %p156 = scmp.eq.s32.totalorder %s18, 0
    %p157 = por %p155, %p156
    %s158 = ssub.s32 %s19, %s31
    %s159 = ssub.s32 %s20, %s27
    %s160 = sor.u32 %s158, %s159
    %p161 = scmp.eq.s32.totalorder %s160, 0
    %s163 = sadd.s32 %s162, 1
    %s164 = scalar_select %p161, %s162, %s163
    %p167 = pneg %p161
    %p168 = scmp.eq.s32.totalorder %s12, 1
    %p169 = por %p167, %p168
    %p170 = scmp.ne.s32.totalorder %s162, %s165
    %p171 = scmp.eq.s32.totalorder %s12, 0
    %p172 = por %p170, %p171
    %p173 = scmp.ne.s32.totalorder %s162, %s165
    %p174 = scmp.eq.s32.totalorder %s17, 1
    %p175 = por %p173, %p174
    %p176 = scmp.ne.s32.totalorder %s165, %s166
    %p177 = scmp.eq.s32.totalorder %s17, 0
    %p178 = por %p176, %p177
    %p179 = scmp.ne.s32.totalorder %s165, %s166
    %p180 = scmp.eq.s32.totalorder %s18, 1
    %p181 = por %p179, %p180
    %p183 = scmp.ne.s32.totalorder %s166, %s182
    %p184 = scmp.eq.s32.totalorder %s18, 0
    %p185 = por %p183, %p184
    %p186 = scmp.le.s32.totalorder 1, %s12
    %p187 = scmp.lt.s32.totalorder %s12, 3
    %p188 = pnand %p186, %p187
    %p189 = pneg %p188
    // Predicated region
    $region9: #{seqformer_forward.7} parent=5 // pred_check
      _
    $region10: #{seqformer_forward.7} parent=5 // pred_check_branch
      %191 = sbr.rel (%p188) target = $region12
    $region11: #{seqformer_forward.7} parent=5 // pred_region
      %s192 = ssub.s32 %s12, 1
      // Predicated region
      $region13: #{seqformer_forward.7} parent=11 // pred_check
        %p193 = pneg %p101
      $region14: #{seqformer_forward.7} parent=11 // pred_check_branch
        %195 = sbr.rel (%p193) target = $region16
      $region15: #{seqformer_forward.7} parent=11 // pred_region
        _
      $region16: #{seqformer_forward.7} parent=11 // pred_fallthru
        _
      // Predicated region
      $region17: #{seqformer_forward.7} parent=11 // pred_check
        %p196 = pneg %p122
      $region18: #{seqformer_forward.7} parent=11 // pred_check_branch
        %198 = sbr.rel (%p196) target = $region20
      $region19: #{seqformer_forward.7} parent=11 // pred_region
        _
      $region20: #{seqformer_forward.7} parent=11 // pred_fallthru
        _
    $region12: #{seqformer_forward.7} parent=5 // pred_fallthru
      _
    %p199 = scmp.lt.s32.totalorder %s12, 2
    // Predicated region
    $region21: #{seqformer_forward.7} parent=5 // pred_check
      %p200 = pneg %p199
    $region22: #{seqformer_forward.7} parent=5 // pred_check_branch
      %202 = sbr.rel (%p200) target = $region24
    $region23: #{seqformer_forward.7} parent=5 // pred_region
      // Predicated region
      $region25: #{seqformer_forward.7} parent=23 // pred_check
        %p203 = pneg %p46
      $region26: #{seqformer_forward.7} parent=23 // pred_check_branch
        %205 = sbr.rel (%p203) target = $region28
      $region27: #{seqformer_forward.7} parent=23 // pred_region
        %p206 = scmp.lt.s32.totalorder %s19, 1
        %s207 = scalar_select %p206, %s19, 1
        %p208 = scmp.lt.s32.totalorder %s20, 0
        %s209 = scalar_select %p208, %s20, 0
        %s210 = sadd.s32 %s209, %s207
        %s211 = smul.addr %s210, 8
        %s212 = scalar_lea.vmem %s0, %s211
      $region28: #{seqformer_forward.7} parent=23 // pred_fallthru
        _
      // Predicated region
      $region29: #{seqformer_forward.7} parent=23 // pred_check
        %p213 = pneg %p74
      $region30: #{seqformer_forward.7} parent=23 // pred_check_branch
        %215 = sbr.rel (%p213) target = $region32
      $region31: #{seqformer_forward.7} parent=23 // pred_region
        %p216 = scmp.lt.s32.totalorder %s19, 1
        %s217 = scalar_select %p216, %s19, 1
        %p218 = scmp.lt.s32.totalorder %s20, 0
        %s219 = scalar_select %p218, %s20, 0
        %s220 = sadd.s32 %s219, %s217
        %s221 = smul.addr %s220, 8
        %s222 = scalar_lea.vmem %s1, %s221
      $region32: #{seqformer_forward.7} parent=23 // pred_fallthru
        _
    $region24: #{seqformer_forward.7} parent=5 // pred_fallthru
      _
    %p223 = scmp.le.s32.totalorder 1, %s12
    %p224 = scmp.lt.s32.totalorder %s12, 3
    %p225 = pnand %p223, %p224
    %p226 = pneg %p225
    // Predicated region
    $region33: #{seqformer_forward.7} parent=5 // pred_check
      _
    $region34: #{seqformer_forward.7} parent=5 // pred_check_branch
      %228 = sbr.rel (%p225) target = $region36
    $region35: #{seqformer_forward.7} parent=5 // pred_region
      %s229 = ssub.s32 %s12, 1
      %p230 = scmp.lt.s32.totalorder %s21, 1
      %s231 = scalar_select %p230, %s21, 1
      %p232 = scmp.lt.s32.totalorder %s22, 0
      %s233 = scalar_select %p232, %s22, 0
      %s234 = sadd.s32 %s233, %s231
      %s235 = smul.addr %s234, 8
      %s236 = scalar_lea.vmem %s0, %s235
      %p237 = pneg %p52
      %p238 = pneg %p49
      %p239 = scmp.lt.s32.totalorder %s21, 1
      %s240 = scalar_select %p239, %s21, 1
      %p241 = scmp.lt.s32.totalorder %s22, 0
      %s242 = scalar_select %p241, %s22, 0
      %s243 = sadd.s32 %s242, %s240
      %s244 = smul.addr %s243, 8
      %s245 = scalar_lea.vmem %s1, %s244
      %p246 = pneg %p80
      %p247 = pneg %p77
      %p248 = pneg %p101
      %p249 = pneg %p98
      %p250 = pneg %p122
      %p251 = pneg %p119
      %p252 = pneg %p150
      %p253 = pneg %p147
      %p254 = scmp.lt.s32.totalorder %s21, 1
      %s255 = scalar_select %p254, %s21, 1
      %p256 = scmp.lt.s32.totalorder %s22, 0
      %s257 = scalar_select %p256, %s22, 0
      %s258 = sadd.s32 %s257, %s255
      %s259 = smul.addr %s258, 8
      %s260 = scalar_lea.vmem %s4, %s259
      %p261 = pneg %p178
      %p262 = pneg %p175
      %p263 = scmp.lt.s32.totalorder %s21, 1
      %s264 = scalar_select %p263, %s21, 1
      %p265 = scmp.lt.s32.totalorder %s22, 0
      %s266 = scalar_select %p265, %s22, 0
      %s267 = sadd.s32 %s266, %s264
      %s268 = smul.addr %s267, 8
      %s269 = scalar_lea.vmem %s5, %s268
      %p270 = scmp.lt.s32.totalorder %s21, 1
      %s271 = scalar_select %p270, %s21, 1
      %p272 = scmp.lt.s32.totalorder %s22, 0
      %s273 = scalar_select %p272, %s22, 0
      %s274 = sadd.s32 %s273, %s271
      %s275 = smul.addr %s274, 8
      %s276 = scalar_lea.vmem %s0, %s275
      %p277 = scmp.lt.s32.totalorder %s21, 1
      %s278 = scalar_select %p277, %s21, 1
      %p279 = scmp.lt.s32.totalorder %s22, 0
      %s280 = scalar_select %p279, %s22, 0
      %s281 = sadd.s32 %s280, %s278
      %s282 = smul.addr %s281, 8
      %s283 = scalar_lea.vmem %s1, %s282
      %p284 = scmp.lt.s32.totalorder %s21, 1
      %s285 = scalar_select %p284, %s21, 1
      %p286 = scmp.lt.s32.totalorder %s22, 0
      %s287 = scalar_select %p286, %s22, 0
      %s288 = sadd.s32 %s287, %s285
      %s289 = smul.addr %s288, 8
      %s290 = scalar_lea.vmem %s4, %s289
      %p291 = scmp.lt.s32.totalorder %s21, 1
      %s292 = scalar_select %p291, %s21, 1
      %p293 = scmp.lt.s32.totalorder %s22, 0
      %s294 = scalar_select %p293, %s22, 0
      %s295 = sadd.s32 %s294, %s292
      %s296 = smul.addr %s295, 8
      %s297 = scalar_lea.vmem %s5, %s296
      %v299 = vld [vmem:[%s276] sm:$0xff]
      %vm300 = vcmask 261120
      %v301 = vsel %vm300, %v299, 0.0
      %302 = vadd.xlane.f32.xlu0 %v301
      %v303 = vpop.xlane.xlu0 %302
      %v304 = vrcp.pop 32.0
      %v305 = vmul.f32 %v303, %v304
      %v306 = vsub.f32 %v299, %v305
      %v307 = vmul.f32 %v306, %v306
      %v308 = vsel %vm300, %v307, 0.0
      %309 = vadd.xlane.f32.xlu0 %v308
      %v310 = vpop.xlane.xlu0 %309
      %v311 = vmul.f32 %v310, %v304
      %v312 = vadd.f32 %v311, 1e-05
      %v313 = vrsqrt.pop %v312
      %v314 = vmul.f32 %v306, %v313
      %v315 = vld [vmem:[%s2] sm:$0xff]
      %v316 = vld [vmem:[%s2 + $0x8] sm:$0xff]
      %v317 = vld [vmem:[%s2 + $0x10] sm:$0xff]
      %v318 = vld [vmem:[%s2 + $0x18] sm:$0xff]
      %v319 = vpack.c.bf16 %v314, %v314
      %v320 = vpack.c.bf16 %v316, %v315
      %v321 = vpack.c.bf16 %v318, %v317
      %v322 = vld [vmem:[%s3] sm:$0x1]
      %v324 = vlaneseq
      %v325 = vshrl.u32 %v324, 7
      %v326 = vsub.s32 0, %v325
      %v327 = vrot.slane %v322, %v326
      %v330 = vsel %vm300, %v319, 0
      %332 = vmatprep.subr.bf16.mxu0 0
      %333 = vmatpush1.bf16.msra.mxu0 %v320
      %334 = vmatprep.subr.bf16.mxu0 0
      %335 = vmatpush1.bf16.msra.mxu0 %v321
      %336 = vmatprep.subr.bf16.mxu0 0
      %337 = vmatpush1.bf16.msra.mxu0 0
      %338 = vmatprep.subr.bf16.mxu0 0
      %339 = vmatpush1.bf16.msra.mxu0 0
      %340 = vmatprep.subr.bf16.mxu0 0
      %341 = vmatpush1.bf16.msra.mxu0 0
      %342 = vmatprep.subr.bf16.mxu0 0
      %343 = vmatpush1.bf16.msra.mxu0 0
      %344 = vmatprep.subr.bf16.mxu0 0
      %345 = vmatpush1.bf16.msra.mxu0 0
      %346 = vmatprep.subr.bf16.mxu0 0
      %347 = vmatpush1.bf16.msra.mxu0 0
      %348 = vmatprep.subr.bf16.mxu0 0
      %349 = vmatpush1.bf16.msra.mxu0 0
      %350 = vmatprep.subr.bf16.mxu0 0
      %351 = vmatpush1.bf16.msra.mxu0 0
      %352 = vmatprep.subr.bf16.mxu0 0
      %353 = vmatpush1.bf16.msra.mxu0 0
      %354 = vmatprep.subr.bf16.mxu0 0
      %355 = vmatpush1.bf16.msra.mxu0 0
      %356 = vmatprep.subr.bf16.mxu0 0
      %357 = vmatpush1.bf16.msra.mxu0 0
      %358 = vmatprep.subr.bf16.mxu0 0
      %359 = vmatpush1.bf16.msra.mxu0 0
      %360 = vmatprep.subr.bf16.mxu0 0
      %361 = vmatpush1.bf16.msra.mxu0 0
      %362 = vmatprep.subr.bf16.mxu0 0
      %363 = vmatpush1.bf16.msra.mxu0 0
      %364 = vmatprep.mubr.bf16.mxu0 0
      %365 = vmatmul.mubr.bf16.gmra.mrb[0].mxu0 %v330
      %v366 = vpop.f32.mrb[0].mxu0
      %v367 = vadd.f32 %v327, %v366
      %v368 = vpop.f32.mrb[0].mxu0
      %v369 = vpop.f32.mrb[0].mxu0
      %v370 = vpop.f32.mrb[0].mxu0
      %371 = vdwg.mxu0
      %v372 = vld [vmem:[%s283] sm:$0xff]
      %374 = vset.pattern.permute.xlu0 0
      %375 = vperm.xlu0 %374, %v372
      %v376 = vpop.permute.xlu0 %375
      %v378 = vmul.f32 %v376, %v367
      %vm379 = vcmask 64512
      %380 = vst.msk [vmem:[%s290] sm:$0xff] %vm379, %v378
      %382 = vrot.lane.b32.xlu0 %v378, 120
      %v383 = vpop.permute.xlu0 %382
      %385 = vst.msk [vmem:[%s297] sm:$0xff] %vm379, %v383
      %p386 = scmp.lt.s32.totalorder %s21, 1
      %s387 = scalar_select %p386, %s21, 1
      %p388 = scmp.lt.s32.totalorder %s22, 0
      %s389 = scalar_select %p388, %s22, 0
      %s390 = sadd.s32 %s389, %s387
      %s391 = smul.addr %s390, 8
      %s392 = scalar_lea.vmem %s4, %s391
      %p393 = scmp.lt.s32.totalorder %s21, 1
      %s394 = scalar_select %p393, %s21, 1
      %p395 = scmp.lt.s32.totalorder %s22, 0
      %s396 = scalar_select %p395, %s22, 0
      %s397 = sadd.s32 %s396, %s394
      %s398 = smul.addr %s397, 8
      %s399 = scalar_lea.vmem %s5, %s398
      // Predicated region
      $region37: #{seqformer_forward.7} parent=35 // pred_check
        %p400 = pneg %p147
      $region38: #{seqformer_forward.7} parent=35 // pred_check_branch
        %402 = sbr.rel (%p400) target = $region40
      $region39: #{seqformer_forward.7} parent=35 // pred_region
        _
      $region40: #{seqformer_forward.7} parent=35 // pred_fallthru
        _
      // Predicated region
      $region41: #{seqformer_forward.7} parent=35 // pred_check
        %p403 = pneg %p175
      $region42: #{seqformer_forward.7} parent=35 // pred_check_branch
        %405 = sbr.rel (%p403) target = $region44
      $region43: #{seqformer_forward.7} parent=35 // pred_region
        _
      $region44: #{seqformer_forward.7} parent=35 // pred_fallthru
        _
    $region36: #{seqformer_forward.7} parent=5 // pred_fallthru
      _
    %p406 = scmp.le.s32.totalorder 2, %s12
    // Predicated region
    $region45: #{seqformer_forward.7} parent=5 // pred_check
      %p407 = pneg %p406
    $region46: #{seqformer_forward.7} parent=5 // pred_check_branch
      %409 = sbr.rel (%p407) target = $region48
    $region47: #{seqformer_forward.7} parent=5 // pred_region
      %s410 = ssub.s32 %s12, 2
      // Predicated region
      $region49: #{seqformer_forward.7} parent=47 // pred_check
        %p411 = pneg %p153
      $region50: #{seqformer_forward.7} parent=47 // pred_check_branch
        %413 = sbr.rel (%p411) target = $region52
      $region51: #{seqformer_forward.7} parent=47 // pred_region
        %p414 = scmp.lt.s32.totalorder %s23, 1
        %s415 = scalar_select %p414, %s23, 1
        %p416 = scmp.lt.s32.totalorder %s24, 0
        %s417 = scalar_select %p416, %s24, 0
        %s418 = sadd.s32 %s417, %s415
        %s419 = smul.addr %s418, 8
        %s420 = scalar_lea.vmem %s4, %s419
      $region52: #{seqformer_forward.7} parent=47 // pred_fallthru
        _
      // Predicated region
      $region53: #{seqformer_forward.7} parent=47 // pred_check
        %p421 = pneg %p181
      $region54: #{seqformer_forward.7} parent=47 // pred_check_branch
        %423 = sbr.rel (%p421) target = $region56
      $region55: #{seqformer_forward.7} parent=47 // pred_region
        %p424 = scmp.lt.s32.totalorder %s23, 1
        %s425 = scalar_select %p424, %s23, 1
        %p426 = scmp.lt.s32.totalorder %s24, 0
        %s427 = scalar_select %p426, %s24, 0
        %s428 = sadd.s32 %s427, %s425
        %s429 = smul.addr %s428, 8
        %s430 = scalar_lea.vmem %s5, %s429
      $region56: #{seqformer_forward.7} parent=47 // pred_fallthru
        _
    $region48: #{seqformer_forward.7} parent=5 // pred_fallthru
      _
  $region6: #{seqformer_forward.7} parent=0 // loop_footer
    %s16 = sadd.s32 1, %s12
  $region7: #{seqformer_forward.7} parent=0 // loop_footer_branch
    %11 = sbr.rel target = $region3
  $region8: #{seqformer_forward.7} parent=0 // loop_exit
    _

// kernel: seqformer_forward.6
$region0: #{seqformer_forward.6}
  #allocation0 [shape = 'u32[]', space=smem, size = 0x4, offset = 0x4, fixed_abs, tag = 'smem constant byte address 0x4 - core index']
  #allocation1 [shape = 'u32[144,128]{1,0:T(1,128)}', space=vmem, size = 0x12000, scoped, tag = 'internal scratch']
  %s0 = inlined_call_operand.vmem [shape: f32[2,8,8,16], index: 0, kind: input, shape index: {}]
  %s1 = inlined_call_operand.vmem [shape: f32[2,8,8], index: 1, kind: input, shape index: {}]
  %s2 = inlined_call_operand.vmem [shape: f32[2,8,32], index: 2, kind: input, shape index: {}, may-alias: {2,9}]
  %s3 = inlined_call_operand.vmem [shape: f32[16,64], index: 3, kind: input, shape index: {}]
  %s4 = inlined_call_operand.vmem [shape: f32[1,64], index: 4, kind: input, shape index: {}]
  %s5 = inlined_call_operand.vmem [shape: f32[32,32], index: 5, kind: input, shape index: {}]
  %s6 = inlined_call_operand.vmem [shape: f32[1,32], index: 6, kind: input, shape index: {}, may-alias: {6,8}]
  %s7 = inlined_call_operand.vmem [shape: f32[32,32], index: 7, kind: input, shape index: {}]
  %s8 = inlined_call_operand.vmem [shape: f32[1,32], index: 8, kind: input, shape index: {}, may-alias: {6,8}]
  %s9 = inlined_call_operand.vmem [shape: f32[2,8,32], index: 9, kind: output, shape index: {}, may-alias: {2,9}]
  %s10 = sld [smem:[#allocation0]]
  $region73: #{seqformer_forward.6} parent=0
    _
  %s12 = ssub.s32 1, %s10
  %s13 = scalar_select 0, %s12, %s10
  loop: start=0, step=1, limit=4
  $region2: #{seqformer_forward.6} parent=0 // loop_pre_header
    _
  $region3: #{seqformer_forward.6} parent=0 // loop_header
    %s15 = sphi 0, %s19
    %p16 = scmp.ge.s32.totalorder %s15, 4
    %s22 = sphi 0, %s34
    %s23 = sphi 0, %s30
    %s24 = sphi 0, %s22
    %s25 = sphi 0, %s23
    %s26 = sphi 0, %s24
    %s27 = sphi 0, %s25
    %s39 = sphi 0, %s41
    %s42 = sphi 0, %s39
    %s43 = sphi 0, %s42
    %s59 = sphi 0, %s43
    %s67 = sphi 0, %s69
    %s70 = sphi 0, %s67
    %s71 = sphi 0, %s70
    %s87 = sphi 0, %s71
    %s93 = sphi 0, %s95
    %s96 = sphi 0, %s93
    %s97 = sphi 0, %s96
    %s113 = sphi 0, %s97
    %s117 = sphi 0, %s117
    %s119 = sphi 0, %s117
    %s120 = sphi 0, %s119
    %s134 = sphi 0, %s120
    %s138 = sphi 0, %s138
    %s140 = sphi 0, %s138
    %s141 = sphi 0, %s140
    %s155 = sphi 0, %s141
    %s159 = sphi 0, %s159
    %s161 = sphi 0, %s159
    %s162 = sphi 0, %s161
    %s176 = sphi 0, %s162
    %s180 = sphi 0, %s180
    %s182 = sphi 0, %s180
    %s183 = sphi 0, %s182
    %s197 = sphi 0, %s183
    %s201 = sphi 0, %s201
    %s203 = sphi 0, %s201
    %s204 = sphi 0, %s203
    %s218 = sphi 0, %s204
    %s222 = sphi 0, %s222
    %s224 = sphi 0, %s222
    %s225 = sphi 0, %s224
    %s239 = sphi 0, %s225
    %s245 = sphi 0, %s247
    %s248 = sphi 0, %s245
    %s249 = sphi 0, %s248
    %s265 = sphi 0, %s249
  $region4: #{seqformer_forward.6} parent=0 // loop_header_branch
    %18 = sbr.rel (%p16) target = $region8
  $region5: #{seqformer_forward.6} parent=0 // loop_body
    %s20 = ssub.s32 %s15, 1
    %s21 = ssub.s32 %s15, 2
    %s28 = sadd.s32 1, %s23
    %p29 = scmp.ge.s32.totalorder %s28, 1
    %s30 = scalar_select %p29, 0, %s28
    %s31 = sadd.s32 1, %s22
    %s32 = scalar_select %p29, %s31, %s22
    %p33 = scmp.ge.s32.totalorder %s32, 2
    %s34 = scalar_select %p33, 0, %s32
    %s35 = ssub.s32 %s22, %s34
    %s36 = ssub.s32 %s23, %s30
    %s37 = sor.u32 %s35, %s36
    %p38 = scmp.eq.s32.totalorder %s37, 0
    %s40 = sadd.s32 %s39, 1
    %s41 = scalar_select %p38, %s39, %s40
    %p44 = pneg %p38
    %p45 = scmp.eq.s32.totalorder %s15, 1
    %p46 = por %p44, %p45
    %p47 = scmp.ne.s32.totalorder %s39, %s42
    %p48 = scmp.eq.s32.totalorder %s15, 0
    %p49 = por %p47, %p48
    %p50 = scmp.ne.s32.totalorder %s39, %s42
    %p51 = scmp.eq.s32.totalorder %s20, 1
    %p52 = por %p50, %p51
    %p53 = scmp.ne.s32.totalorder %s42, %s43
    %p54 = scmp.eq.s32.totalorder %s20, 0
    %p55 = por %p53, %p54
    %p56 = scmp.ne.s32.totalorder %s42, %s43
    %p57 = scmp.eq.s32.totalorder %s21, 1
    %p58 = por %p56, %p57
    %p60 = scmp.ne.s32.totalorder %s43, %s59
    %p61 = scmp.eq.s32.totalorder %s21, 0
    %p62 = por %p60, %p61
    %s63 = ssub.s32 %s22, %s34
    %s64 = ssub.s32 %s23, %s30
    %s65 = sor.u32 %s63, %s64
    %p66 = scmp.eq.s32.totalorder %s65, 0
    %s68 = sadd.s32 %s67, 1
    %s69 = scalar_select %p66, %s67, %s68
    %p72 = pneg %p66
    %p73 = scmp.eq.s32.totalorder %s15, 1
    %p74 = por %p72, %p73
    %p75 = scmp.ne.s32.totalorder %s67, %s70
    %p76 = scmp.eq.s32.totalorder %s15, 0
    %p77 = por %p75, %p76
    %p78 = scmp.ne.s32.totalorder %s67, %s70
    %p79 = scmp.eq.s32.totalorder %s20, 1
    %p80 = por %p78, %p79
    %p81 = scmp.ne.s32.totalorder %s70, %s71
    %p82 = scmp.eq.s32.totalorder %s20, 0
    %p83 = por %p81, %p82
    %p84 = scmp.ne.s32.totalorder %s70, %s71
    %p85 = scmp.eq.s32.totalorder %s21, 1
    %p86 = por %p84, %p85
    %p88 = scmp.ne.s32.totalorder %s71, %s87
    %p89 = scmp.eq.s32.totalorder %s21, 0
    %p90 = por %p88, %p89
    %s91 = ssub.s32 %s22, %s34
    %p92 = scmp.eq.s32.totalorder %s91, 0
    %s94 = sadd.s32 %s93, 1
    %s95 = scalar_select %p92, %s93, %s94
    %p98 = pneg %p92
    %p99 = scmp.eq.s32.totalorder %s15, 1
    %p100 = por %p98, %p99
    %p101 = scmp.ne.s32.totalorder %s93, %s96
    %p102 = scmp.eq.s32.totalorder %s15, 0
    %p103 = por %p101, %p102
    %p104 = scmp.ne.s32.totalorder %s93, %s96
    %p105 = scmp.eq.s32.totalorder %s20, 1
    %p106 = por %p104, %p105
    %p107 = scmp.ne.s32.totalorder %s96, %s97
    %p108 = scmp.eq.s32.totalorder %s20, 0
    %p109 = por %p107, %p108
    %p110 = scmp.ne.s32.totalorder %s96, %s97
    %p111 = scmp.eq.s32.totalorder %s21, 1
    %p112 = por %p110, %p111
    %p114 = scmp.ne.s32.totalorder %s97, %s113
    %p115 = scmp.eq.s32.totalorder %s21, 0
    %p116 = por %p114, %p115
    %s118 = sadd.s32 %s117, 1
    %p121 = scmp.eq.s32.totalorder %s15, 1
    %p122 = scmp.ne.s32.totalorder %s117, %s119
    %p123 = scmp.eq.s32.totalorder %s15, 0
    %p124 = por %p122, %p123
    %p125 = scmp.ne.s32.totalorder %s117, %s119
    %p126 = scmp.eq.s32.totalorder %s20, 1
    %p127 = por %p125, %p126
    %p128 = scmp.ne.s32.totalorder %s119, %s120
    %p129 = scmp.eq.s32.totalorder %s20, 0
    %p130 = por %p128, %p129
    %p131 = scmp.ne.s32.totalorder %s119, %s120
    %p132 = scmp.eq.s32.totalorder %s21, 1
    %p133 = por %p131, %p132
    %p135 = scmp.ne.s32.totalorder %s120, %s134
    %p136 = scmp.eq.s32.totalorder %s21, 0
    %p137 = por %p135, %p136
    %s139 = sadd.s32 %s138, 1
    %p142 = scmp.eq.s32.totalorder %s15, 1
    %p143 = scmp.ne.s32.totalorder %s138, %s140
    %p144 = scmp.eq.s32.totalorder %s15, 0
    %p145 = por %p143, %p144
    %p146 = scmp.ne.s32.totalorder %s138, %s140
    %p147 = scmp.eq.s32.totalorder %s20, 1
    %p148 = por %p146, %p147
    %p149 = scmp.ne.s32.totalorder %s140, %s141
    %p150 = scmp.eq.s32.totalorder %s20, 0
    %p151 = por %p149, %p150
    %p152 = scmp.ne.s32.totalorder %s140, %s141
    %p153 = scmp.eq.s32.totalorder %s21, 1
    %p154 = por %p152, %p153
    %p156 = scmp.ne.s32.totalorder %s141, %s155
    %p157 = scmp.eq.s32.totalorder %s21, 0
    %p158 = por %p156, %p157
    %s160 = sadd.s32 %s159, 1
    %p163 = scmp.eq.s32.totalorder %s15, 1
    %p164 = scmp.ne.s32.totalorder %s159, %s161
    %p165 = scmp.eq.s32.totalorder %s15, 0
    %p166 = por %p164, %p165
    %p167 = scmp.ne.s32.totalorder %s159, %s161
    %p168 = scmp.eq.s32.totalorder %s20, 1
    %p169 = por %p167, %p168
    %p170 = scmp.ne.s32.totalorder %s161, %s162
    %p171 = scmp.eq.s32.totalorder %s20, 0
    %p172 = por %p170, %p171
    %p173 = scmp.ne.s32.totalorder %s161, %s162
    %p174 = scmp.eq.s32.totalorder %s21, 1
    %p175 = por %p173, %p174
    %p177 = scmp.ne.s32.totalorder %s162, %s176
    %p178 = scmp.eq.s32.totalorder %s21, 0
    %p179 = por %p177, %p178
    %s181 = sadd.s32 %s180, 1
    %p184 = scmp.eq.s32.totalorder %s15, 1
    %p185 = scmp.ne.s32.totalorder %s180, %s182
    %p186 = scmp.eq.s32.totalorder %s15, 0
    %p187 = por %p185, %p186
    %p188 = scmp.ne.s32.totalorder %s180, %s182
    %p189 = scmp.eq.s32.totalorder %s20, 1
    %p190 = por %p188, %p189
    %p191 = scmp.ne.s32.totalorder %s182, %s183
    %p192 = scmp.eq.s32.totalorder %s20, 0
    %p193 = por %p191, %p192
    %p194 = scmp.ne.s32.totalorder %s182, %s183
    %p195 = scmp.eq.s32.totalorder %s21, 1
    %p196 = por %p194, %p195
    %p198 = scmp.ne.s32.totalorder %s183, %s197
    %p199 = scmp.eq.s32.totalorder %s21, 0
    %p200 = por %p198, %p199
    %s202 = sadd.s32 %s201, 1
    %p205 = scmp.eq.s32.totalorder %s15, 1
    %p206 = scmp.ne.s32.totalorder %s201, %s203
    %p207 = scmp.eq.s32.totalorder %s15, 0
    %p208 = por %p206, %p207
    %p209 = scmp.ne.s32.totalorder %s201, %s203
    %p210 = scmp.eq.s32.totalorder %s20, 1
    %p211 = por %p209, %p210
    %p212 = scmp.ne.s32.totalorder %s203, %s204
    %p213 = scmp.eq.s32.totalorder %s20, 0
    %p214 = por %p212, %p213
    %p215 = scmp.ne.s32.totalorder %s203, %s204
    %p216 = scmp.eq.s32.totalorder %s21, 1
    %p217 = por %p215, %p216
    %p219 = scmp.ne.s32.totalorder %s204, %s218
    %p220 = scmp.eq.s32.totalorder %s21, 0
    %p221 = por %p219, %p220
    %s223 = sadd.s32 %s222, 1
    %p226 = scmp.eq.s32.totalorder %s15, 1
    %p227 = scmp.ne.s32.totalorder %s222, %s224
    %p228 = scmp.eq.s32.totalorder %s15, 0
    %p229 = por %p227, %p228
    %p230 = scmp.ne.s32.totalorder %s222, %s224
    %p231 = scmp.eq.s32.totalorder %s20, 1
    %p232 = por %p230, %p231
    %p233 = scmp.ne.s32.totalorder %s224, %s225
    %p234 = scmp.eq.s32.totalorder %s20, 0
    %p235 = por %p233, %p234
    %p236 = scmp.ne.s32.totalorder %s224, %s225
    %p237 = scmp.eq.s32.totalorder %s21, 1
    %p238 = por %p236, %p237
    %p240 = scmp.ne.s32.totalorder %s225, %s239
    %p241 = scmp.eq.s32.totalorder %s21, 0
    %p242 = por %p240, %p241
    %s243 = ssub.s32 %s22, %s34
    %p244 = scmp.eq.s32.totalorder %s243, 0
    %s246 = sadd.s32 %s245, 1
    %s247 = scalar_select %p244, %s245, %s246
    %p250 = pneg %p244
    %p251 = scmp.eq.s32.totalorder %s15, 1
    %p252 = por %p250, %p251
    %p253 = scmp.ne.s32.totalorder %s245, %s248
    %p254 = scmp.eq.s32.totalorder %s15, 0
    %p255 = por %p253, %p254
    %p256 = scmp.ne.s32.totalorder %s245, %s248
    %p257 = scmp.eq.s32.totalorder %s20, 1
    %p258 = por %p256, %p257
    %p259 = scmp.ne.s32.totalorder %s248, %s249
    %p260 = scmp.eq.s32.totalorder %s20, 0
    %p261 = por %p259, %p260
    %p262 = scmp.ne.s32.totalorder %s248, %s249
    %p263 = scmp.eq.s32.totalorder %s21, 1
    %p264 = por %p262, %p263
    %p266 = scmp.ne.s32.totalorder %s249, %s265
    %p267 = scmp.eq.s32.totalorder %s21, 0
    %p268 = por %p266, %p267
    %p269 = scmp.le.s32.totalorder 1, %s15
    %p270 = scmp.lt.s32.totalorder %s15, 3
    %p271 = pnand %p269, %p270
    %p272 = pneg %p271
    // Predicated region
    $region9: #{seqformer_forward.6} parent=5 // pred_check
      _
    $region10: #{seqformer_forward.6} parent=5 // pred_check_branch
      %274 = sbr.rel (%p271) target = $region12
    $region11: #{seqformer_forward.6} parent=5 // pred_region
      %s275 = ssub.s32 %s15, 1
      // Predicated region
      $region13: #{seqformer_forward.6} parent=11 // pred_check
        %p276 = pneg %p130
      $region14: #{seqformer_forward.6} parent=11 // pred_check_branch
        %278 = sbr.rel (%p276) target = $region16
      $region15: #{seqformer_forward.6} parent=11 // pred_region
        _
      $region16: #{seqformer_forward.6} parent=11 // pred_fallthru
        _
      // Predicated region
      $region17: #{seqformer_forward.6} parent=11 // pred_check
        %p279 = pneg %p151
      $region18: #{seqformer_forward.6} parent=11 // pred_check_branch
        %281 = sbr.rel (%p279) target = $region20
      $region19: #{seqformer_forward.6} parent=11 // pred_region
        _
      $region20: #{seqformer_forward.6} parent=11 // pred_fallthru
        _
      // Predicated region
      $region21: #{seqformer_forward.6} parent=11 // pred_check
        %p282 = pneg %p172
      $region22: #{seqformer_forward.6} parent=11 // pred_check_branch
        %284 = sbr.rel (%p282) target = $region24
      $region23: #{seqformer_forward.6} parent=11 // pred_region
        _
      $region24: #{seqformer_forward.6} parent=11 // pred_fallthru
        _
      // Predicated region
      $region25: #{seqformer_forward.6} parent=11 // pred_check
        %p285 = pneg %p193
      $region26: #{seqformer_forward.6} parent=11 // pred_check_branch
        %287 = sbr.rel (%p285) target = $region28
      $region27: #{seqformer_forward.6} parent=11 // pred_region
        _
      $region28: #{seqformer_forward.6} parent=11 // pred_fallthru
        _
      // Predicated region
      $region29: #{seqformer_forward.6} parent=11 // pred_check
        %p288 = pneg %p214
      $region30: #{seqformer_forward.6} parent=11 // pred_check_branch
        %290 = sbr.rel (%p288) target = $region32
      $region31: #{seqformer_forward.6} parent=11 // pred_region
        _
      $region32: #{seqformer_forward.6} parent=11 // pred_fallthru
        _
      // Predicated region
      $region33: #{seqformer_forward.6} parent=11 // pred_check
        %p291 = pneg %p235
      $region34: #{seqformer_forward.6} parent=11 // pred_check_branch
        %293 = sbr.rel (%p291) target = $region36
      $region35: #{seqformer_forward.6} parent=11 // pred_region
        _
      $region36: #{seqformer_forward.6} parent=11 // pred_fallthru
        _
    $region12: #{seqformer_forward.6} parent=5 // pred_fallthru
      _
    %p294 = scmp.lt.s32.totalorder %s15, 2
    // Predicated region
    $region37: #{seqformer_forward.6} parent=5 // pred_check
      %p295 = pneg %p294
    $region38: #{seqformer_forward.6} parent=5 // pred_check_branch
      %297 = sbr.rel (%p295) target = $region40
    $region39: #{seqformer_forward.6} parent=5 // pred_region
      // Predicated region
      $region41: #{seqformer_forward.6} parent=39 // pred_check
        %p298 = pneg %p49
      $region42: #{seqformer_forward.6} parent=39 // pred_check_branch
        %300 = sbr.rel (%p298) target = $region44
      $region43: #{seqformer_forward.6} parent=39 // pred_region
        %s301 = smul.u32 8, %s23
        %p302 = scmp.lt.s32.totalorder %s22, 1
        %s303 = scalar_select %p302, %s22, 1
        %p304 = scmp.lt.s32.totalorder %s301, 7
        %s305 = scalar_select %p304, %s301, 7
        %s306 = smul.addr %s303, 8
        %s307 = sadd.s32 %s305, %s306
        %s308 = smul.addr %s307, 8
        %s309 = scalar_lea.vmem %s0, %s308
        %s310 = smul.u32 8, %s23
      $region44: #{seqformer_forward.6} parent=39 // pred_fallthru
        _
      // Predicated region
      $region45: #{seqformer_forward.6} parent=39 // pred_check
        %p311 = pneg %p77
      $region46: #{seqformer_forward.6} parent=39 // pred_check_branch
        %313 = sbr.rel (%p311) target = $region48
      $region47: #{seqformer_forward.6} parent=39 // pred_region
        %p314 = scmp.lt.s32.totalorder %s22, 1
        %s315 = scalar_select %p314, %s22, 1
        %p316 = scmp.lt.s32.totalorder %s23, 0
        %s317 = scalar_select %p316, %s23, 0
        %s318 = sadd.s32 %s317, %s315
        %s319 = smul.addr %s318, 8
        %s320 = scalar_lea.vmem %s1, %s319
      $region48: #{seqformer_forward.6} parent=39 // pred_fallthru
        _
      // Predicated region
      $region49: #{seqformer_forward.6} parent=39 // pred_check
        %p321 = pneg %p103
      $region50: #{seqformer_forward.6} parent=39 // pred_check_branch
        %323 = sbr.rel (%p321) target = $region52
      $region51: #{seqformer_forward.6} parent=39 // pred_region
        %p324 = scmp.lt.s32.totalorder %s22, 1
        %s325 = scalar_select %p324, %s22, 1
        %s326 = smul.addr %s325, 8
        %s327 = scalar_lea.vmem %s2, %s326
      $region52: #{seqformer_forward.6} parent=39 // pred_fallthru
        _
    $region40: #{seqformer_forward.6} parent=5 // pred_fallthru
      _
    %p328 = scmp.le.s32.totalorder 1, %s15
    %p329 = scmp.lt.s32.totalorder %s15, 3
    %p330 = pnand %p328, %p329
    %p331 = pneg %p330
    // Predicated region
    $region53: #{seqformer_forward.6} parent=5 // pred_check
      _
    $region54: #{seqformer_forward.6} parent=5 // pred_check_branch
      %333 = sbr.rel (%p330) target = $region56
    $region55: #{seqformer_forward.6} parent=5 // pred_region
      %s334 = ssub.s32 %s15, 1
      %s335 = smul.u32 8, %s25
      %p336 = scmp.lt.s32.totalorder %s24, 1
      %s337 = scalar_select %p336, %s24, 1
      %p338 = scmp.lt.s32.totalorder %s335, 7
      %s339 = scalar_select %p338, %s335, 7
      %s340 = smul.addr %s337, 8
      %s341 = sadd.s32 %s339, %s340
      %s342 = smul.addr %s341, 8
      %s343 = scalar_lea.vmem %s0, %s342
      %p344 = pneg %p55
      %p345 = pneg %p52
      %p346 = scmp.lt.s32.totalorder %s24, 1
      %s347 = scalar_select %p346, %s24, 1
      %p348 = scmp.lt.s32.totalorder %s25, 0
      %s349 = scalar_select %p348, %s25, 0
      %s350 = sadd.s32 %s349, %s347
      %s351 = smul.addr %s350, 8
      %s352 = scalar_lea.vmem %s1, %s351
      %p353 = pneg %p83
      %p354 = pneg %p80
      %p355 = scmp.lt.s32.totalorder %s24, 1
      %s356 = scalar_select %p355, %s24, 1
      %s357 = smul.addr %s356, 8
      %s358 = scalar_lea.vmem %s2, %s357
      %p359 = pneg %p109
      %p360 = pneg %p106
      %p361 = pneg %p130
      %p362 = pneg %p127
      %p363 = pneg %p151
      %p364 = pneg %p148
      %p365 = pneg %p172
      %p366 = pneg %p169
      %p367 = pneg %p193
      %p368 = pneg %p190
      %p369 = pneg %p214
      %p370 = pneg %p211
      %p371 = pneg %p235
      %p372 = pneg %p232
      %p373 = pneg %p261
      %p374 = pneg %p258
      %p375 = scmp.lt.s32.totalorder %s24, 1
      %s376 = scalar_select %p375, %s24, 1
      %s377 = smul.addr %s376, 8
      %s378 = scalar_lea.vmem %s9, %s377
      %s379 = smul.u32 8, %s25
      %p380 = scmp.lt.s32.totalorder %s24, 1
      %s381 = scalar_select %p380, %s24, 1
      %p382 = scmp.lt.s32.totalorder %s379, 7
      %s383 = scalar_select %p382, %s379, 7
      %s384 = smul.addr %s381, 8
      %s385 = sadd.s32 %s383, %s384
      %s386 = smul.addr %s385, 8
      %s387 = scalar_lea.vmem %s0, %s386
      %s388 = smul.u32 8, %s25
      %p389 = scmp.lt.s32.totalorder %s24, 1
      %s390 = scalar_select %p389, %s24, 1
      %p391 = scmp.lt.s32.totalorder %s25, 0
      %s392 = scalar_select %p391, %s25, 0
      %s393 = sadd.s32 %s392, %s390
      %s394 = smul.addr %s393, 8
      %s395 = scalar_lea.vmem %s1, %s394
      %p396 = scmp.lt.s32.totalorder %s24, 1
      %s397 = scalar_select %p396, %s24, 1
      %s398 = smul.addr %s397, 8
      %s399 = scalar_lea.vmem %s2, %s398
      %p400 = scmp.lt.s32.totalorder %s24, 1
      %s401 = scalar_select %p400, %s24, 1
      %s402 = smul.addr %s401, 8
      %s403 = scalar_lea.vmem %s9, %s402
      %v405 = vld [vmem:[%s387] sm:$0xff]
      %v406 = vld [vmem:[%s387 + $0x8] sm:$0xff]
      %v407 = vld [vmem:[%s387 + $0x10] sm:$0xff]
      %v408 = vld [vmem:[%s387 + $0x18] sm:$0xff]
      %v409 = vld [vmem:[%s387 + $0x20] sm:$0xff]
      %v410 = vld [vmem:[%s387 + $0x28] sm:$0xff]
      %v411 = vld [vmem:[%s387 + $0x30] sm:$0xff]
      %v412 = vld [vmem:[%s387 + $0x38] sm:$0xff]
      %vm413 = vcmask 130048
      %v414 = vsel %vm413, %v405, 0.0
      %415 = vadd.xlane.f32.xlu0 %v414
      %v416 = vpop.xlane.xlu0 %415
      %v417 = vsel %vm413, %v406, 0.0
      %418 = vadd.xlane.f32.xlu0 %v417
      %v419 = vpop.xlane.xlu0 %418
      %v420 = vsel %vm413, %v407, 0.0
      %421 = vadd.xlane.f32.xlu0 %v420
      %v422 = vpop.xlane.xlu0 %421
      %v423 = vsel %vm413, %v408, 0.0
      %424 = vadd.xlane.f32.xlu0 %v423
      %v425 = vpop.xlane.xlu0 %424
      %v426 = vsel %vm413, %v409, 0.0
      %427 = vadd.xlane.f32.xlu0 %v426
      %v428 = vpop.xlane.xlu0 %427
      %v429 = vsel %vm413, %v410, 0.0
      %430 = vadd.xlane.f32.xlu0 %v429
      %v431 = vpop.xlane.xlu0 %430
      %v432 = vsel %vm413, %v411, 0.0
      %433 = vadd.xlane.f32.xlu0 %v432
      %v434 = vpop.xlane.xlu0 %433
      %v435 = vsel %vm413, %v412, 0.0
      %436 = vadd.xlane.f32.xlu0 %v435
      %v437 = vpop.xlane.xlu0 %436
      %v438 = vrcp.pop 16.0
      %v439 = vmul.f32 %v416, %v438
      %v440 = vmul.f32 %v419, %v438
      %v441 = vmul.f32 %v422, %v438
      %v442 = vmul.f32 %v425, %v438
      %v443 = vmul.f32 %v428, %v438
      %v444 = vmul.f32 %v431, %v438
      %v445 = vmul.f32 %v434, %v438
      %v446 = vmul.f32 %v437, %v438
      %v447 = vsub.f32 %v405, %v439
      %v448 = vsub.f32 %v406, %v440
      %v449 = vsub.f32 %v407, %v441
      %v450 = vsub.f32 %v408, %v442
      %v451 = vsub.f32 %v409, %v443
      %v452 = vsub.f32 %v410, %v444
      %v453 = vsub.f32 %v411, %v445
      %v454 = vsub.f32 %v412, %v446
      %v455 = vmul.f32 %v447, %v447
      %v456 = vmul.f32 %v448, %v448
      %v457 = vmul.f32 %v449, %v449
      %v458 = vmul.f32 %v450, %v450
      %v459 = vmul.f32 %v451, %v451
      %v460 = vmul.f32 %v452, %v452
      %v461 = vmul.f32 %v453, %v453
      %v462 = vmul.f32 %v454, %v454
      %v463 = vsel %vm413, %v455, 0.0
      %464 = vadd.xlane.f32.xlu0 %v463
      %v465 = vpop.xlane.xlu0 %464
      %v466 = vsel %vm413, %v456, 0.0
      %467 = vadd.xlane.f32.xlu0 %v466
      %v468 = vpop.xlane.xlu0 %467
      %v469 = vsel %vm413, %v457, 0.0
      %470 = vadd.xlane.f32.xlu0 %v469
      %v471 = vpop.xlane.xlu0 %470
      %v472 = vsel %vm413, %v458, 0.0
      %473 = vadd.xlane.f32.xlu0 %v472
      %v474 = vpop.xlane.xlu0 %473
      %v475 = vsel %vm413, %v459, 0.0
      %476 = vadd.xlane.f32.xlu0 %v475
      %v477 = vpop.xlane.xlu0 %476
      %v478 = vsel %vm413, %v460, 0.0
      %479 = vadd.xlane.f32.xlu0 %v478
      %v480 = vpop.xlane.xlu0 %479
      %v481 = vsel %vm413, %v461, 0.0
      %482 = vadd.xlane.f32.xlu0 %v481
      %v483 = vpop.xlane.xlu0 %482
      %v484 = vsel %vm413, %v462, 0.0
      %485 = vadd.xlane.f32.xlu0 %v484
      %v486 = vpop.xlane.xlu0 %485
      %v487 = vmul.f32 %v465, %v438
      %v488 = vmul.f32 %v468, %v438
      %v489 = vmul.f32 %v471, %v438
      %v490 = vmul.f32 %v474, %v438
      %v491 = vmul.f32 %v477, %v438
      %v492 = vmul.f32 %v480, %v438
      %v493 = vmul.f32 %v483, %v438
      %v494 = vmul.f32 %v486, %v438
      %v495 = vadd.f32 %v487, 1e-05
      %v496 = vadd.f32 %v488, 1e-05
      %v497 = vadd.f32 %v489, 1e-05
      %v498 = vadd.f32 %v490, 1e-05
      %v499 = vadd.f32 %v491, 1e-05
      %v500 = vadd.f32 %v492, 1e-05
      %v501 = vadd.f32 %v493, 1e-05
      %v502 = vadd.f32 %v494, 1e-05
      %v503 = vrsqrt.pop %v495
      %v504 = vrsqrt.pop %v496
      %v505 = vrsqrt.pop %v497
      %v506 = vrsqrt.pop %v498
      %v507 = vrsqrt.pop %v499
      %v508 = vrsqrt.pop %v500
      %v509 = vrsqrt.pop %v501
      %v510 = vrsqrt.pop %v502
      %v511 = vmul.f32 %v447, %v503
      %v512 = vmul.f32 %v448, %v504
      %v513 = vmul.f32 %v449, %v505
      %v514 = vmul.f32 %v450, %v506
      %v515 = vmul.f32 %v451, %v507
      %v516 = vmul.f32 %v452, %v508
      %v517 = vmul.f32 %v453, %v509
      %v518 = vmul.f32 %v454, %v510
      %v519 = vld [vmem:[%s395] sm:$0xff]
      %p520 = scmp.eq.s32.totalorder %s25, 0
      // Predicated region
      $region57: #{seqformer_forward.6} parent=55 // pred_check
        %p521 = pneg %p520
      $region58: #{seqformer_forward.6} parent=55 // pred_check_branch
        %523 = sbr.rel (%p521) target = $region60
      $region59: #{seqformer_forward.6} parent=55 // pred_region
        %v524 = vld [vmem:[%s399] sm:$0xff]
        %vm525 = vcmask 261120
        %526 = vst.msk [vmem:[%s403] sm:$0xff] %vm525, %v524
      $region60: #{seqformer_forward.6} parent=55 // pred_fallthru
        _
      %v527 = vld [vmem:[%s3] sm:$0xff]
      %v528 = vld [vmem:[%s3 + $0x8] sm:$0xff]
      %v529 = vpack.c.bf16 %v512, %v511
      %v530 = vpack.c.bf16 %v514, %v513
      %v531 = vpack.c.bf16 %v516, %v515
      %v532 = vpack.c.bf16 %v518, %v517
      %v533 = vpack.c.bf16 %v528, %v527
      %v534 = vld [vmem:[%s4] sm:$0x1]
      %v536 = vlaneseq
      %v537 = vshrl.u32 %v536, 7
      %v538 = vsub.s32 0, %v537
      %v539 = vrot.slane %v534, %v538
      %v542 = vsel %vm413, %v529, 0
      %v545 = vsel %vm413, %v530, 0
      %v548 = vsel %vm413, %v531, 0
      %v551 = vsel %vm413, %v532, 0
      %553 = vmatprep.subr.bf16.mxu0 0
      %554 = vmatpush1.bf16.msra.mxu0 %v533
      %555 = vmatprep.subr.bf16.mxu0 0
      %556 = vmatpush1.bf16.msra.mxu0 0
      %557 = vmatprep.subr.bf16.mxu0 0
      %558 = vmatpush1.bf16.msra.mxu0 0
      %559 = vmatprep.subr.bf16.mxu0 0
      %560 = vmatpush1.bf16.msra.mxu0 0
      %561 = vmatprep.subr.bf16.mxu0 0
      %562 = vmatpush1.bf16.msra.mxu0 0
      %563 = vmatprep.subr.bf16.mxu0 0
      %564 = vmatpush1.bf16.msra.mxu0 0
      %565 = vmatprep.subr.bf16.mxu0 0
      %566 = vmatpush1.bf16.msra.mxu0 0
      %567 = vmatprep.subr.bf16.mxu0 0
      %568 = vmatpush1.bf16.msra.mxu0 0
      %569 = vmatprep.subr.bf16.mxu0 0
      %570 = vmatpush1.bf16.msra.mxu0 0
      %571 = vmatprep.subr.bf16.mxu0 0
      %572 = vmatpush1.bf16.msra.mxu0 0
      %573 = vmatprep.subr.bf16.mxu0 0
      %574 = vmatpush1.bf16.msra.mxu0 0
      %575 = vmatprep.subr.bf16.mxu0 0
      %576 = vmatpush1.bf16.msra.mxu0 0
      %577 = vmatprep.subr.bf16.mxu0 0
      %578 = vmatpush1.bf16.msra.mxu0 0
      %579 = vmatprep.subr.bf16.mxu0 0
      %580 = vmatpush1.bf16.msra.mxu0 0
      %581 = vmatprep.subr.bf16.mxu0 0
      %582 = vmatpush1.bf16.msra.mxu0 0
      %583 = vmatprep.subr.bf16.mxu0 0
      %584 = vmatpush1.bf16.msra.mxu0 0
      %585 = vmatprep.mubr.bf16.mxu0 0
      %586 = vmatmul.mubr.bf16.gmra.mrb[0].mxu0 %v542
      %v587 = vpop.f32.mrb[0].mxu0
      %v588 = vadd.f32 %v539, %v587
      %v589 = vpop.f32.mrb[0].mxu0
      %v590 = vpop.f32.mrb[0].mxu0
      %v591 = vadd.f32 %v539, %v590
      %v592 = vpop.f32.mrb[0].mxu0
      %593 = vmatprep.mubr.bf16.mxu0 0
      %594 = vmatmul.mubr.bf16.gmra.mrb[0].mxu0 %v545
      %v595 = vpop.f32.mrb[0].mxu0
      %v596 = vadd.f32 %v539, %v595
      %v597 = vpop.f32.mrb[0].mxu0
      %v598 = vpop.f32.mrb[0].mxu0
      %v599 = vadd.f32 %v539, %v598
      %v600 = vpop.f32.mrb[0].mxu0
      %601 = vmatprep.mubr.bf16.mxu0 0
      %602 = vmatmul.mubr.bf16.gmra.mrb[0].mxu0 %v548
      %v603 = vpop.f32.mrb[0].mxu0
      %v604 = vadd.f32 %v539, %v603
      %v605 = vpop.f32.mrb[0].mxu0
      %v606 = vpop.f32.mrb[0].mxu0
      %v607 = vadd.f32 %v539, %v606
      %v608 = vpop.f32.mrb[0].mxu0
      %609 = vmatprep.mubr.bf16.mxu0 0
      %610 = vmatmul.mubr.bf16.gmra.mrb[0].mxu0 %v551
      %v611 = vpop.f32.mrb[0].mxu0
      %v612 = vadd.f32 %v539, %v611
      %v613 = vpop.f32.mrb[0].mxu0
      %v614 = vpop.f32.mrb[0].mxu0
      %v615 = vadd.f32 %v539, %v614
      %v616 = vpop.f32.mrb[0].mxu0
      %617 = vdwg.mxu0
      %v618 = vmax.f32 %v588, 0.0
      %v619 = vmax.f32 %v591, 0.0
      %v620 = vmax.f32 %v596, 0.0
      %v621 = vmax.f32 %v599, 0.0
      %v622 = vmax.f32 %v604, 0.0
      %v623 = vmax.f32 %v607, 0.0
      %v624 = vmax.f32 %v612, 0.0
      %v625 = vmax.f32 %v615, 0.0
      %v626 = vld [vmem:[%s5] sm:$0xff]
      %v627 = vld [vmem:[%s5 + $0x8] sm:$0xff]
      %v628 = vld [vmem:[%s5 + $0x10] sm:$0xff]
      %v629 = vld [vmem:[%s5 + $0x18] sm:$0xff]
      %v630 = vpack.c.bf16 %v619, %v618
      %v631 = vpack.c.bf16 %v621, %v620
      %v632 = vpack.c.bf16 %v623, %v622
      %v633 = vpack.c.bf16 %v625, %v624
      %v634 = vpack.c.bf16 %v627, %v626
      %v635 = vpack.c.bf16 %v629, %v628
      %v636 = vld [vmem:[%s6] sm:$0x1]
      %v638 = vlaneseq
      %v639 = vshrl.u32 %v638, 7
      %v640 = vsub.s32 0, %v639
      %v641 = vrot.slane %v636, %v640
      %vm643 = vcmask 261120
      %v645 = vsel %vm643, %v630, 0
      %v648 = vsel %vm643, %v631, 0
      %v651 = vsel %vm643, %v632, 0
      %v654 = vsel %vm643, %v633, 0
      %656 = vmatprep.subr.bf16.mxu0 0
      %657 = vmatpush1.bf16.msra.mxu0 %v634
      %658 = vmatprep.subr.bf16.mxu0 0
      %659 = vmatpush1.bf16.msra.mxu0 %v635
      %660 = vmatprep.subr.bf16.mxu0 0
      %661 = vmatpush1.bf16.msra.mxu0 0
      %662 = vmatprep.subr.bf16.mxu0 0
      %663 = vmatpush1.bf16.msra.mxu0 0
      %664 = vmatprep.subr.bf16.mxu0 0
      %665 = vmatpush1.bf16.msra.mxu0 0
      %666 = vmatprep.subr.bf16.mxu0 0
      %667 = vmatpush1.bf16.msra.mxu0 0
      %668 = vmatprep.subr.bf16.mxu0 0
      %669 = vmatpush1.bf16.msra.mxu0 0
      %670 = vmatprep.subr.bf16.mxu0 0
      %671 = vmatpush1.bf16.msra.mxu0 0
      %672 = vmatprep.subr.bf16.mxu0 0
      %673 = vmatpush1.bf16.msra.mxu0 0
      %674 = vmatprep.subr.bf16.mxu0 0
      %675 = vmatpush1.bf16.msra.mxu0 0
      %676 = vmatprep.subr.bf16.mxu0 0
      %677 = vmatpush1.bf16.msra.mxu0 0
      %678 = vmatprep.subr.bf16.mxu0 0
      %679 = vmatpush1.bf16.msra.mxu0 0
      %680 = vmatprep.subr.bf16.mxu0 0
      %681 = vmatpush1.bf16.msra.mxu0 0
      %682 = vmatprep.subr.bf16.mxu0 0
      %683 = vmatpush1.bf16.msra.mxu0 0
      %684 = vmatprep.subr.bf16.mxu0 0
      %685 = vmatpush1.bf16.msra.mxu0 0
      %686 = vmatprep.subr.bf16.mxu0 0
      %687 = vmatpush1.bf16.msra.mxu0 0
      %688 = vmatprep.mubr.bf16.mxu0 0
      %689 = vmatmul.mubr.bf16.gmra.mrb[0].mxu0 %v645
      %v690 = vpop.f32.mrb[0].mxu0
      %v691 = vadd.f32 %v641, %v690
      %v692 = vpop.f32.mrb[0].mxu0
      %v693 = vpop.f32.mrb[0].mxu0
      %v694 = vadd.f32 %v641, %v693
      %v695 = vpop.f32.mrb[0].mxu0
      %696 = vmatprep.mubr.bf16.mxu0 0
      %697 = vmatmul.mubr.bf16.gmra.mrb[0].mxu0 %v648
      %v698 = vpop.f32.mrb[0].mxu0
      %v699 = vadd.f32 %v641, %v698
      %v700 = vpop.f32.mrb[0].mxu0
      %v701 = vpop.f32.mrb[0].mxu0
      %v702 = vadd.f32 %v641, %v701
      %v703 = vpop.f32.mrb[0].mxu0
      %704 = vmatprep.mubr.bf16.mxu0 0
      %705 = vmatmul.mubr.bf16.gmra.mrb[0].mxu0 %v651
      %v706 = vpop.f32.mrb[0].mxu0
      %v707 = vadd.f32 %v641, %v706
      %v708 = vpop.f32.mrb[0].mxu0
      %v709 = vpop.f32.mrb[0].mxu0
      %v710 = vadd.f32 %v641, %v709
      %v711 = vpop.f32.mrb[0].mxu0
      %712 = vmatprep.mubr.bf16.mxu0 0
      %713 = vmatmul.mubr.bf16.gmra.mrb[0].mxu0 %v654
      %v714 = vpop.f32.mrb[0].mxu0
      %v715 = vadd.f32 %v641, %v714
      %v716 = vpop.f32.mrb[0].mxu0
      %v717 = vpop.f32.mrb[0].mxu0
      %v718 = vadd.f32 %v641, %v717
      %v719 = vpop.f32.mrb[0].mxu0
      %720 = vdwg.mxu0
      %v721 = vld [vmem:[%s403] sm:$0xff]
      %v722 = vlaneseq
      %v723 = vshrl.u32 %v722, 7
      %v724 = vsub.s32 0, %v723
      %v725 = vrot.slane %v519, %v724
      %727 = vbcast.lane.b32.xlu0 %v725, 256
      %v728 = vpop.permute.xlu0 %727
      %v729 = vlaneseq
      %v730 = vshrl.u32 %v729, 7
      %v731 = vsub.s32 1, %v730
      %v732 = vrot.slane %v519, %v731
      %734 = vbcast.lane.b32.xlu0 %v732, 256
      %v735 = vpop.permute.xlu0 %734
      %v736 = vlaneseq
      %v737 = vshrl.u32 %v736, 7
      %v738 = vsub.s32 2, %v737
      %v739 = vrot.slane %v519, %v738
      %741 = vbcast.lane.b32.xlu0 %v739, 256
      %v742 = vpop.permute.xlu0 %741
      %v743 = vlaneseq
      %v744 = vshrl.u32 %v743, 7
      %v745 = vsub.s32 3, %v744
      %v746 = vrot.slane %v519, %v745
      %748 = vbcast.lane.b32.xlu0 %v746, 256
      %v749 = vpop.permute.xlu0 %748
      %v750 = vlaneseq
      %v751 = vshrl.u32 %v750, 7
      %v752 = vsub.s32 4, %v751
      %v753 = vrot.slane %v519, %v752
      %755 = vbcast.lane.b32.xlu0 %v753, 256
      %v756 = vpop.permute.xlu0 %755
      %v757 = vlaneseq
      %v758 = vshrl.u32 %v757, 7
      %v759 = vsub.s32 5, %v758
      %v760 = vrot.slane %v519, %v759
      %762 = vbcast.lane.b32.xlu0 %v760, 256
      %v763 = vpop.permute.xlu0 %762
      %v764 = vlaneseq
      %v765 = vshrl.u32 %v764, 7
      %v766 = vsub.s32 6, %v765
      %v767 = vrot.slane %v519, %v766
      %769 = vbcast.lane.b32.xlu0 %v767, 256
      %v770 = vpop.permute.xlu0 %769
      %v771 = vlaneseq
      %v772 = vshrl.u32 %v771, 7
      %v773 = vsub.s32 7, %v772
      %v774 = vrot.slane %v519, %v773
      %776 = vbcast.lane.b32.xlu0 %v774, 256
      %v777 = vpop.permute.xlu0 %776
      %v778 = vmul.f32 %v691, %v728
      %v779 = vmul.f32 %v694, %v735
      %v780 = vmul.f32 %v699, %v742
      %v781 = vmul.f32 %v702, %v749
      %v782 = vmul.f32 %v707, %v756
      %v783 = vmul.f32 %v710, %v763
      %v784 = vmul.f32 %v715, %v770
      %v785 = vmul.f32 %v718, %v777
      %v786 = vsel %vm643, %v778, 0.0
      %v787 = vsel %vm643, %v779, 0.0
      %v788 = vadd.f32 %v786, %v787
      %v789 = vsel %vm643, %v780, 0.0
      %v790 = vadd.f32 %v788, %v789
      %v791 = vsel %vm643, %v781, 0.0
      %v792 = vadd.f32 %v790, %v791
      %v793 = vsel %vm643, %v782, 0.0
      %v794 = vadd.f32 %v792, %v793
      %v795 = vsel %vm643, %v783, 0.0
      %v796 = vadd.f32 %v794, %v795
      %v797 = vsel %vm643, %v784, 0.0
      %v798 = vadd.f32 %v796, %v797
      %v799 = vsel %vm643, %v785, 0.0
      %v800 = vadd.f32 %v798, %v799
      %v801 = vadd.f32 %v721, %v800
      %802 = vst.msk [vmem:[%s403] sm:$0xff] %vm643, %v801
      %v803 = vld [vmem:[%s7] sm:$0xff]
      %v804 = vld [vmem:[%s7 + $0x8] sm:$0xff]
      %v805 = vld [vmem:[%s7 + $0x10] sm:$0xff]
      %v806 = vld [vmem:[%s7 + $0x18] sm:$0xff]
      %v807 = vpack.c.bf16 %v804, %v803
      %v808 = vpack.c.bf16 %v806, %v805
      %v809 = vld [vmem:[%s8] sm:$0x1]
      %v811 = vlaneseq
      %v812 = vshrl.u32 %v811, 7
      %v813 = vsub.s32 0, %v812
      %v814 = vrot.slane %v809, %v813
      %820 = vrot.lane.b32.xlu0 %v630, 96
      %v821 = vpop.permute.xlu0 %820
      %822 = vrot.lane.b32.xlu0 %v631, 96
      %v823 = vpop.permute.xlu0 %822
      %824 = vrot.lane.b32.xlu0 %v632, 96
      %v825 = vpop.permute.xlu0 %824
      %826 = vrot.lane.b32.xlu0 %v633, 96
      %v827 = vpop.permute.xlu0 %826
      %v829 = vsel %vm643, %v821, 0
      %v832 = vsel %vm643, %v823, 0
      %v835 = vsel %vm643, %v825, 0
      %v838 = vsel %vm643, %v827, 0
      %840 = vmatprep.subr.bf16.mxu0 0
      %841 = vmatpush1.bf16.msra.mxu0 %v807
      %842 = vmatprep.subr.bf16.mxu0 0
      %843 = vmatpush1.bf16.msra.mxu0 %v808
      %844 = vmatprep.subr.bf16.mxu0 0
      %845 = vmatpush1.bf16.msra.mxu0 0
      %846 = vmatprep.subr.bf16.mxu0 0
      %847 = vmatpush1.bf16.msra.mxu0 0
      %848 = vmatprep.subr.bf16.mxu0 0
      %849 = vmatpush1.bf16.msra.mxu0 0
      %850 = vmatprep.subr.bf16.mxu0 0
      %851 = vmatpush1.bf16.msra.mxu0 0
      %852 = vmatprep.subr.bf16.mxu0 0
      %853 = vmatpush1.bf16.msra.mxu0 0
      %854 = vmatprep.subr.bf16.mxu0 0
      %855 = vmatpush1.bf16.msra.mxu0 0
      %856 = vmatprep.subr.bf16.mxu0 0
      %857 = vmatpush1.bf16.msra.mxu0 0
      %858 = vmatprep.subr.bf16.mxu0 0
      %859 = vmatpush1.bf16.msra.mxu0 0
      %860 = vmatprep.subr.bf16.mxu0 0
      %861 = vmatpush1.bf16.msra.mxu0 0
      %862 = vmatprep.subr.bf16.mxu0 0
      %863 = vmatpush1.bf16.msra.mxu0 0
      %864 = vmatprep.subr.bf16.mxu0 0
      %865 = vmatpush1.bf16.msra.mxu0 0
      %866 = vmatprep.subr.bf16.mxu0 0
      %867 = vmatpush1.bf16.msra.mxu0 0
      %868 = vmatprep.subr.bf16.mxu0 0
      %869 = vmatpush1.bf16.msra.mxu0 0
      %870 = vmatprep.subr.bf16.mxu0 0
      %871 = vmatpush1.bf16.msra.mxu0 0
      %872 = vmatprep.mubr.bf16.mxu0 0
      %873 = vmatmul.mubr.bf16.gmra.mrb[0].mxu0 %v829
      %v874 = vpop.f32.mrb[0].mxu0
      %v875 = vadd.f32 %v814, %v874
      %v876 = vpop.f32.mrb[0].mxu0
      %v877 = vpop.f32.mrb[0].mxu0
      %v878 = vadd.f32 %v814, %v877
      %v879 = vpop.f32.mrb[0].mxu0
      %880 = vmatprep.mubr.bf16.mxu0 0
      %881 = vmatmul.mubr.bf16.gmra.mrb[0].mxu0 %v832
      %v882 = vpop.f32.mrb[0].mxu0
      %v883 = vadd.f32 %v814, %v882
      %v884 = vpop.f32.mrb[0].mxu0
      %v885 = vpop.f32.mrb[0].mxu0
      %v886 = vadd.f32 %v814, %v885
      %v887 = vpop.f32.mrb[0].mxu0
      %888 = vmatprep.mubr.bf16.mxu0 0
      %889 = vmatmul.mubr.bf16.gmra.mrb[0].mxu0 %v835
      %v890 = vpop.f32.mrb[0].mxu0
      %v891 = vadd.f32 %v814, %v890
      %v892 = vpop.f32.mrb[0].mxu0
      %v893 = vpop.f32.mrb[0].mxu0
      %v894 = vadd.f32 %v814, %v893
      %v895 = vpop.f32.mrb[0].mxu0
      %896 = vmatprep.mubr.bf16.mxu0 0
      %897 = vmatmul.mubr.bf16.gmra.mrb[0].mxu0 %v838
      %v898 = vpop.f32.mrb[0].mxu0
      %v899 = vadd.f32 %v814, %v898
      %v900 = vpop.f32.mrb[0].mxu0
      %v901 = vpop.f32.mrb[0].mxu0
      %v902 = vadd.f32 %v814, %v901
      %v903 = vpop.f32.mrb[0].mxu0
      %904 = vdwg.mxu0
      %v905 = vmul.f32 %v875, %v728
      %v906 = vmul.f32 %v878, %v735
      %v907 = vmul.f32 %v883, %v742
      %v908 = vmul.f32 %v886, %v749
      %v909 = vmul.f32 %v891, %v756
      %v910 = vmul.f32 %v894, %v763
      %v911 = vmul.f32 %v899, %v770
      %v912 = vmul.f32 %v902, %v777
      %v913 = vsel %vm643, %v905, 0.0
      %v914 = vrot.slane %v913, 4
      %v915 = vadd.f32 %v913, %v914
      %v916 = vrot.slane %v915, 2
      %v917 = vadd.f32 %v915, %v916
      %v918 = vrot.slane %v917, 1
      %v919 = vadd.f32 %v917, %v918
      %v920 = vsel %vm643, %v906, 0.0
      %v921 = vrot.slane %v920, 4
      %v922 = vadd.f32 %v920, %v921
      %v923 = vrot.slane %v922, 2
      %v924 = vadd.f32 %v922, %v923
      %v925 = vrot.slane %v924, 1
      %v926 = vadd.f32 %v924, %v925
      %v927 = vsel %vm643, %v907, 0.0
      %v928 = vrot.slane %v927, 4
      %v929 = vadd.f32 %v927, %v928
      %v930 = vrot.slane %v929, 2
      %v931 = vadd.f32 %v929, %v930
      %v932 = vrot.slane %v931, 1
      %v933 = vadd.f32 %v931, %v932
      %v934 = vsel %vm643, %v908, 0.0
      %v935 = vrot.slane %v934, 4
      %v936 = vadd.f32 %v934, %v935
      %v937 = vrot.slane %v936, 2
      %v938 = vadd.f32 %v936, %v937
      %v939 = vrot.slane %v938, 1
      %v940 = vadd.f32 %v938, %v939
      %v941 = vsel %vm643, %v909, 0.0
      %v942 = vrot.slane %v941, 4
      %v943 = vadd.f32 %v941, %v942
      %v944 = vrot.slane %v943, 2
      %v945 = vadd.f32 %v943, %v944
      %v946 = vrot.slane %v945, 1
      %v947 = vadd.f32 %v945, %v946
      %v948 = vsel %vm643, %v910, 0.0
      %v949 = vrot.slane %v948, 4
      %v950 = vadd.f32 %v948, %v949
      %v951 = vrot.slane %v950, 2
      %v952 = vadd.f32 %v950, %v951
      %v953 = vrot.slane %v952, 1
      %v954 = vadd.f32 %v952, %v953
      %v955 = vsel %vm643, %v911, 0.0
      %v956 = vrot.slane %v955, 4
      %v957 = vadd.f32 %v955, %v956
      %v958 = vrot.slane %v957, 2
      %v959 = vadd.f32 %v957, %v958
      %v960 = vrot.slane %v959, 1
      %v961 = vadd.f32 %v959, %v960
      %v962 = vsel %vm643, %v912, 0.0
      %v963 = vrot.slane %v962, 4
      %v964 = vadd.f32 %v962, %v963
      %v965 = vrot.slane %v964, 2
      %v966 = vadd.f32 %v964, %v965
      %v967 = vrot.slane %v966, 1
      %v968 = vadd.f32 %v966, %v967
      %s969 = smul.u32 %s25, 8
      %s970 = scalar_lea.vmem %s403, %s969
      %v971 = vld [vmem:[%s970] sm:$0xff]
      %vm980 = vcmask 1041409
      %v981 = vsel %vm980, %v926, %v919
      %vm982 = vcmask 1042434
      %v983 = vsel %vm982, %v933, %v981
      %vm984 = vcmask 1043459
      %v985 = vsel %vm984, %v940, %v983
      %vm986 = vcmask 1044484
      %v987 = vsel %vm986, %v947, %v985
      %vm988 = vcmask 1045509
      %v989 = vsel %vm988, %v954, %v987
      %vm990 = vcmask 1046534
      %v991 = vsel %vm990, %v961, %v989
      %vm992 = vcmask 1047559
      %v993 = vsel %vm992, %v968, %v991
      %v995 = vadd.f32 %v971, %v993
      %996 = vst.msk [vmem:[%s970] sm:$0xff] %vm643, %v995
      %p997 = scmp.lt.s32.totalorder %s24, 1
      %s998 = scalar_select %p997, %s24, 1
      %s999 = smul.addr %s998, 8
      %s1000 = scalar_lea.vmem %s9, %s999
      // Predicated region
      $region61: #{seqformer_forward.6} parent=55 // pred_check
        %p1001 = pneg %p258
      $region62: #{seqformer_forward.6} parent=55 // pred_check_branch
        %1003 = sbr.rel (%p1001) target = $region64
      $region63: #{seqformer_forward.6} parent=55 // pred_region
        _
      $region64: #{seqformer_forward.6} parent=55 // pred_fallthru
        _
    $region56: #{seqformer_forward.6} parent=5 // pred_fallthru
      _
    %p1004 = scmp.le.s32.totalorder 2, %s15
    // Predicated region
    $region65: #{seqformer_forward.6} parent=5 // pred_check
      %p1005 = pneg %p1004
    $region66: #{seqformer_forward.6} parent=5 // pred_check_branch
      %1007 = sbr.rel (%p1005) target = $region68
    $region67: #{seqformer_forward.6} parent=5 // pred_region
      %s1008 = ssub.s32 %s15, 2
      // Predicated region
      $region69: #{seqformer_forward.6} parent=67 // pred_check
        %p1009 = pneg %p264
      $region70: #{seqformer_forward.6} parent=67 // pred_check_branch
        %1011 = sbr.rel (%p1009) target = $region72
      $region71: #{seqformer_forward.6} parent=67 // pred_region
        %p1012 = scmp.lt.s32.totalorder %s26, 1
        %s1013 = scalar_select %p1012, %s26, 1
        %s1014 = smul.addr %s1013, 8
        %s1015 = scalar_lea.vmem %s9, %s1014
      $region72: #{seqformer_forward.6} parent=67 // pred_fallthru
        _
    $region68: #{seqformer_forward.6} parent=5 // pred_fallthru
      _
  $region6: #{seqformer_forward.6} parent=0 // loop_footer
    %s19 = sadd.s32 1, %s15
  $region7: #{seqformer_forward.6} parent=0 // loop_footer_branch
    %14 = sbr.rel target = $region3
  $region8: #{seqformer_forward.6} parent=0 // loop_exit
    _

// kernel: seqformer_forward.8
$region0: #{seqformer_forward.8}
  #allocation0 [shape = 'u32[]', space=smem, size = 0x4, offset = 0x4, fixed_abs, tag = 'smem constant byte address 0x4 - core index']
  #allocation1 [shape = 'u32[144,128]{1,0:T(1,128)}', space=vmem, size = 0x12000, scoped, tag = 'internal scratch']
  #allocation2 [shape = 'f32[8,128]{1,0:T(8,128)}', space=vmem, size = 0x1000, scoped, tag = 'scratch operand']
  %s0 = inlined_call_operand.vmem [shape: f32[2,8,8,16], index: 0, kind: input, shape index: {}, may-alias: {0,9}]
  %s1 = inlined_call_operand.vmem [shape: f32[2,8,8], index: 1, kind: input, shape index: {}]
  %s2 = inlined_call_operand.vmem [shape: f32[2,8,8], index: 2, kind: input, shape index: {}]
  %s3 = inlined_call_operand.vmem [shape: f32[8,128], index: 3, kind: input, shape index: {}]
  %s4 = inlined_call_operand.vmem [shape: f32[1,16], index: 4, kind: input, shape index: {}, may-alias: {4,8}]
  %s5 = inlined_call_operand.vmem [shape: f32[16,32], index: 5, kind: input, shape index: {}]
  %s6 = inlined_call_operand.vmem [shape: f32[1,32], index: 6, kind: input, shape index: {}]
  %s7 = inlined_call_operand.vmem [shape: f32[32,16], index: 7, kind: input, shape index: {}]
  %s8 = inlined_call_operand.vmem [shape: f32[1,16], index: 8, kind: input, shape index: {}, may-alias: {4,8}]
  %s9 = inlined_call_operand.vmem [shape: f32[2,8,8,16], index: 9, kind: output, shape index: {}, may-alias: {0,9}]
  %s10 = sld [smem:[#allocation0]]
  $region73: #{seqformer_forward.8} parent=0
    _
  %s12 = ssub.s32 1, %s10
  %s13 = scalar_select 0, %s12, %s10
  loop: start=0, step=1, limit=4
  $region2: #{seqformer_forward.8} parent=0 // loop_pre_header
    _
  $region3: #{seqformer_forward.8} parent=0 // loop_header
    %s15 = sphi 0, %s19
    %p16 = scmp.ge.s32.totalorder %s15, 4
    %s22 = sphi 0, %s41
    %s23 = sphi 0, %s37
    %s24 = sphi 0, %s33
    %s25 = sphi 0, %s22
    %s26 = sphi 0, %s23
    %s27 = sphi 0, %s24
    %s28 = sphi 0, %s25
    %s29 = sphi 0, %s26
    %s30 = sphi 0, %s27
    %s48 = sphi 0, %s50
    %s51 = sphi 0, %s48
    %s52 = sphi 0, %s51
    %s68 = sphi 0, %s52
    %s76 = sphi 0, %s78
    %s79 = sphi 0, %s76
    %s80 = sphi 0, %s79
    %s96 = sphi 0, %s80
    %s104 = sphi 0, %s106
    %s107 = sphi 0, %s104
    %s108 = sphi 0, %s107
    %s124 = sphi 0, %s108
    %s128 = sphi 0, %s128
    %s130 = sphi 0, %s128
    %s131 = sphi 0, %s130
    %s145 = sphi 0, %s131
    %s149 = sphi 0, %s149
    %s151 = sphi 0, %s149
    %s152 = sphi 0, %s151
    %s166 = sphi 0, %s152
    %s170 = sphi 0, %s170
    %s172 = sphi 0, %s170
    %s173 = sphi 0, %s172
    %s187 = sphi 0, %s173
    %s191 = sphi 0, %s191
    %s193 = sphi 0, %s191
    %s194 = sphi 0, %s193
    %s208 = sphi 0, %s194
    %s212 = sphi 0, %s212
    %s214 = sphi 0, %s212
    %s215 = sphi 0, %s214
    %s229 = sphi 0, %s215
    %s233 = sphi 0, %s233
    %s235 = sphi 0, %s233
    %s236 = sphi 0, %s235
    %s250 = sphi 0, %s236
    %s260 = sphi 0, %s262
    %s263 = sphi 0, %s260
    %s264 = sphi 0, %s263
    %s280 = sphi 0, %s264
  $region4: #{seqformer_forward.8} parent=0 // loop_header_branch
    %18 = sbr.rel (%p16) target = $region8
  $region5: #{seqformer_forward.8} parent=0 // loop_body
    %s20 = ssub.s32 %s15, 1
    %s21 = ssub.s32 %s15, 2
    %s31 = sadd.s32 1, %s24
    %p32 = scmp.ge.s32.totalorder %s31, 1
    %s33 = scalar_select %p32, 0, %s31
    %s34 = sadd.s32 1, %s23
    %s35 = scalar_select %p32, %s34, %s23
    %p36 = scmp.ge.s32.totalorder %s35, 1
    %s37 = scalar_select %p36, 0, %s35
    %s38 = sadd.s32 1, %s22
    %s39 = scalar_select %p36, %s38, %s22
    %p40 = scmp.ge.s32.totalorder %s39, 2
    %s41 = scalar_select %p40, 0, %s39
    %s42 = ssub.s32 %s22, %s41
    %s43 = ssub.s32 %s23, %s37
    %s44 = sor.u32 %s42, %s43
    %s45 = ssub.s32 %s24, %s33
    %s46 = sor.u32 %s44, %s45
    %p47 = scmp.eq.s32.totalorder %s46, 0
    %s49 = sadd.s32 %s48, 1
    %s50 = scalar_select %p47, %s48, %s49
    %p53 = pneg %p47
    %p54 = scmp.eq.s32.totalorder %s15, 1
    %p55 = por %p53, %p54
    %p56 = scmp.ne.s32.totalorder %s48, %s51
    %p57 = scmp.eq.s32.totalorder %s15, 0
    %p58 = por %p56, %p57
    %p59 = scmp.ne.s32.totalorder %s48, %s51
    %p60 = scmp.eq.s32.totalorder %s20, 1
    %p61 = por %p59, %p60
    %p62 = scmp.ne.s32.totalorder %s51, %s52
    %p63 = scmp.eq.s32.totalorder %s20, 0
    %p64 = por %p62, %p63
    %p65 = scmp.ne.s32.totalorder %s51, %s52
    %p66 = scmp.eq.s32.totalorder %s21, 1
    %p67 = por %p65, %p66
    %p69 = scmp.ne.s32.totalorder %s52, %s68
    %p70 = scmp.eq.s32.totalorder %s21, 0
    %p71 = por %p69, %p70
    %s72 = ssub.s32 %s22, %s41
    %s73 = ssub.s32 %s23, %s37
    %s74 = sor.u32 %s72, %s73
    %p75 = scmp.eq.s32.totalorder %s74, 0
    %s77 = sadd.s32 %s76, 1
    %s78 = scalar_select %p75, %s76, %s77
    %p81 = pneg %p75
    %p82 = scmp.eq.s32.totalorder %s15, 1
    %p83 = por %p81, %p82
    %p84 = scmp.ne.s32.totalorder %s76, %s79
    %p85 = scmp.eq.s32.totalorder %s15, 0
    %p86 = por %p84, %p85
    %p87 = scmp.ne.s32.totalorder %s76, %s79
    %p88 = scmp.eq.s32.totalorder %s20, 1
    %p89 = por %p87, %p88
    %p90 = scmp.ne.s32.totalorder %s79, %s80
    %p91 = scmp.eq.s32.totalorder %s20, 0
    %p92 = por %p90, %p91
    %p93 = scmp.ne.s32.totalorder %s79, %s80
    %p94 = scmp.eq.s32.totalorder %s21, 1
    %p95 = por %p93, %p94
    %p97 = scmp.ne.s32.totalorder %s80, %s96
    %p98 = scmp.eq.s32.totalorder %s21, 0
    %p99 = por %p97, %p98
    %s100 = ssub.s32 %s22, %s41
    %s101 = ssub.s32 %s24, %s33
    %s102 = sor.u32 %s100, %s101
    %p103 = scmp.eq.s32.totalorder %s102, 0
    %s105 = sadd.s32 %s104, 1
    %s106 = scalar_select %p103, %s104, %s105
    %p109 = pneg %p103
    %p110 = scmp.eq.s32.totalorder %s15, 1
    %p111 = por %p109, %p110
    %p112 = scmp.ne.s32.totalorder %s104, %s107
    %p113 = scmp.eq.s32.totalorder %s15, 0
    %p114 = por %p112, %p113
    %p115 = scmp.ne.s32.totalorder %s104, %s107
    %p116 = scmp.eq.s32.totalorder %s20, 1
    %p117 = por %p115, %p116
    %p118 = scmp.ne.s32.totalorder %s107, %s108
    %p119 = scmp.eq.s32.totalorder %s20, 0
    %p120 = por %p118, %p119
    %p121 = scmp.ne.s32.totalorder %s107, %s108
    %p122 = scmp.eq.s32.totalorder %s21, 1
    %p123 = por %p121, %p122
    %p125 = scmp.ne.s32.totalorder %s108, %s124
    %p126 = scmp.eq.s32.totalorder %s21, 0
    %p127 = por %p125, %p126
    %s129 = sadd.s32 %s128, 1
    %p132 = scmp.eq.s32.totalorder %s15, 1
    %p133 = scmp.ne.s32.totalorder %s128, %s130
    %p134 = scmp.eq.s32.totalorder %s15, 0
    %p135 = por %p133, %p134
    %p136 = scmp.ne.s32.totalorder %s128, %s130
    %p137 = scmp.eq.s32.totalorder %s20, 1
    %p138 = por %p136, %p137
    %p139 = scmp.ne.s32.totalorder %s130, %s131
    %p140 = scmp.eq.s32.totalorder %s20, 0
    %p141 = por %p139, %p140
    %p142 = scmp.ne.s32.totalorder %s130, %s131
    %p143 = scmp.eq.s32.totalorder %s21, 1
    %p144 = por %p142, %p143
    %p146 = scmp.ne.s32.totalorder %s131, %s145
    %p147 = scmp.eq.s32.totalorder %s21, 0
    %p148 = por %p146, %p147
    %s150 = sadd.s32 %s149, 1
    %p153 = scmp.eq.s32.totalorder %s15, 1
    %p154 = scmp.ne.s32.totalorder %s149, %s151
    %p155 = scmp.eq.s32.totalorder %s15, 0
    %p156 = por %p154, %p155
    %p157 = scmp.ne.s32.totalorder %s149, %s151
    %p158 = scmp.eq.s32.totalorder %s20, 1
    %p159 = por %p157, %p158
    %p160 = scmp.ne.s32.totalorder %s151, %s152
    %p161 = scmp.eq.s32.totalorder %s20, 0
    %p162 = por %p160, %p161
    %p163 = scmp.ne.s32.totalorder %s151, %s152
    %p164 = scmp.eq.s32.totalorder %s21, 1
    %p165 = por %p163, %p164
    %p167 = scmp.ne.s32.totalorder %s152, %s166
    %p168 = scmp.eq.s32.totalorder %s21, 0
    %p169 = por %p167, %p168
    %s171 = sadd.s32 %s170, 1
    %p174 = scmp.eq.s32.totalorder %s15, 1
    %p175 = scmp.ne.s32.totalorder %s170, %s172
    %p176 = scmp.eq.s32.totalorder %s15, 0
    %p177 = por %p175, %p176
    %p178 = scmp.ne.s32.totalorder %s170, %s172
    %p179 = scmp.eq.s32.totalorder %s20, 1
    %p180 = por %p178, %p179
    %p181 = scmp.ne.s32.totalorder %s172, %s173
    %p182 = scmp.eq.s32.totalorder %s20, 0
    %p183 = por %p181, %p182
    %p184 = scmp.ne.s32.totalorder %s172, %s173
    %p185 = scmp.eq.s32.totalorder %s21, 1
    %p186 = por %p184, %p185
    %p188 = scmp.ne.s32.totalorder %s173, %s187
    %p189 = scmp.eq.s32.totalorder %s21, 0
    %p190 = por %p188, %p189
    %s192 = sadd.s32 %s191, 1
    %p195 = scmp.eq.s32.totalorder %s15, 1
    %p196 = scmp.ne.s32.totalorder %s191, %s193
    %p197 = scmp.eq.s32.totalorder %s15, 0
    %p198 = por %p196, %p197
    %p199 = scmp.ne.s32.totalorder %s191, %s193
    %p200 = scmp.eq.s32.totalorder %s20, 1
    %p201 = por %p199, %p200
    %p202 = scmp.ne.s32.totalorder %s193, %s194
    %p203 = scmp.eq.s32.totalorder %s20, 0
    %p204 = por %p202, %p203
    %p205 = scmp.ne.s32.totalorder %s193, %s194
    %p206 = scmp.eq.s32.totalorder %s21, 1
    %p207 = por %p205, %p206
    %p209 = scmp.ne.s32.totalorder %s194, %s208
    %p210 = scmp.eq.s32.totalorder %s21, 0
    %p211 = por %p209, %p210
    %s213 = sadd.s32 %s212, 1
    %p216 = scmp.eq.s32.totalorder %s15, 1
    %p217 = scmp.ne.s32.totalorder %s212, %s214
    %p218 = scmp.eq.s32.totalorder %s15, 0
    %p219 = por %p217, %p218
    %p220 = scmp.ne.s32.totalorder %s212, %s214
    %p221 = scmp.eq.s32.totalorder %s20, 1
    %p222 = por %p220, %p221
    %p223 = scmp.ne.s32.totalorder %s214, %s215
    %p224 = scmp.eq.s32.totalorder %s20, 0
    %p225 = por %p223, %p224
    %p226 = scmp.ne.s32.totalorder %s214, %s215
    %p227 = scmp.eq.s32.totalorder %s21, 1
    %p228 = por %p226, %p227
    %p230 = scmp.ne.s32.totalorder %s215, %s229
    %p231 = scmp.eq.s32.totalorder %s21, 0
    %p232 = por %p230, %p231
    %s234 = sadd.s32 %s233, 1
    %p237 = scmp.eq.s32.totalorder %s15, 1
    %p238 = scmp.ne.s32.totalorder %s233, %s235
    %p239 = scmp.eq.s32.totalorder %s15, 0
    %p240 = por %p238, %p239
    %p241 = scmp.ne.s32.totalorder %s233, %s235
    %p242 = scmp.eq.s32.totalorder %s20, 1
    %p243 = por %p241, %p242
    %p244 = scmp.ne.s32.totalorder %s235, %s236
    %p245 = scmp.eq.s32.totalorder %s20, 0
    %p246 = por %p244, %p245
    %p247 = scmp.ne.s32.totalorder %s235, %s236
    %p248 = scmp.eq.s32.totalorder %s21, 1
    %p249 = por %p247, %p248
    %p251 = scmp.ne.s32.totalorder %s236, %s250
    %p252 = scmp.eq.s32.totalorder %s21, 0
    %p253 = por %p251, %p252
    %s254 = ssub.s32 %s22, %s41
    %s255 = ssub.s32 %s23, %s37
    %s256 = sor.u32 %s254, %s255
    %s257 = ssub.s32 %s24, %s33
    %s258 = sor.u32 %s256, %s257
    %p259 = scmp.eq.s32.totalorder %s258, 0
    %s261 = sadd.s32 %s260, 1
    %s262 = scalar_select %p259, %s260, %s261
    %p265 = pneg %p259
    %p266 = scmp.eq.s32.totalorder %s15, 1
    %p267 = por %p265, %p266
    %p268 = scmp.ne.s32.totalorder %s260, %s263
    %p269 = scmp.eq.s32.totalorder %s15, 0
    %p270 = por %p268, %p269
    %p271 = scmp.ne.s32.totalorder %s260, %s263
    %p272 = scmp.eq.s32.totalorder %s20, 1
    %p273 = por %p271, %p272
    %p274 = scmp.ne.s32.totalorder %s263, %s264
    %p275 = scmp.eq.s32.totalorder %s20, 0
    %p276 = por %p274, %p275
    %p277 = scmp.ne.s32.totalorder %s263, %s264
    %p278 = scmp.eq.s32.totalorder %s21, 1
    %p279 = por %p277, %p278
    %p281 = scmp.ne.s32.totalorder %s264, %s280
    %p282 = scmp.eq.s32.totalorder %s21, 0
    %p283 = por %p281, %p282
    %p284 = scmp.le.s32.totalorder 1, %s15
    %p285 = scmp.lt.s32.totalorder %s15, 3
    %p286 = pnand %p284, %p285
    %p287 = pneg %p286
    // Predicated region
    $region9: #{seqformer_forward.8} parent=5 // pred_check
      _
    $region10: #{seqformer_forward.8} parent=5 // pred_check_branch
      %289 = sbr.rel (%p286) target = $region12
    $region11: #{seqformer_forward.8} parent=5 // pred_region
      %s290 = ssub.s32 %s15, 1
      // Predicated region
      $region13: #{seqformer_forward.8} parent=11 // pred_check
        %p291 = pneg %p141
      $region14: #{seqformer_forward.8} parent=11 // pred_check_branch
        %293 = sbr.rel (%p291) target = $region16
      $region15: #{seqformer_forward.8} parent=11 // pred_region
        _
      $region16: #{seqformer_forward.8} parent=11 // pred_fallthru
        _
      // Predicated region
      $region17: #{seqformer_forward.8} parent=11 // pred_check
        %p294 = pneg %p162
      $region18: #{seqformer_forward.8} parent=11 // pred_check_branch
        %296 = sbr.rel (%p294) target = $region20
      $region19: #{seqformer_forward.8} parent=11 // pred_region
        _
      $region20: #{seqformer_forward.8} parent=11 // pred_fallthru
        _
      // Predicated region
      $region21: #{seqformer_forward.8} parent=11 // pred_check
        %p297 = pneg %p183
      $region22: #{seqformer_forward.8} parent=11 // pred_check_branch
        %299 = sbr.rel (%p297) target = $region24
      $region23: #{seqformer_forward.8} parent=11 // pred_region
        _
      $region24: #{seqformer_forward.8} parent=11 // pred_fallthru
        _
      // Predicated region
      $region25: #{seqformer_forward.8} parent=11 // pred_check
        %p300 = pneg %p204
      $region26: #{seqformer_forward.8} parent=11 // pred_check_branch
        %302 = sbr.rel (%p300) target = $region28
      $region27: #{seqformer_forward.8} parent=11 // pred_region
        _
      $region28: #{seqformer_forward.8} parent=11 // pred_fallthru
        _
      // Predicated region
      $region29: #{seqformer_forward.8} parent=11 // pred_check
        %p303 = pneg %p225
      $region30: #{seqformer_forward.8} parent=11 // pred_check_branch
        %305 = sbr.rel (%p303) target = $region32
      $region31: #{seqformer_forward.8} parent=11 // pred_region
        _
      $region32: #{seqformer_forward.8} parent=11 // pred_fallthru
        _
      // Predicated region
      $region33: #{seqformer_forward.8} parent=11 // pred_check
        %p306 = pneg %p246
      $region34: #{seqformer_forward.8} parent=11 // pred_check_branch
        %308 = sbr.rel (%p306) target = $region36
      $region35: #{seqformer_forward.8} parent=11 // pred_region
        _
      $region36: #{seqformer_forward.8} parent=11 // pred_fallthru
        _
    $region12: #{seqformer_forward.8} parent=5 // pred_fallthru
      _
    %p309 = scmp.lt.s32.totalorder %s15, 2
    // Predicated region
    $region37: #{seqformer_forward.8} parent=5 // pred_check
      %p310 = pneg %p309
    $region38: #{seqformer_forward.8} parent=5 // pred_check_branch
      %312 = sbr.rel (%p310) target = $region40
    $region39: #{seqformer_forward.8} parent=5 // pred_region
      // Predicated region
      $region41: #{seqformer_forward.8} parent=39 // pred_check
        %p313 = pneg %p58
      $region42: #{seqformer_forward.8} parent=39 // pred_check_branch
        %315 = sbr.rel (%p313) target = $region44
      $region43: #{seqformer_forward.8} parent=39 // pred_region
        %s316 = smul.u32 8, %s23
        %p317 = scmp.lt.s32.totalorder %s22, 1
        %s318 = scalar_select %p317, %s22, 1
        %p319 = scmp.lt.s32.totalorder %s316, 7
        %s320 = scalar_select %p319, %s316, 7
        %p321 = scmp.lt.s32.totalorder %s24, 0
        %s322 = scalar_select %p321, %s24, 0
        %s323 = sadd.s32 %s322, %s320
        %s324 = smul.addr %s318, 8
        %s325 = sadd.s32 %s323, %s324
        %s326 = smul.addr %s325, 8
        %s327 = scalar_lea.vmem %s0, %s326
        %s328 = smul.u32 8, %s23
      $region44: #{seqformer_forward.8} parent=39 // pred_fallthru
        _
      // Predicated region
      $region45: #{seqformer_forward.8} parent=39 // pred_check
        %p329 = pneg %p86
      $region46: #{seqformer_forward.8} parent=39 // pred_check_branch
        %331 = sbr.rel (%p329) target = $region48
      $region47: #{seqformer_forward.8} parent=39 // pred_region
        %p332 = scmp.lt.s32.totalorder %s22, 1
        %s333 = scalar_select %p332, %s22, 1
        %p334 = scmp.lt.s32.totalorder %s23, 0
        %s335 = scalar_select %p334, %s23, 0
        %s336 = sadd.s32 %s335, %s333
        %s337 = smul.addr %s336, 8
        %s338 = scalar_lea.vmem %s1, %s337
      $region48: #{seqformer_forward.8} parent=39 // pred_fallthru
        _
      // Predicated region
      $region49: #{seqformer_forward.8} parent=39 // pred_check
        %p339 = pneg %p114
      $region50: #{seqformer_forward.8} parent=39 // pred_check_branch
        %341 = sbr.rel (%p339) target = $region52
      $region51: #{seqformer_forward.8} parent=39 // pred_region
        %p342 = scmp.lt.s32.totalorder %s22, 1
        %s343 = scalar_select %p342, %s22, 1
        %p344 = scmp.lt.s32.totalorder %s24, 0
        %s345 = scalar_select %p344, %s24, 0
        %s346 = sadd.s32 %s345, %s343
        %s347 = smul.addr %s346, 8
        %s348 = scalar_lea.vmem %s2, %s347
      $region52: #{seqformer_forward.8} parent=39 // pred_fallthru
        _
    $region40: #{seqformer_forward.8} parent=5 // pred_fallthru
      _
    %p349 = scmp.le.s32.totalorder 1, %s15
    %p350 = scmp.lt.s32.totalorder %s15, 3
    %p351 = pnand %p349, %p350
    %p352 = pneg %p351
    // Predicated region
    $region53: #{seqformer_forward.8} parent=5 // pred_check
      _
    $region54: #{seqformer_forward.8} parent=5 // pred_check_branch
      %354 = sbr.rel (%p351) target = $region56
    $region55: #{seqformer_forward.8} parent=5 // pred_region
      %s355 = ssub.s32 %s15, 1
      %s356 = smul.u32 8, %s26
      %p357 = scmp.lt.s32.totalorder %s25, 1
      %s358 = scalar_select %p357, %s25, 1
      %p359 = scmp.lt.s32.totalorder %s356, 7
      %s360 = scalar_select %p359, %s356, 7
      %p361 = scmp.lt.s32.totalorder %s27, 0
      %s362 = scalar_select %p361, %s27, 0
      %s363 = sadd.s32 %s362, %s360
      %s364 = smul.addr %s358, 8
      %s365 = sadd.s32 %s363, %s364
      %s366 = smul.addr %s365, 8
      %s367 = scalar_lea.vmem %s0, %s366
      %p368 = pneg %p64
      %p369 = pneg %p61
      %p370 = scmp.lt.s32.totalorder %s25, 1
      %s371 = scalar_select %p370, %s25, 1
      %p372 = scmp.lt.s32.totalorder %s26, 0
      %s373 = scalar_select %p372, %s26, 0
      %s374 = sadd.s32 %s373, %s371
      %s375 = smul.addr %s374, 8
      %s376 = scalar_lea.vmem %s1, %s375
      %p377 = pneg %p92
      %p378 = pneg %p89
      %p379 = scmp.lt.s32.totalorder %s25, 1
      %s380 = scalar_select %p379, %s25, 1
      %p381 = scmp.lt.s32.totalorder %s27, 0
      %s382 = scalar_select %p381, %s27, 0
      %s383 = sadd.s32 %s382, %s380
      %s384 = smul.addr %s383, 8
      %s385 = scalar_lea.vmem %s2, %s384
      %p386 = pneg %p120
      %p387 = pneg %p117
      %p388 = pneg %p141
      %p389 = pneg %p138
      %p390 = pneg %p162
      %p391 = pneg %p159
      %p392 = pneg %p183
      %p393 = pneg %p180
      %p394 = pneg %p204
      %p395 = pneg %p201
      %p396 = pneg %p225
      %p397 = pneg %p222
      %p398 = pneg %p246
      %p399 = pneg %p243
      %p400 = pneg %p276
      %p401 = pneg %p273
      %s402 = smul.u32 8, %s26
      %p403 = scmp.lt.s32.totalorder %s25, 1
      %s404 = scalar_select %p403, %s25, 1
      %p405 = scmp.lt.s32.totalorder %s402, 7
      %s406 = scalar_select %p405, %s402, 7
      %p407 = scmp.lt.s32.totalorder %s27, 0
      %s408 = scalar_select %p407, %s27, 0
      %s409 = sadd.s32 %s408, %s406
      %s410 = smul.addr %s404, 8
      %s411 = sadd.s32 %s409, %s410
      %s412 = smul.addr %s411, 8
      %s413 = scalar_lea.vmem %s9, %s412
      %s414 = smul.u32 8, %s26
      %p415 = scmp.lt.s32.totalorder %s25, 1
      %s416 = scalar_select %p415, %s25, 1
      %p417 = scmp.lt.s32.totalorder %s414, 7
      %s418 = scalar_select %p417, %s414, 7
      %p419 = scmp.lt.s32.totalorder %s27, 0
      %s420 = scalar_select %p419, %s27, 0
      %s421 = sadd.s32 %s420, %s418
      %s422 = smul.addr %s416, 8
      %s423 = sadd.s32 %s421, %s422
      %s424 = smul.addr %s423, 8
      %s425 = scalar_lea.vmem %s0, %s424
      %s426 = smul.u32 8, %s26
      %p427 = scmp.lt.s32.totalorder %s25, 1
      %s428 = scalar_select %p427, %s25, 1
      %p429 = scmp.lt.s32.totalorder %s26, 0
      %s430 = scalar_select %p429, %s26, 0
      %s431 = sadd.s32 %s430, %s428
      %s432 = smul.addr %s431, 8
      %s433 = scalar_lea.vmem %s1, %s432
      %p434 = scmp.lt.s32.totalorder %s25, 1
      %s435 = scalar_select %p434, %s25, 1
      %p436 = scmp.lt.s32.totalorder %s27, 0
      %s437 = scalar_select %p436, %s27, 0
      %s438 = sadd.s32 %s437, %s435
      %s439 = smul.addr %s438, 8
      %s440 = scalar_lea.vmem %s2, %s439
      %s441 = smul.u32 8, %s26
      %p442 = scmp.lt.s32.totalorder %s25, 1
      %s443 = scalar_select %p442, %s25, 1
      %p444 = scmp.lt.s32.totalorder %s441, 7
      %s445 = scalar_select %p444, %s441, 7
      %p446 = scmp.lt.s32.totalorder %s27, 0
      %s447 = scalar_select %p446, %s27, 0
      %s448 = sadd.s32 %s447, %s445
      %s449 = smul.addr %s443, 8
      %s450 = sadd.s32 %s448, %s449
      %s451 = smul.addr %s450, 8
      %s452 = scalar_lea.vmem %s9, %s451
      %s453 = smul.u32 8, %s26
      %p455 = scmp.eq.s32.totalorder %s27, 0
      // Predicated region
      $region57: #{seqformer_forward.8} parent=55 // pred_check
        %p456 = pneg %p455
      $region58: #{seqformer_forward.8} parent=55 // pred_check_branch
        %458 = sbr.rel (%p456) target = $region60
      $region59: #{seqformer_forward.8} parent=55 // pred_region
        %v459 = vld [vmem:[%s433] sm:$0xff]
        %v460 = vld [vmem:[%s3] sm:$0xff]
        %v461 = vpack.c.bf16 %v459, %v459
        %v462 = vpack.c.bf16 %v460, %v460
        %vm463 = vcmask 64512
        %v465 = vsel %vm463, %v461, 0
        %vm467 = vcmask 1043456
        %v469 = vsel %vm467, %v462, 0
        %471 = vmatprep.subr.bf16.mxu0 0
        %472 = vmatpush1.bf16.msra.mxu0 %v469
        %473 = vmatprep.subr.bf16.mxu0 0
        %474 = vmatpush1.bf16.msra.mxu0 0
        %475 = vmatprep.subr.bf16.mxu0 0
        %476 = vmatpush1.bf16.msra.mxu0 0
        %477 = vmatprep.subr.bf16.mxu0 0
        %478 = vmatpush1.bf16.msra.mxu0 0
        %479 = vmatprep.subr.bf16.mxu0 0
        %480 = vmatpush1.bf16.msra.mxu0 0
        %481 = vmatprep.subr.bf16.mxu0 0
        %482 = vmatpush1.bf16.msra.mxu0 0
        %483 = vmatprep.subr.bf16.mxu0 0
        %484 = vmatpush1.bf16.msra.mxu0 0
        %485 = vmatprep.subr.bf16.mxu0 0
        %486 = vmatpush1.bf16.msra.mxu0 0
        %487 = vmatprep.subr.bf16.mxu0 0
        %488 = vmatpush1.bf16.msra.mxu0 0
        %489 = vmatprep.subr.bf16.mxu0 0
        %490 = vmatpush1.bf16.msra.mxu0 0
        %491 = vmatprep.subr.bf16.mxu0 0
        %492 = vmatpush1.bf16.msra.mxu0 0
        %493 = vmatprep.subr.bf16.mxu0 0
        %494 = vmatpush1.bf16.msra.mxu0 0
        %495 = vmatprep.subr.bf16.mxu0 0
        %496 = vmatpush1.bf16.msra.mxu0 0
        %497 = vmatprep.subr.bf16.mxu0 0
        %498 = vmatpush1.bf16.msra.mxu0 0
        %499 = vmatprep.subr.bf16.mxu0 0
        %500 = vmatpush1.bf16.msra.mxu0 0
        %501 = vmatprep.subr.bf16.mxu0 0
        %502 = vmatpush1.bf16.msra.mxu0 0
        %503 = vmatprep.mubr.bf16.mxu0 0
        %504 = vmatmul.mubr.bf16.gmra.mrb[0].mxu0 %v465
        %v505 = vpop.f32.mrb[0].mxu0
        %v506 = vadd.f32 0.0, %v505
        %v507 = vpop.f32.mrb[0].mxu0
        %v508 = vpop.f32.mrb[0].mxu0
        %v509 = vpop.f32.mrb[0].mxu0
        %510 = vdwg.mxu0
        %511 = vst [vmem:[#allocation2] sm:$0xff] %v506
      $region60: #{seqformer_forward.8} parent=55 // pred_fallthru
        _
      %v512 = vld [vmem:[#allocation2] sm:$0xff]
      %514 = vrot.lane.b32.xlu0 %v512, 112
      %v515 = vpop.permute.xlu0 %514
      %517 = vrot.lane.b32.xlu0 %v512, 96
      %v518 = vpop.permute.xlu0 %517
      %520 = vrot.lane.b32.xlu0 %v512, 80
      %v521 = vpop.permute.xlu0 %520
      %523 = vrot.lane.b32.xlu0 %v512, 64
      %v524 = vpop.permute.xlu0 %523
      %526 = vrot.lane.b32.xlu0 %v512, 48
      %v527 = vpop.permute.xlu0 %526
      %529 = vrot.lane.b32.xlu0 %v512, 32
      %v530 = vpop.permute.xlu0 %529
      %532 = vrot.lane.b32.xlu0 %v512, 16
      %v533 = vpop.permute.xlu0 %532
      %v535 = vcombine.low %v512, %v518
      %v536 = vcombine.high %v512, %v518
      %v538 = vunpack.c.l.s4 1983009808
      %v539 = vunpack.c.0.s8 %v538
      %v540 = vlaneseq
      %v541 = vshrl.u32 %v540, 7
      %v542 = vsub.s32 %v539, %v541
      %v543 = vrot.slane %v535, %v542
      %v545 = vunpack.c.l.s4 1983009808
      %v546 = vunpack.c.0.s8 %v545
      %v547 = vlaneseq
      %v548 = vshrl.u32 %v547, 7
      %v549 = vsub.s32 %v546, %v548
      %v550 = vrot.slane %v536, %v549
      %v551 = vcombine.low %v515, %v521
      %v552 = vcombine.high %v515, %v521
      %v554 = vunpack.c.l.s4 1983009808
      %v555 = vunpack.c.0.s8 %v554
      %v556 = vlaneseq
      %v557 = vshrl.u32 %v556, 7
      %v558 = vsub.s32 %v555, %v557
      %v559 = vrot.slane %v551, %v558
      %v561 = vunpack.c.l.s4 1983009808
      %v562 = vunpack.c.0.s8 %v561
      %v563 = vlaneseq
      %v564 = vshrl.u32 %v563, 7
      %v565 = vsub.s32 %v562, %v564
      %v566 = vrot.slane %v552, %v565
      %v567 = vcombine.low %v524, %v530
      %v568 = vcombine.high %v524, %v530
      %v570 = vunpack.c.l.s4 1983009808
      %v571 = vunpack.c.0.s8 %v570
      %v572 = vlaneseq
      %v573 = vshrl.u32 %v572, 7
      %v574 = vsub.s32 %v571, %v573
      %v575 = vrot.slane %v567, %v574
      %v577 = vunpack.c.l.s4 1983009808
      %v578 = vunpack.c.0.s8 %v577
      %v579 = vlaneseq
      %v580 = vshrl.u32 %v579, 7
      %v581 = vsub.s32 %v578, %v580
      %v582 = vrot.slane %v568, %v581
      %v583 = vcombine.low %v527, %v533
      %v584 = vcombine.high %v527, %v533
      %v586 = vunpack.c.l.s4 1983009808
      %v587 = vunpack.c.0.s8 %v586
      %v588 = vlaneseq
      %v589 = vshrl.u32 %v588, 7
      %v590 = vsub.s32 %v587, %v589
      %v591 = vrot.slane %v583, %v590
      %v593 = vunpack.c.l.s4 1983009808
      %v594 = vunpack.c.0.s8 %v593
      %v595 = vlaneseq
      %v596 = vshrl.u32 %v595, 7
      %v597 = vsub.s32 %v594, %v596
      %v598 = vrot.slane %v584, %v597
      %v599 = vcombine.low %v543, %v559
      %v600 = vcombine.high %v543, %v559
      %v602 = vunpack.c.l.s4 1934713408
      %v603 = vunpack.c.0.s8 %v602
      %v604 = vlaneseq
      %v605 = vshrl.u32 %v604, 7
      %v606 = vsub.s32 %v603, %v605
      %v607 = vrot.slane %v599, %v606
      %v609 = vunpack.c.l.s4 1934713408
      %v610 = vunpack.c.0.s8 %v609
      %v611 = vlaneseq
      %v612 = vshrl.u32 %v611, 7
      %v613 = vsub.s32 %v610, %v612
      %v614 = vrot.slane %v600, %v613
      %v615 = vcombine.low %v550, %v566
      %v616 = vcombine.high %v550, %v566
      %v618 = vunpack.c.l.s4 1934713408
      %v619 = vunpack.c.0.s8 %v618
      %v620 = vlaneseq
      %v621 = vshrl.u32 %v620, 7
      %v622 = vsub.s32 %v619, %v621
      %v623 = vrot.slane %v615, %v622
      %v625 = vunpack.c.l.s4 1934713408
      %v626 = vunpack.c.0.s8 %v625
      %v627 = vlaneseq
      %v628 = vshrl.u32 %v627, 7
      %v629 = vsub.s32 %v626, %v628
      %v630 = vrot.slane %v616, %v629
      %v631 = vcombine.low %v575, %v591
      %v632 = vcombine.high %v575, %v591
      %v634 = vunpack.c.l.s4 1934713408
      %v635 = vunpack.c.0.s8 %v634
      %v636 = vlaneseq
      %v637 = vshrl.u32 %v636, 7
      %v638 = vsub.s32 %v635, %v637
      %v639 = vrot.slane %v631, %v638
      %v641 = vunpack.c.l.s4 1934713408
      %v642 = vunpack.c.0.s8 %v641
      %v643 = vlaneseq
      %v644 = vshrl.u32 %v643, 7
      %v645 = vsub.s32 %v642, %v644
      %v646 = vrot.slane %v632, %v645
      %v647 = vcombine.low %v582, %v598
      %v648 = vcombine.high %v582, %v598
      %v650 = vunpack.c.l.s4 1934713408
      %v651 = vunpack.c.0.s8 %v650
      %v652 = vlaneseq
      %v653 = vshrl.u32 %v652, 7
      %v654 = vsub.s32 %v651, %v653
      %v655 = vrot.slane %v647, %v654
      %v657 = vunpack.c.l.s4 1934713408
      %v658 = vunpack.c.0.s8 %v657
      %v659 = vlaneseq
      %v660 = vshrl.u32 %v659, 7
      %v661 = vsub.s32 %v658, %v660
      %v662 = vrot.slane %v648, %v661
      %v663 = vcombine.low %v607, %v639
      %v664 = vcombine.high %v607, %v639
      %v665 = vcombine.low %v614, %v646
      %v666 = vcombine.high %v614, %v646
      %v667 = vcombine.low %v623, %v655
      %v668 = vcombine.high %v623, %v655
      %v669 = vcombine.low %v630, %v662
      %v670 = vcombine.high %v630, %v662
      %v671 = vpack.c.bf16 %v663, %v663
      %v672 = vpack.c.bf16 %v664, %v664
      %v673 = vpack.c.bf16 %v665, %v665
      %v674 = vpack.c.bf16 %v666, %v666
      %v675 = vpack.c.bf16 %v667, %v667
      %v676 = vpack.c.bf16 %v668, %v668
      %v677 = vpack.c.bf16 %v669, %v669
      %v678 = vpack.c.bf16 %v670, %v670
      %v679 = vld [vmem:[%s440] sm:$0xff]
      %v680 = vpack.c.bf16 %v679, %v679
      %vm681 = vcmask 64512
      %v683 = vsel %vm681, %v680, 0
      %vm685 = vcmask 1043456
      %v687 = vsel %vm685, %v671, 0
      %689 = vmatprep.subr.bf16.mxu0 0
      %690 = vmatpush1.bf16.msra.mxu0 %v687
      %691 = vmatprep.subr.bf16.mxu0 0
      %692 = vmatpush1.bf16.msra.mxu0 0
      %693 = vmatprep.subr.bf16.mxu0 0
      %694 = vmatpush1.bf16.msra.mxu0 0
      %695 = vmatprep.subr.bf16.mxu0 0
      %696 = vmatpush1.bf16.msra.mxu0 0
      %697 = vmatprep.subr.bf16.mxu0 0
      %698 = vmatpush1.bf16.msra.mxu0 0
      %699 = vmatprep.subr.bf16.mxu0 0
      %700 = vmatpush1.bf16.msra.mxu0 0
      %701 = vmatprep.subr.bf16.mxu0 0
      %702 = vmatpush1.bf16.msra.mxu0 0
      %703 = vmatprep.subr.bf16.mxu0 0
      %704 = vmatpush1.bf16.msra.mxu0 0
      %705 = vmatprep.subr.bf16.mxu0 0
      %706 = vmatpush1.bf16.msra.mxu0 0
      %707 = vmatprep.subr.bf16.mxu0 0
      %708 = vmatpush1.bf16.msra.mxu0 0
      %709 = vmatprep.subr.bf16.mxu0 0
      %710 = vmatpush1.bf16.msra.mxu0 0
      %711 = vmatprep.subr.bf16.mxu0 0
      %712 = vmatpush1.bf16.msra.mxu0 0
      %713 = vmatprep.subr.bf16.mxu0 0
      %714 = vmatpush1.bf16.msra.mxu0 0
      %715 = vmatprep.subr.bf16.mxu0 0
      %716 = vmatpush1.bf16.msra.mxu0 0
      %717 = vmatprep.subr.bf16.mxu0 0
      %718 = vmatpush1.bf16.msra.mxu0 0
      %719 = vmatprep.subr.bf16.mxu0 0
      %720 = vmatpush1.bf16.msra.mxu0 0
      %721 = vmatprep.mubr.bf16.mxu0 0
      %722 = vmatmul.mubr.bf16.gmra.mrb[0].mxu0 %v683
      %v723 = vpop.f32.mrb[0].mxu0
      %v724 = vadd.f32 0.0, %v723
      %v725 = vpop.f32.mrb[0].mxu0
      %v726 = vpop.f32.mrb[0].mxu0
      %v727 = vpop.f32.mrb[0].mxu0
      %728 = vdwg.mxu0
      %v730 = vsel %vm685, %v672, 0
      %732 = vmatprep.subr.bf16.mxu0 0
      %733 = vmatpush1.bf16.msra.mxu0 %v730
      %734 = vmatprep.subr.bf16.mxu0 0
      %735 = vmatpush1.bf16.msra.mxu0 0
      %736 = vmatprep.subr.bf16.mxu0 0
      %737 = vmatpush1.bf16.msra.mxu0 0
      %738 = vmatprep.subr.bf16.mxu0 0
      %739 = vmatpush1.bf16.msra.mxu0 0
      %740 = vmatprep.subr.bf16.mxu0 0
      %741 = vmatpush1.bf16.msra.mxu0 0
      %742 = vmatprep.subr.bf16.mxu0 0
      %743 = vmatpush1.bf16.msra.mxu0 0
      %744 = vmatprep.subr.bf16.mxu0 0
      %745 = vmatpush1.bf16.msra.mxu0 0
      %746 = vmatprep.subr.bf16.mxu0 0
      %747 = vmatpush1.bf16.msra.mxu0 0
      %748 = vmatprep.subr.bf16.mxu0 0
      %749 = vmatpush1.bf16.msra.mxu0 0
      %750 = vmatprep.subr.bf16.mxu0 0
      %751 = vmatpush1.bf16.msra.mxu0 0
      %752 = vmatprep.subr.bf16.mxu0 0
      %753 = vmatpush1.bf16.msra.mxu0 0
      %754 = vmatprep.subr.bf16.mxu0 0
      %755 = vmatpush1.bf16.msra.mxu0 0
      %756 = vmatprep.subr.bf16.mxu0 0
      %757 = vmatpush1.bf16.msra.mxu0 0
      %758 = vmatprep.subr.bf16.mxu0 0
      %759 = vmatpush1.bf16.msra.mxu0 0
      %760 = vmatprep.subr.bf16.mxu0 0
      %761 = vmatpush1.bf16.msra.mxu0 0
      %762 = vmatprep.subr.bf16.mxu0 0
      %763 = vmatpush1.bf16.msra.mxu0 0
      %764 = vmatprep.mubr.bf16.mxu0 0
      %765 = vmatmul.mubr.bf16.gmra.mrb[0].mxu0 %v683
      %v766 = vpop.f32.mrb[0].mxu0
      %v767 = vadd.f32 0.0, %v766
      %v768 = vpop.f32.mrb[0].mxu0
      %v769 = vpop.f32.mrb[0].mxu0
      %v770 = vpop.f32.mrb[0].mxu0
      %771 = vdwg.mxu0
      %v773 = vsel %vm685, %v673, 0
      %775 = vmatprep.subr.bf16.mxu0 0
      %776 = vmatpush1.bf16.msra.mxu0 %v773
      %777 = vmatprep.subr.bf16.mxu0 0
      %778 = vmatpush1.bf16.msra.mxu0 0
      %779 = vmatprep.subr.bf16.mxu0 0
      %780 = vmatpush1.bf16.msra.mxu0 0
      %781 = vmatprep.subr.bf16.mxu0 0
      %782 = vmatpush1.bf16.msra.mxu0 0
      %783 = vmatprep.subr.bf16.mxu0 0
      %784 = vmatpush1.bf16.msra.mxu0 0
      %785 = vmatprep.subr.bf16.mxu0 0
      %786 = vmatpush1.bf16.msra.mxu0 0
      %787 = vmatprep.subr.bf16.mxu0 0
      %788 = vmatpush1.bf16.msra.mxu0 0
      %789 = vmatprep.subr.bf16.mxu0 0
      %790 = vmatpush1.bf16.msra.mxu0 0
      %791 = vmatprep.subr.bf16.mxu0 0
      %792 = vmatpush1.bf16.msra.mxu0 0
      %793 = vmatprep.subr.bf16.mxu0 0
      %794 = vmatpush1.bf16.msra.mxu0 0
      %795 = vmatprep.subr.bf16.mxu0 0
      %796 = vmatpush1.bf16.msra.mxu0 0
      %797 = vmatprep.subr.bf16.mxu0 0
      %798 = vmatpush1.bf16.msra.mxu0 0
      %799 = vmatprep.subr.bf16.mxu0 0
      %800 = vmatpush1.bf16.msra.mxu0 0
      %801 = vmatprep.subr.bf16.mxu0 0
      %802 = vmatpush1.bf16.msra.mxu0 0
      %803 = vmatprep.subr.bf16.mxu0 0
      %804 = vmatpush1.bf16.msra.mxu0 0
      %805 = vmatprep.subr.bf16.mxu0 0
      %806 = vmatpush1.bf16.msra.mxu0 0
      %807 = vmatprep.mubr.bf16.mxu0 0
      %808 = vmatmul.mubr.bf16.gmra.mrb[0].mxu0 %v683
      %v809 = vpop.f32.mrb[0].mxu0
      %v810 = vadd.f32 0.0, %v809
      %v811 = vpop.f32.mrb[0].mxu0
      %v812 = vpop.f32.mrb[0].mxu0
      %v813 = vpop.f32.mrb[0].mxu0
      %814 = vdwg.mxu0
      %v816 = vsel %vm685, %v674, 0
      %818 = vmatprep.subr.bf16.mxu0 0
      %819 = vmatpush1.bf16.msra.mxu0 %v816
      %820 = vmatprep.subr.bf16.mxu0 0
      %821 = vmatpush1.bf16.msra.mxu0 0
      %822 = vmatprep.subr.bf16.mxu0 0
      %823 = vmatpush1.bf16.msra.mxu0 0
      %824 = vmatprep.subr.bf16.mxu0 0
      %825 = vmatpush1.bf16.msra.mxu0 0
      %826 = vmatprep.subr.bf16.mxu0 0
      %827 = vmatpush1.bf16.msra.mxu0 0
      %828 = vmatprep.subr.bf16.mxu0 0
      %829 = vmatpush1.bf16.msra.mxu0 0
      %830 = vmatprep.subr.bf16.mxu0 0
      %831 = vmatpush1.bf16.msra.mxu0 0
      %832 = vmatprep.subr.bf16.mxu0 0
      %833 = vmatpush1.bf16.msra.mxu0 0
      %834 = vmatprep.subr.bf16.mxu0 0
      %835 = vmatpush1.bf16.msra.mxu0 0
      %836 = vmatprep.subr.bf16.mxu0 0
      %837 = vmatpush1.bf16.msra.mxu0 0
      %838 = vmatprep.subr.bf16.mxu0 0
      %839 = vmatpush1.bf16.msra.mxu0 0
      %840 = vmatprep.subr.bf16.mxu0 0
      %841 = vmatpush1.bf16.msra.mxu0 0
      %842 = vmatprep.subr.bf16.mxu0 0
      %843 = vmatpush1.bf16.msra.mxu0 0
      %844 = vmatprep.subr.bf16.mxu0 0
      %845 = vmatpush1.bf16.msra.mxu0 0
      %846 = vmatprep.subr.bf16.mxu0 0
      %847 = vmatpush1.bf16.msra.mxu0 0
      %848 = vmatprep.subr.bf16.mxu0 0
      %849 = vmatpush1.bf16.msra.mxu0 0
      %850 = vmatprep.mubr.bf16.mxu0 0
      %851 = vmatmul.mubr.bf16.gmra.mrb[0].mxu0 %v683
      %v852 = vpop.f32.mrb[0].mxu0
      %v853 = vadd.f32 0.0, %v852
      %v854 = vpop.f32.mrb[0].mxu0
      %v855 = vpop.f32.mrb[0].mxu0
      %v856 = vpop.f32.mrb[0].mxu0
      %857 = vdwg.mxu0
      %v859 = vsel %vm685, %v675, 0
      %861 = vmatprep.subr.bf16.mxu0 0
      %862 = vmatpush1.bf16.msra.mxu0 %v859
      %863 = vmatprep.subr.bf16.mxu0 0
      %864 = vmatpush1.bf16.msra.mxu0 0
      %865 = vmatprep.subr.bf16.mxu0 0
      %866 = vmatpush1.bf16.msra.mxu0 0
      %867 = vmatprep.subr.bf16.mxu0 0
      %868 = vmatpush1.bf16.msra.mxu0 0
      %869 = vmatprep.subr.bf16.mxu0 0
      %870 = vmatpush1.bf16.msra.mxu0 0
      %871 = vmatprep.subr.bf16.mxu0 0
      %872 = vmatpush1.bf16.msra.mxu0 0
      %873 = vmatprep.subr.bf16.mxu0 0
      %874 = vmatpush1.bf16.msra.mxu0 0
      %875 = vmatprep.subr.bf16.mxu0 0
      %876 = vmatpush1.bf16.msra.mxu0 0
      %877 = vmatprep.subr.bf16.mxu0 0
      %878 = vmatpush1.bf16.msra.mxu0 0
      %879 = vmatprep.subr.bf16.mxu0 0
      %880 = vmatpush1.bf16.msra.mxu0 0
      %881 = vmatprep.subr.bf16.mxu0 0
      %882 = vmatpush1.bf16.msra.mxu0 0
      %883 = vmatprep.subr.bf16.mxu0 0
      %884 = vmatpush1.bf16.msra.mxu0 0
      %885 = vmatprep.subr.bf16.mxu0 0
      %886 = vmatpush1.bf16.msra.mxu0 0
      %887 = vmatprep.subr.bf16.mxu0 0
      %888 = vmatpush1.bf16.msra.mxu0 0
      %889 = vmatprep.subr.bf16.mxu0 0
      %890 = vmatpush1.bf16.msra.mxu0 0
      %891 = vmatprep.subr.bf16.mxu0 0
      %892 = vmatpush1.bf16.msra.mxu0 0
      %893 = vmatprep.mubr.bf16.mxu0 0
      %894 = vmatmul.mubr.bf16.gmra.mrb[0].mxu0 %v683
      %v895 = vpop.f32.mrb[0].mxu0
      %v896 = vadd.f32 0.0, %v895
      %v897 = vpop.f32.mrb[0].mxu0
      %v898 = vpop.f32.mrb[0].mxu0
      %v899 = vpop.f32.mrb[0].mxu0
      %900 = vdwg.mxu0
      %v902 = vsel %vm685, %v676, 0
      %904 = vmatprep.subr.bf16.mxu0 0
      %905 = vmatpush1.bf16.msra.mxu0 %v902
      %906 = vmatprep.subr.bf16.mxu0 0
      %907 = vmatpush1.bf16.msra.mxu0 0
      %908 = vmatprep.subr.bf16.mxu0 0
      %909 = vmatpush1.bf16.msra.mxu0 0
      %910 = vmatprep.subr.bf16.mxu0 0
      %911 = vmatpush1.bf16.msra.mxu0 0
      %912 = vmatprep.subr.bf16.mxu0 0
      %913 = vmatpush1.bf16.msra.mxu0 0
      %914 = vmatprep.subr.bf16.mxu0 0
      %915 = vmatpush1.bf16.msra.mxu0 0
      %916 = vmatprep.subr.bf16.mxu0 0
      %917 = vmatpush1.bf16.msra.mxu0 0
      %918 = vmatprep.subr.bf16.mxu0 0
      %919 = vmatpush1.bf16.msra.mxu0 0
      %920 = vmatprep.subr.bf16.mxu0 0
      %921 = vmatpush1.bf16.msra.mxu0 0
      %922 = vmatprep.subr.bf16.mxu0 0
      %923 = vmatpush1.bf16.msra.mxu0 0
      %924 = vmatprep.subr.bf16.mxu0 0
      %925 = vmatpush1.bf16.msra.mxu0 0
      %926 = vmatprep.subr.bf16.mxu0 0
      %927 = vmatpush1.bf16.msra.mxu0 0
      %928 = vmatprep.subr.bf16.mxu0 0
      %929 = vmatpush1.bf16.msra.mxu0 0
      %930 = vmatprep.subr.bf16.mxu0 0
      %931 = vmatpush1.bf16.msra.mxu0 0
      %932 = vmatprep.subr.bf16.mxu0 0
      %933 = vmatpush1.bf16.msra.mxu0 0
      %934 = vmatprep.subr.bf16.mxu0 0
      %935 = vmatpush1.bf16.msra.mxu0 0
      %936 = vmatprep.mubr.bf16.mxu0 0
      %937 = vmatmul.mubr.bf16.gmra.mrb[0].mxu0 %v683
      %v938 = vpop.f32.mrb[0].mxu0
      %v939 = vadd.f32 0.0, %v938
      %v940 = vpop.f32.mrb[0].mxu0
      %v941 = vpop.f32.mrb[0].mxu0
      %v942 = vpop.f32.mrb[0].mxu0
      %943 = vdwg.mxu0
      %v945 = vsel %vm685, %v677, 0
      %947 = vmatprep.subr.bf16.mxu0 0
      %948 = vmatpush1.bf16.msra.mxu0 %v945
      %949 = vmatprep.subr.bf16.mxu0 0
      %950 = vmatpush1.bf16.msra.mxu0 0
      %951 = vmatprep.subr.bf16.mxu0 0
      %952 = vmatpush1.bf16.msra.mxu0 0
      %953 = vmatprep.subr.bf16.mxu0 0
      %954 = vmatpush1.bf16.msra.mxu0 0
      %955 = vmatprep.subr.bf16.mxu0 0
      %956 = vmatpush1.bf16.msra.mxu0 0
      %957 = vmatprep.subr.bf16.mxu0 0
      %958 = vmatpush1.bf16.msra.mxu0 0
      %959 = vmatprep.subr.bf16.mxu0 0
      %960 = vmatpush1.bf16.msra.mxu0 0
      %961 = vmatprep.subr.bf16.mxu0 0
      %962 = vmatpush1.bf16.msra.mxu0 0
      %963 = vmatprep.subr.bf16.mxu0 0
      %964 = vmatpush1.bf16.msra.mxu0 0
      %965 = vmatprep.subr.bf16.mxu0 0
      %966 = vmatpush1.bf16.msra.mxu0 0
      %967 = vmatprep.subr.bf16.mxu0 0
      %968 = vmatpush1.bf16.msra.mxu0 0
      %969 = vmatprep.subr.bf16.mxu0 0
      %970 = vmatpush1.bf16.msra.mxu0 0
      %971 = vmatprep.subr.bf16.mxu0 0
      %972 = vmatpush1.bf16.msra.mxu0 0
      %973 = vmatprep.subr.bf16.mxu0 0
      %974 = vmatpush1.bf16.msra.mxu0 0
      %975 = vmatprep.subr.bf16.mxu0 0
      %976 = vmatpush1.bf16.msra.mxu0 0
      %977 = vmatprep.subr.bf16.mxu0 0
      %978 = vmatpush1.bf16.msra.mxu0 0
      %979 = vmatprep.mubr.bf16.mxu0 0
      %980 = vmatmul.mubr.bf16.gmra.mrb[0].mxu0 %v683
      %v981 = vpop.f32.mrb[0].mxu0
      %v982 = vadd.f32 0.0, %v981
      %v983 = vpop.f32.mrb[0].mxu0
      %v984 = vpop.f32.mrb[0].mxu0
      %v985 = vpop.f32.mrb[0].mxu0
      %986 = vdwg.mxu0
      %v988 = vsel %vm685, %v678, 0
      %990 = vmatprep.subr.bf16.mxu0 0
      %991 = vmatpush1.bf16.msra.mxu0 %v988
      %992 = vmatprep.subr.bf16.mxu0 0
      %993 = vmatpush1.bf16.msra.mxu0 0
      %994 = vmatprep.subr.bf16.mxu0 0
      %995 = vmatpush1.bf16.msra.mxu0 0
      %996 = vmatprep.subr.bf16.mxu0 0
      %997 = vmatpush1.bf16.msra.mxu0 0
      %998 = vmatprep.subr.bf16.mxu0 0
      %999 = vmatpush1.bf16.msra.mxu0 0
      %1000 = vmatprep.subr.bf16.mxu0 0
      %1001 = vmatpush1.bf16.msra.mxu0 0
      %1002 = vmatprep.subr.bf16.mxu0 0
      %1003 = vmatpush1.bf16.msra.mxu0 0
      %1004 = vmatprep.subr.bf16.mxu0 0
      %1005 = vmatpush1.bf16.msra.mxu0 0
      %1006 = vmatprep.subr.bf16.mxu0 0
      %1007 = vmatpush1.bf16.msra.mxu0 0
      %1008 = vmatprep.subr.bf16.mxu0 0
      %1009 = vmatpush1.bf16.msra.mxu0 0
      %1010 = vmatprep.subr.bf16.mxu0 0
      %1011 = vmatpush1.bf16.msra.mxu0 0
      %1012 = vmatprep.subr.bf16.mxu0 0
      %1013 = vmatpush1.bf16.msra.mxu0 0
      %1014 = vmatprep.subr.bf16.mxu0 0
      %1015 = vmatpush1.bf16.msra.mxu0 0
      %1016 = vmatprep.subr.bf16.mxu0 0
      %1017 = vmatpush1.bf16.msra.mxu0 0
      %1018 = vmatprep.subr.bf16.mxu0 0
      %1019 = vmatpush1.bf16.msra.mxu0 0
      %1020 = vmatprep.subr.bf16.mxu0 0
      %1021 = vmatpush1.bf16.msra.mxu0 0
      %1022 = vmatprep.mubr.bf16.mxu0 0
      %1023 = vmatmul.mubr.bf16.gmra.mrb[0].mxu0 %v683
      %v1024 = vpop.f32.mrb[0].mxu0
      %v1025 = vadd.f32 0.0, %v1024
      %v1026 = vpop.f32.mrb[0].mxu0
      %v1027 = vpop.f32.mrb[0].mxu0
      %v1028 = vpop.f32.mrb[0].mxu0
      %1029 = vdwg.mxu0
      %v1030 = vld [vmem:[%s425] sm:$0xff]
      %v1031 = vld [vmem:[%s425 + $0x8] sm:$0xff]
      %v1032 = vld [vmem:[%s425 + $0x10] sm:$0xff]
      %v1033 = vld [vmem:[%s425 + $0x18] sm:$0xff]
      %v1034 = vld [vmem:[%s425 + $0x20] sm:$0xff]
      %v1035 = vld [vmem:[%s425 + $0x28] sm:$0xff]
      %v1036 = vld [vmem:[%s425 + $0x30] sm:$0xff]
      %v1037 = vld [vmem:[%s425 + $0x38] sm:$0xff]
      %v1038 = vadd.f32 %v1030, %v724
      %v1039 = vadd.f32 %v1031, %v767
      %v1040 = vadd.f32 %v1032, %v810
      %v1041 = vadd.f32 %v1033, %v853
      %v1042 = vadd.f32 %v1034, %v896
      %v1043 = vadd.f32 %v1035, %v939
      %v1044 = vadd.f32 %v1036, %v982
      %v1045 = vadd.f32 %v1037, %v1025
      %v1046 = vld [vmem:[%s4] sm:$0x1]
      %v1048 = vlaneseq
      %v1049 = vshrl.u32 %v1048, 7
      %v1050 = vsub.s32 0, %v1049
      %v1051 = vrot.slane %v1046, %v1050
      %v1053 = vadd.f32 %v1038, %v1051
      %v1054 = vadd.f32 %v1039, %v1051
      %v1055 = vadd.f32 %v1040, %v1051
      %v1056 = vadd.f32 %v1041, %v1051
      %v1057 = vadd.f32 %v1042, %v1051
      %v1058 = vadd.f32 %v1043, %v1051
      %v1059 = vadd.f32 %v1044, %v1051
      %v1060 = vadd.f32 %v1045, %v1051
      %vm1061 = vcmask 130048
      %v1062 = vsel %vm1061, %v1053, 0.0
      %1063 = vadd.xlane.f32.xlu0 %v1062
      %v1064 = vpop.xlane.xlu0 %1063
      %v1065 = vsel %vm1061, %v1054, 0.0
      %1066 = vadd.xlane.f32.xlu0 %v1065
      %v1067 = vpop.xlane.xlu0 %1066
      %v1068 = vsel %vm1061, %v1055, 0.0
      %1069 = vadd.xlane.f32.xlu0 %v1068
      %v1070 = vpop.xlane.xlu0 %1069
      %v1071 = vsel %vm1061, %v1056, 0.0
      %1072 = vadd.xlane.f32.xlu0 %v1071
      %v1073 = vpop.xlane.xlu0 %1072
      %v1074 = vsel %vm1061, %v1057, 0.0
      %1075 = vadd.xlane.f32.xlu0 %v1074
      %v1076 = vpop.xlane.xlu0 %1075
      %v1077 = vsel %vm1061, %v1058, 0.0
      %1078 = vadd.xlane.f32.xlu0 %v1077
      %v1079 = vpop.xlane.xlu0 %1078
      %v1080 = vsel %vm1061, %v1059, 0.0
      %1081 = vadd.xlane.f32.xlu0 %v1080
      %v1082 = vpop.xlane.xlu0 %1081
      %v1083 = vsel %vm1061, %v1060, 0.0
      %1084 = vadd.xlane.f32.xlu0 %v1083
      %v1085 = vpop.xlane.xlu0 %1084
      %v1086 = vrcp.pop 16.0
      %v1087 = vmul.f32 %v1064, %v1086
      %v1088 = vmul.f32 %v1067, %v1086
      %v1089 = vmul.f32 %v1070, %v1086
      %v1090 = vmul.f32 %v1073, %v1086
      %v1091 = vmul.f32 %v1076, %v1086
      %v1092 = vmul.f32 %v1079, %v1086
      %v1093 = vmul.f32 %v1082, %v1086
      %v1094 = vmul.f32 %v1085, %v1086
      %v1095 = vsub.f32 %v1053, %v1087
      %v1096 = vsub.f32 %v1054, %v1088
      %v1097 = vsub.f32 %v1055, %v1089
      %v1098 = vsub.f32 %v1056, %v1090
      %v1099 = vsub.f32 %v1057, %v1091
      %v1100 = vsub.f32 %v1058, %v1092
      %v1101 = vsub.f32 %v1059, %v1093
      %v1102 = vsub.f32 %v1060, %v1094
      %v1103 = vmul.f32 %v1095, %v1095
      %v1104 = vmul.f32 %v1096, %v1096
      %v1105 = vmul.f32 %v1097, %v1097
      %v1106 = vmul.f32 %v1098, %v1098
      %v1107 = vmul.f32 %v1099, %v1099
      %v1108 = vmul.f32 %v1100, %v1100
      %v1109 = vmul.f32 %v1101, %v1101
      %v1110 = vmul.f32 %v1102, %v1102
      %v1111 = vsel %vm1061, %v1103, 0.0
      %1112 = vadd.xlane.f32.xlu0 %v1111
      %v1113 = vpop.xlane.xlu0 %1112
      %v1114 = vsel %vm1061, %v1104, 0.0
      %1115 = vadd.xlane.f32.xlu0 %v1114
      %v1116 = vpop.xlane.xlu0 %1115
      %v1117 = vsel %vm1061, %v1105, 0.0
      %1118 = vadd.xlane.f32.xlu0 %v1117
      %v1119 = vpop.xlane.xlu0 %1118
      %v1120 = vsel %vm1061, %v1106, 0.0
      %1121 = vadd.xlane.f32.xlu0 %v1120
      %v1122 = vpop.xlane.xlu0 %1121
      %v1123 = vsel %vm1061, %v1107, 0.0
      %1124 = vadd.xlane.f32.xlu0 %v1123
      %v1125 = vpop.xlane.xlu0 %1124
      %v1126 = vsel %vm1061, %v1108, 0.0
      %1127 = vadd.xlane.f32.xlu0 %v1126
      %v1128 = vpop.xlane.xlu0 %1127
      %v1129 = vsel %vm1061, %v1109, 0.0
      %1130 = vadd.xlane.f32.xlu0 %v1129
      %v1131 = vpop.xlane.xlu0 %1130
      %v1132 = vsel %vm1061, %v1110, 0.0
      %1133 = vadd.xlane.f32.xlu0 %v1132
      %v1134 = vpop.xlane.xlu0 %1133
      %v1135 = vmul.f32 %v1113, %v1086
      %v1136 = vmul.f32 %v1116, %v1086
      %v1137 = vmul.f32 %v1119, %v1086
      %v1138 = vmul.f32 %v1122, %v1086
      %v1139 = vmul.f32 %v1125, %v1086
      %v1140 = vmul.f32 %v1128, %v1086
      %v1141 = vmul.f32 %v1131, %v1086
      %v1142 = vmul.f32 %v1134, %v1086
      %v1143 = vadd.f32 %v1135, 1e-05
      %v1144 = vadd.f32 %v1136, 1e-05
      %v1145 = vadd.f32 %v1137, 1e-05
      %v1146 = vadd.f32 %v1138, 1e-05
      %v1147 = vadd.f32 %v1139, 1e-05
      %v1148 = vadd.f32 %v1140, 1e-05
      %v1149 = vadd.f32 %v1141, 1e-05
      %v1150 = vadd.f32 %v1142, 1e-05
      %v1151 = vrsqrt.pop %v1143
      %v1152 = vrsqrt.pop %v1144
      %v1153 = vrsqrt.pop %v1145
      %v1154 = vrsqrt.pop %v1146
      %v1155 = vrsqrt.pop %v1147
      %v1156 = vrsqrt.pop %v1148
      %v1157 = vrsqrt.pop %v1149
      %v1158 = vrsqrt.pop %v1150
      %v1159 = vmul.f32 %v1095, %v1151
      %v1160 = vmul.f32 %v1096, %v1152
      %v1161 = vmul.f32 %v1097, %v1153
      %v1162 = vmul.f32 %v1098, %v1154
      %v1163 = vmul.f32 %v1099, %v1155
      %v1164 = vmul.f32 %v1100, %v1156
      %v1165 = vmul.f32 %v1101, %v1157
      %v1166 = vmul.f32 %v1102, %v1158
      %v1167 = vld [vmem:[%s5] sm:$0xff]
      %v1168 = vld [vmem:[%s5 + $0x8] sm:$0xff]
      %v1169 = vpack.c.bf16 %v1160, %v1159
      %v1170 = vpack.c.bf16 %v1162, %v1161
      %v1171 = vpack.c.bf16 %v1164, %v1163
      %v1172 = vpack.c.bf16 %v1166, %v1165
      %v1173 = vpack.c.bf16 %v1168, %v1167
      %v1174 = vld [vmem:[%s6] sm:$0x1]
      %v1176 = vlaneseq
      %v1177 = vshrl.u32 %v1176, 7
      %v1178 = vsub.s32 0, %v1177
      %v1179 = vrot.slane %v1174, %v1178
      %v1182 = vsel %vm1061, %v1169, 0
      %v1185 = vsel %vm1061, %v1170, 0
      %v1188 = vsel %vm1061, %v1171, 0
      %v1191 = vsel %vm1061, %v1172, 0
      %1193 = vmatprep.subr.bf16.mxu0 0
      %1194 = vmatpush1.bf16.msra.mxu0 %v1173
      %1195 = vmatprep.subr.bf16.mxu0 0
      %1196 = vmatpush1.bf16.msra.mxu0 0
      %1197 = vmatprep.subr.bf16.mxu0 0
      %1198 = vmatpush1.bf16.msra.mxu0 0
      %1199 = vmatprep.subr.bf16.mxu0 0
      %1200 = vmatpush1.bf16.msra.mxu0 0
      %1201 = vmatprep.subr.bf16.mxu0 0
      %1202 = vmatpush1.bf16.msra.mxu0 0
      %1203 = vmatprep.subr.bf16.mxu0 0
      %1204 = vmatpush1.bf16.msra.mxu0 0
      %1205 = vmatprep.subr.bf16.mxu0 0
      %1206 = vmatpush1.bf16.msra.mxu0 0
      %1207 = vmatprep.subr.bf16.mxu0 0
      %1208 = vmatpush1.bf16.msra.mxu0 0
      %1209 = vmatprep.subr.bf16.mxu0 0
      %1210 = vmatpush1.bf16.msra.mxu0 0
      %1211 = vmatprep.subr.bf16.mxu0 0
      %1212 = vmatpush1.bf16.msra.mxu0 0
      %1213 = vmatprep.subr.bf16.mxu0 0
      %1214 = vmatpush1.bf16.msra.mxu0 0
      %1215 = vmatprep.subr.bf16.mxu0 0
      %1216 = vmatpush1.bf16.msra.mxu0 0
      %1217 = vmatprep.subr.bf16.mxu0 0
      %1218 = vmatpush1.bf16.msra.mxu0 0
      %1219 = vmatprep.subr.bf16.mxu0 0
      %1220 = vmatpush1.bf16.msra.mxu0 0
      %1221 = vmatprep.subr.bf16.mxu0 0
      %1222 = vmatpush1.bf16.msra.mxu0 0
      %1223 = vmatprep.subr.bf16.mxu0 0
      %1224 = vmatpush1.bf16.msra.mxu0 0
      %1225 = vmatprep.mubr.bf16.mxu0 0
      %1226 = vmatmul.mubr.bf16.gmra.mrb[0].mxu0 %v1182
      %v1227 = vpop.f32.mrb[0].mxu0
      %v1228 = vadd.f32 %v1179, %v1227
      %v1229 = vpop.f32.mrb[0].mxu0
      %v1230 = vpop.f32.mrb[0].mxu0
      %v1231 = vadd.f32 %v1179, %v1230
      %v1232 = vpop.f32.mrb[0].mxu0
      %1233 = vmatprep.mubr.bf16.mxu0 0
      %1234 = vmatmul.mubr.bf16.gmra.mrb[0].mxu0 %v1185
      %v1235 = vpop.f32.mrb[0].mxu0
      %v1236 = vadd.f32 %v1179, %v1235
      %v1237 = vpop.f32.mrb[0].mxu0
      %v1238 = vpop.f32.mrb[0].mxu0
      %v1239 = vadd.f32 %v1179, %v1238
      %v1240 = vpop.f32.mrb[0].mxu0
      %1241 = vmatprep.mubr.bf16.mxu0 0
      %1242 = vmatmul.mubr.bf16.gmra.mrb[0].mxu0 %v1188
      %v1243 = vpop.f32.mrb[0].mxu0
      %v1244 = vadd.f32 %v1179, %v1243
      %v1245 = vpop.f32.mrb[0].mxu0
      %v1246 = vpop.f32.mrb[0].mxu0
      %v1247 = vadd.f32 %v1179, %v1246
      %v1248 = vpop.f32.mrb[0].mxu0
      %1249 = vmatprep.mubr.bf16.mxu0 0
      %1250 = vmatmul.mubr.bf16.gmra.mrb[0].mxu0 %v1191
      %v1251 = vpop.f32.mrb[0].mxu0
      %v1252 = vadd.f32 %v1179, %v1251
      %v1253 = vpop.f32.mrb[0].mxu0
      %v1254 = vpop.f32.mrb[0].mxu0
      %v1255 = vadd.f32 %v1179, %v1254
      %v1256 = vpop.f32.mrb[0].mxu0
      %1257 = vdwg.mxu0
      %v1258 = vmax.f32 %v1228, 0.0
      %v1259 = vmax.f32 %v1231, 0.0
      %v1260 = vmax.f32 %v1236, 0.0
      %v1261 = vmax.f32 %v1239, 0.0
      %v1262 = vmax.f32 %v1244, 0.0
      %v1263 = vmax.f32 %v1247, 0.0
      %v1264 = vmax.f32 %v1252, 0.0
      %v1265 = vmax.f32 %v1255, 0.0
      %v1266 = vld [vmem:[%s7] sm:$0xff]
      %v1267 = vld [vmem:[%s7 + $0x8] sm:$0xff]
      %v1268 = vld [vmem:[%s7 + $0x10] sm:$0xff]
      %v1269 = vld [vmem:[%s7 + $0x18] sm:$0xff]
      %v1270 = vpack.c.bf16 %v1259, %v1258
      %v1271 = vpack.c.bf16 %v1261, %v1260
      %v1272 = vpack.c.bf16 %v1263, %v1262
      %v1273 = vpack.c.bf16 %v1265, %v1264
      %v1274 = vpack.c.bf16 %v1267, %v1266
      %v1275 = vpack.c.bf16 %v1269, %v1268
      %v1276 = vld [vmem:[%s8] sm:$0x1]
      %v1278 = vlaneseq
      %v1279 = vshrl.u32 %v1278, 7
      %v1280 = vsub.s32 0, %v1279
      %v1281 = vrot.slane %v1276, %v1280
      %vm1283 = vcmask 261120
      %v1285 = vsel %vm1283, %v1270, 0
      %v1288 = vsel %vm1283, %v1271, 0
      %v1291 = vsel %vm1283, %v1272, 0
      %v1294 = vsel %vm1283, %v1273, 0
      %1296 = vmatprep.subr.bf16.mxu0 0
      %1297 = vmatpush1.bf16.msra.mxu0 %v1274
      %1298 = vmatprep.subr.bf16.mxu0 0
      %1299 = vmatpush1.bf16.msra.mxu0 %v1275
      %1300 = vmatprep.subr.bf16.mxu0 0
      %1301 = vmatpush1.bf16.msra.mxu0 0
      %1302 = vmatprep.subr.bf16.mxu0 0
      %1303 = vmatpush1.bf16.msra.mxu0 0
      %1304 = vmatprep.subr.bf16.mxu0 0
      %1305 = vmatpush1.bf16.msra.mxu0 0
      %1306 = vmatprep.subr.bf16.mxu0 0
      %1307 = vmatpush1.bf16.msra.mxu0 0
      %1308 = vmatprep.subr.bf16.mxu0 0
      %1309 = vmatpush1.bf16.msra.mxu0 0
      %1310 = vmatprep.subr.bf16.mxu0 0
      %1311 = vmatpush1.bf16.msra.mxu0 0
      %1312 = vmatprep.subr.bf16.mxu0 0
      %1313 = vmatpush1.bf16.msra.mxu0 0
      %1314 = vmatprep.subr.bf16.mxu0 0
      %1315 = vmatpush1.bf16.msra.mxu0 0
      %1316 = vmatprep.subr.bf16.mxu0 0
      %1317 = vmatpush1.bf16.msra.mxu0 0
      %1318 = vmatprep.subr.bf16.mxu0 0
      %1319 = vmatpush1.bf16.msra.mxu0 0
      %1320 = vmatprep.subr.bf16.mxu0 0
      %1321 = vmatpush1.bf16.msra.mxu0 0
      %1322 = vmatprep.subr.bf16.mxu0 0
      %1323 = vmatpush1.bf16.msra.mxu0 0
      %1324 = vmatprep.subr.bf16.mxu0 0
      %1325 = vmatpush1.bf16.msra.mxu0 0
      %1326 = vmatprep.subr.bf16.mxu0 0
      %1327 = vmatpush1.bf16.msra.mxu0 0
      %1328 = vmatprep.mubr.bf16.mxu0 0
      %1329 = vmatmul.mubr.bf16.gmra.mrb[0].mxu0 %v1285
      %v1330 = vpop.f32.mrb[0].mxu0
      %v1331 = vadd.f32 %v1281, %v1330
      %v1332 = vpop.f32.mrb[0].mxu0
      %v1333 = vpop.f32.mrb[0].mxu0
      %v1334 = vadd.f32 %v1281, %v1333
      %v1335 = vpop.f32.mrb[0].mxu0
      %1336 = vmatprep.mubr.bf16.mxu0 0
      %1337 = vmatmul.mubr.bf16.gmra.mrb[0].mxu0 %v1288
      %v1338 = vpop.f32.mrb[0].mxu0
      %v1339 = vadd.f32 %v1281, %v1338
      %v1340 = vpop.f32.mrb[0].mxu0
      %v1341 = vpop.f32.mrb[0].mxu0
      %v1342 = vadd.f32 %v1281, %v1341
      %v1343 = vpop.f32.mrb[0].mxu0
      %1344 = vmatprep.mubr.bf16.mxu0 0
      %1345 = vmatmul.mubr.bf16.gmra.mrb[0].mxu0 %v1291
      %v1346 = vpop.f32.mrb[0].mxu0
      %v1347 = vadd.f32 %v1281, %v1346
      %v1348 = vpop.f32.mrb[0].mxu0
      %v1349 = vpop.f32.mrb[0].mxu0
      %v1350 = vadd.f32 %v1281, %v1349
      %v1351 = vpop.f32.mrb[0].mxu0
      %1352 = vmatprep.mubr.bf16.mxu0 0
      %1353 = vmatmul.mubr.bf16.gmra.mrb[0].mxu0 %v1294
      %v1354 = vpop.f32.mrb[0].mxu0
      %v1355 = vadd.f32 %v1281, %v1354
      %v1356 = vpop.f32.mrb[0].mxu0
      %v1357 = vpop.f32.mrb[0].mxu0
      %v1358 = vadd.f32 %v1281, %v1357
      %v1359 = vpop.f32.mrb[0].mxu0
      %1360 = vdwg.mxu0
      %v1361 = vadd.f32 %v1053, %v1331
      %v1362 = vadd.f32 %v1054, %v1334
      %v1363 = vadd.f32 %v1055, %v1339
      %v1364 = vadd.f32 %v1056, %v1342
      %v1365 = vadd.f32 %v1057, %v1347
      %v1366 = vadd.f32 %v1058, %v1350
      %v1367 = vadd.f32 %v1059, %v1355
      %v1368 = vadd.f32 %v1060, %v1358
      %1369 = vst.msk [vmem:[%s452] sm:$0xff] %vm1061, %v1361
      %1370 = vst.msk [vmem:[%s452 + $0x8] sm:$0xff] %vm1061, %v1362
      %1371 = vst.msk [vmem:[%s452 + $0x10] sm:$0xff] %vm1061, %v1363
      %1372 = vst.msk [vmem:[%s452 + $0x18] sm:$0xff] %vm1061, %v1364
      %1373 = vst.msk [vmem:[%s452 + $0x20] sm:$0xff] %vm1061, %v1365
      %1374 = vst.msk [vmem:[%s452 + $0x28] sm:$0xff] %vm1061, %v1366
      %1375 = vst.msk [vmem:[%s452 + $0x30] sm:$0xff] %vm1061, %v1367
      %1376 = vst.msk [vmem:[%s452 + $0x38] sm:$0xff] %vm1061, %v1368
      %s1377 = smul.u32 8, %s26
      %p1378 = scmp.lt.s32.totalorder %s25, 1
      %s1379 = scalar_select %p1378, %s25, 1
      %p1380 = scmp.lt.s32.totalorder %s1377, 7
      %s1381 = scalar_select %p1380, %s1377, 7
      %p1382 = scmp.lt.s32.totalorder %s27, 0
      %s1383 = scalar_select %p1382, %s27, 0
      %s1384 = sadd.s32 %s1383, %s1381
      %s1385 = smul.addr %s1379, 8
      %s1386 = sadd.s32 %s1384, %s1385
      %s1387 = smul.addr %s1386, 8
      %s1388 = scalar_lea.vmem %s9, %s1387
      // Predicated region
      $region61: #{seqformer_forward.8} parent=55 // pred_check
        %p1389 = pneg %p273
      $region62: #{seqformer_forward.8} parent=55 // pred_check_branch
        %1391 = sbr.rel (%p1389) target = $region64
      $region63: #{seqformer_forward.8} parent=55 // pred_region
        %s1392 = smul.u32 8, %s26
      $region64: #{seqformer_forward.8} parent=55 // pred_fallthru
        _
    $region56: #{seqformer_forward.8} parent=5 // pred_fallthru
      _
    %p1393 = scmp.le.s32.totalorder 2, %s15
    // Predicated region
    $region65: #{seqformer_forward.8} parent=5 // pred_check
      %p1394 = pneg %p1393
    $region66: #{seqformer_forward.8} parent=5 // pred_check_branch
      %1396 = sbr.rel (%p1394) target = $region68
    $region67: #{seqformer_forward.8} parent=5 // pred_region
      %s1397 = ssub.s32 %s15, 2
      // Predicated region
      $region69: #{seqformer_forward.8} parent=67 // pred_check
        %p1398 = pneg %p279
      $region70: #{seqformer_forward.8} parent=67 // pred_check_branch
        %1400 = sbr.rel (%p1398) target = $region72
      $region71: #{seqformer_forward.8} parent=67 // pred_region
        %s1401 = smul.u32 8, %s29
        %p1402 = scmp.lt.s32.totalorder %s28, 1
        %s1403 = scalar_select %p1402, %s28, 1
        %p1404 = scmp.lt.s32.totalorder %s1401, 7
        %s1405 = scalar_select %p1404, %s1401, 7
        %p1406 = scmp.lt.s32.totalorder %s30, 0
        %s1407 = scalar_select %p1406, %s30, 0
        %s1408 = sadd.s32 %s1407, %s1405
        %s1409 = smul.addr %s1403, 8
        %s1410 = sadd.s32 %s1408, %s1409
        %s1411 = smul.addr %s1410, 8
        %s1412 = scalar_lea.vmem %s9, %s1411
      $region72: #{seqformer_forward.8} parent=67 // pred_fallthru
        _
    $region68: #{seqformer_forward.8} parent=5 // pred_fallthru
      _
  $region6: #{seqformer_forward.8} parent=0 // loop_footer
    %s19 = sadd.s32 1, %s15
  $region7: #{seqformer_forward.8} parent=0 // loop_footer_branch
    %14 = sbr.rel target = $region3
  $region8: #{seqformer_forward.8} parent=0 // loop_exit
    _

</llo_original>
